<compile_context>
chip_gen: v6e
topology: v6e:2x2x1
jax: 0.10.0
libtpu: 0.0.40
codegen_flags: <defaults>
</compile_context>

<pallas_src>
import math
import numpy as np
import jax
import jax.numpy as jnp
from jax.experimental import pallas as pl
from jax.experimental.pallas import tpu as pltpu


# ----------------------------------------------------------------------------
# helpers
# ----------------------------------------------------------------------------
def _round_up(x, m):
    return ((x + m - 1) // m) * m


def _pick_tm(m, row_len, target=1024):
    """Row-tile size: a multiple of lcm(row_len, 8); leaves >=2 M tiles when M
    allows so the 'parallel' grid axis feeds both TensorCores on v7x."""
    u = (row_len * 8) // math.gcd(row_len, 8)
    k_target = max(1, target // u)
    k_half = max(1, m // (2 * u))
    return u * min(k_target, k_half)


def _shift_rows(x, delta):
    """y[i] = x[i + delta], wrapping inside the block (delta in {-1, +1})."""
    n = x.shape[0]
    d = delta % n
    return jnp.concatenate([x[d:], x[:d]], axis=0)


# ----------------------------------------------------------------------------
# Pallas kernel #1: row-stripe 3x3 'same' conv (also drives the 4x4 stride-2
# transposed-conv heads through a merged-parity tap-weight matrix).
#
#   grid = (M_tiles, 3 stripes); per step:
#     x   : (tm, Cin)   bf16  -- one dy-stripe of the W-padded activation
#     w   : (3*Cin, N)  bf16  -- the 3 dx tap matrices for this stripe
#     acc += shift(x,-1)@w[0:C] + x@w[C:2C] + shift(x,+1)@w[2C:3C]   (f32)
#   Epilogue on the last stripe: bias + per-channel PReLU (+ optional residual
#   skip), store bf16.  Wrapped rows from the shifts only ever land on the
#   discarded pad columns because tm % (W+2) == 0 and blocks are aligned.
# ----------------------------------------------------------------------------
def _stripe_conv_kernel(x_ref, w_ref, b_ref, a_ref, o_ref, acc_ref):
    d = pl.program_id(1)

    @pl.when(d == 0)
    def _init():
        acc_ref[...] = jnp.zeros_like(acc_ref)

    x = x_ref[0]                                   # (tm, C) bf16
    c = x.shape[1]
    w = w_ref[0]                                   # (3*C, N) bf16
    x_m1 = _shift_rows(x, -1)                      # tap dx=0 : row m-1
    x_p1 = _shift_rows(x, +1)                      # tap dx=2 : row m+1
    acc_ref[...] += (
        jnp.dot(x_m1, w[0:c], preferred_element_type=jnp.float32)
        + jnp.dot(x, w[c:2 * c], preferred_element_type=jnp.float32)
        + jnp.dot(x_p1, w[2 * c:3 * c], preferred_element_type=jnp.float32))

    @pl.when(d == pl.num_programs(1) - 1)
    def _fin():
        y = acc_ref[...] + b_ref[...]
        y = jnp.where(y >= 0.0, y, a_ref[...] * y)
        o_ref[...] = y.astype(o_ref.dtype)


def _stripe_conv_skip_kernel(x_ref, w_ref, b_ref, a_ref, s_ref, o_ref,
                             acc_ref):
    d = pl.program_id(1)

    @pl.when(d == 0)
    def _init():
        acc_ref[...] = jnp.zeros_like(acc_ref)

    x = x_ref[0]
    c = x.shape[1]
    w = w_ref[0]
    x_m1 = _shift_rows(x, -1)
    x_p1 = _shift_rows(x, +1)
    acc_ref[...] += (
        jnp.dot(x_m1, w[0:c], preferred_element_type=jnp.float32)
        + jnp.dot(x, w[c:2 * c], preferred_element_type=jnp.float32)
        + jnp.dot(x_p1, w[2 * c:3 * c], preferred_element_type=jnp.float32))

    @pl.when(d == pl.num_programs(1) - 1)
    def _fin():
        y = acc_ref[...] + b_ref[...]
        y = jnp.where(y >= 0.0, y, a_ref[...] * y)
        y = y + s_ref[...].astype(jnp.float32)      # fused residual add
        o_ref[...] = y.astype(o_ref.dtype)


def conv3x3_stripes(x, wtaps, bias, alpha, skip=None):
    """'same' 3x3 conv on bf16 NHWC activations via the stripe kernel.

    x     : (N, H, W, Cin)     bf16
    wtaps : (3, 3, Cin, Ncol)  tap (dy, dx) matrices (f32, cast to bf16 here)
    bias, alpha : (Ncol,)
    skip  : optional (N, H, W, Ncol) residual, added after the PReLU
    returns (N, H, W, Ncol) bf16
    """
    n, ho, wo, cin = x.shape
    ncol = wtaps.shape[-1]
    wq = wo + 2

    xp = jnp.pad(x, ((0, 0), (1, 1), (1, 1), (0, 0)))
    stripes = jnp.stack([xp[:, d:d + ho] for d in range(3)], axis=0)
    m = n * ho * wq
    tm = _pick_tm(m, wq)
    m_pad = _round_up(m, tm)
    stripes = stripes.reshape(3, m, cin)
    if m_pad != m:
        stripes = jnp.pad(stripes, ((0, 0), (0, m_pad - m), (0, 0)))

    wcat = wtaps.reshape(3, 3 * cin, ncol).astype(jnp.bfloat16)
    b2 = bias.reshape(1, ncol).astype(jnp.float32)
    a2 = alpha.reshape(1, ncol).astype(jnp.float32)

    in_specs = [
        pl.BlockSpec((1, tm, cin), lambda i, d: (d, i, 0)),
        pl.BlockSpec((1, 3 * cin, ncol), lambda i, d: (d, 0, 0)),
        pl.BlockSpec((1, ncol), lambda i, d: (0, 0)),
        pl.BlockSpec((1, ncol), lambda i, d: (0, 0)),
    ]
    args = [stripes, wcat, b2, a2]
    kern = _stripe_conv_kernel
    if skip is not None:
        assert skip.shape[-1] == ncol
        sk = jnp.pad(skip.astype(jnp.bfloat16),
                     ((0, 0), (0, 0), (1, 1), (0, 0))).reshape(m, ncol)
        if m_pad != m:
            sk = jnp.pad(sk, ((0, m_pad - m), (0, 0)))
        in_specs.append(pl.BlockSpec((tm, ncol), lambda i, d: (i, 0)))
        args.append(sk)
        kern = _stripe_conv_skip_kernel

    out = pl.pallas_call(
        kern,
        out_shape=jax.ShapeDtypeStruct((m_pad, ncol), jnp.bfloat16),
        grid=(m_pad // tm, 3),
        in_specs=in_specs,
        out_specs=pl.BlockSpec((tm, ncol), lambda i, d: (i, 0)),
        scratch_shapes=[pltpu.VMEM((tm, ncol), jnp.float32)],
        compiler_params=pltpu.CompilerParams(
            dimension_semantics=("parallel", "arbitrary")),
    )(*args)
    # drop the pad rows / pad columns of the 'computed-on-padded-grid' output
    return out[:m].reshape(n, ho, wq, ncol)[:, :, 1:1 + wo, :]


def conv3x3_prelu(x, w, b, alpha, skip=None):
    """Conv2d(3x3, stride 1, pad 1) + bias + PReLU (+ fused residual)."""
    # w: (Cout, Cin, 3, 3)  PyTorch layout -> per-tap (Cin, Cout)
    wtaps = jnp.transpose(w, (2, 3, 1, 0))
    return conv3x3_stripes(x, wtaps, b, alpha, skip=skip)


def conv_transpose_4x4_s2(x, w_t, bias, alpha):
    """ConvTranspose2d(kernel=4, stride=2, pad=1) + bias + PReLU on bf16 NHWC.

    All four output parities are produced by ONE stripe-kernel call with a
    merged (3,3,Cin,4*Cout) tap weight; parity p=2*py+px occupies output
    columns [p*Cout, (p+1)*Cout).  w_t: (Cin, Cout, 4, 4), PyTorch layout.
    """
    cin, cout = w_t.shape[0], w_t.shape[1]
    n, h, w, _ = x.shape
    # tap 'a' reads input row iy = m + a - 1;  a -> kernel row mapping:
    rows = ({0: 3, 1: 1},     # py = 0 : oy = 2m   -> (iy=m-1, ky=3), (iy=m, ky=1)
            {1: 2, 2: 0})     # py = 1 : oy = 2m+1 -> (iy=m, ky=2), (iy=m+1, ky=0)
    wt = jnp.zeros((3, 3, cin, 4 * cout), w_t.dtype)
    for py in (0, 1):
        for px in (0, 1):
            p = 2 * py + px
            for a, ky in rows[py].items():
                for bcol, kx in rows[px].items():
                    wt = wt.at[a, bcol, :, p * cout:(p + 1) * cout].set(
                        w_t[:, :, ky, kx])
    b4 = jnp.tile(bias, 4)
    a4 = jnp.tile(alpha, 4)
    out = conv3x3_stripes(x, wt, b4, a4)                 # (N, H, W, 4*Cout)
    out = out.reshape(n, h, w, 2, 2, cout)
    out = jnp.transpose(out, (0, 1, 3, 2, 4, 5)).reshape(n, 2 * h, 2 * w, cout)
    return out


# ----------------------------------------------------------------------------
# Pallas kernel #2: scratch-free matmul + bias + PReLU for the stride-2 conv0
# layers (single K step, K <= 300 here).
# ----------------------------------------------------------------------------
def _mm_bias_prelu_kernel(x_ref, w_ref, b_ref, a_ref, o_ref):
    y = jnp.dot(x_ref[...], w_ref[...], preferred_element_type=jnp.float32)
    y = y + b_ref[...]
    o_ref[...] = jnp.where(y >= 0.0, y, a_ref[...] * y).astype(o_ref.dtype)


def im2col(x_nhwc, kh, kw, stride, pad):
    n, h, w, c = x_nhwc.shape
    xp = jnp.pad(x_nhwc, ((0, 0), (pad, pad), (pad, pad), (0, 0)))
    ho = (h + 2 * pad - kh) // stride + 1
    wo = (w + 2 * pad - kw) // stride + 1
    patches = []
    for i in range(kh):
        for j in range(kw):
            patches.append(
                xp[:, i:i + stride * ho:stride, j:j + stride * wo:stride, :])
    cols = jnp.concatenate(patches, axis=-1)
    return cols.reshape(n * ho * wo, kh * kw * c), (n, ho, wo)


def conv2d_s2_prelu(x, w, b, alpha):
    """Conv2d(3x3, stride 2, pad 1) + bias + PReLU, im2col + fused matmul.
    x is already bf16 (cast hoisted out of the 9x-inflated cols)."""
    cout, cin, kh, kw = w.shape
    cols, (n, ho, wo) = im2col(x, kh, kw, 2, 1)
    k = cols.shape[1]
    wmat = jnp.transpose(w, (2, 3, 1, 0)).reshape(k, cout).astype(jnp.bfloat16)
    m = cols.shape[0]
    tm = _pick_tm(m, 1)
    m_pad = _round_up(m, tm)
    if m_pad != m:
        cols = jnp.pad(cols, ((0, m_pad - m), (0, 0)))
    out = pl.pallas_call(
        _mm_bias_prelu_kernel,
        out_shape=jax.ShapeDtypeStruct((m_pad, cout), jnp.bfloat16),
        grid=(m_pad // tm,),
        in_specs=[
            pl.BlockSpec((tm, k), lambda i: (i, 0)),
            pl.BlockSpec((k, cout), lambda i: (0, 0)),
            pl.BlockSpec((1, cout), lambda i: (0, 0)),
            pl.BlockSpec((1, cout), lambda i: (0, 0)),
        ],
        out_specs=pl.BlockSpec((tm, cout), lambda i: (i, 0)),
        compiler_params=pltpu.CompilerParams(
            dimension_semantics=("parallel",)),
    )(cols, wmat,
      b.reshape(1, cout).astype(jnp.float32),
      alpha.reshape(1, cout).astype(jnp.float32))
    return out[:m].reshape(n, ho, wo, cout)


# ----------------------------------------------------------------------------
# plain-JAX glue: bilinear resize (PyTorch align_corners=False semantics)
# ----------------------------------------------------------------------------
def bilinear_resize(x_nhwc, out_h, out_w):
    n, h, w, c = x_nhwc.shape
    if out_h == h and out_w == w:
        return x_nhwc

    def src_coords(out_size, in_size):
        coords = (jnp.arange(out_size, dtype=jnp.float32) + 0.5) * (
            in_size / out_size) - 0.5
        coords = jnp.clip(coords, 0.0, in_size - 1)
        lo = jnp.floor(coords).astype(jnp.int32)
        hi = jnp.minimum(lo + 1, in_size - 1)
        frac = coords - lo.astype(jnp.float32)
        return lo, hi, frac

    hlo, hhi, hf = src_coords(out_h, h)
    wlo, whi, wf = src_coords(out_w, w)
    top = x_nhwc[:, hlo, :, :]
    bot = x_nhwc[:, hhi, :, :]
    rows = top * (1.0 - hf)[None, :, None, None] + bot * hf[None, :, None, None]
    left = rows[:, :, wlo, :]
    right = rows[:, :, whi, :]
    return (left * (1.0 - wf)[None, None, :, None]
            + right * wf[None, None, :, None])


# ----------------------------------------------------------------------------
# Parameter initialization (deterministic, synthetic)
# ----------------------------------------------------------------------------
def _init_conv(key, cin, cout, k):
    k1, k2 = jax.random.split(key)
    fan_in = cin * k * k
    w = jax.random.normal(k1, (cout, cin, k, k), jnp.float32) / np.sqrt(fan_in)
    b = 0.01 * jax.random.normal(k2, (cout,), jnp.float32)
    a = jnp.full((cout,), 0.25, jnp.float32)          # PReLU default init
    return (w, b, a)


def _init_convT(key, cin, cout, k, with_prelu):
    k1, k2 = jax.random.split(key)
    fan_in = cin * k * k
    w = jax.random.normal(k1, (cin, cout, k, k), jnp.float32) / np.sqrt(fan_in)
    b = 0.01 * jax.random.normal(k2, (cout,), jnp.float32)
    a = (jnp.full((cout,), 0.25, jnp.float32) if with_prelu
         else jnp.ones((cout,), jnp.float32))         # alpha=1 -> identity
    return (w, b, a)


def init_ifblock_params(key, in_planes, c=64):
    keys = jax.random.split(key, 16)
    p = {}
    p["conv0"] = [_init_conv(keys[0], in_planes, c // 2, 3),
                  _init_conv(keys[1], c // 2, c, 3)]
    for bi in range(4):
        p[f"convblock{bi}"] = [_init_conv(keys[2 + 2 * bi], c, c, 3),
                               _init_conv(keys[3 + 2 * bi], c, c, 3)]
    p["conv1"] = [_init_convT(keys[10], c, c // 2, 4, True),
                  _init_convT(keys[11], c // 2, 4, 4, False)]
    p["conv2"] = [_init_convT(keys[12], c, c // 2, 4, True),
                  _init_convT(keys[13], c // 2, 1, 4, False)]
    return p


# ----------------------------------------------------------------------------
# IFBlock forward (NCHW in / NCHW out, like PyTorch)
# ----------------------------------------------------------------------------
def ifblock_forward(params, x_nchw, flow_nchw, scale=1):
    x = jnp.transpose(x_nchw, (0, 2, 3, 1)).astype(jnp.float32)      # NHWC
    flow = jnp.transpose(flow_nchw, (0, 2, 3, 1)).astype(jnp.float32)

    n, h, w, _ = x.shape
    dh, dw = int(math.floor(h / scale)), int(math.floor(w / scale))
    x = bilinear_resize(x, dh, dw)
    flow = bilinear_resize(flow, dh, dw) * (1.0 / scale)

    # bf16 activations from here on; f32 accumulation stays inside the kernels.
    feat = jnp.concatenate([x, flow], axis=-1).astype(jnp.bfloat16)

    # conv0: two 3x3 stride-2 convs + PReLU (im2col path, bf16 cast hoisted)
    (wc, bc, ac) = params["conv0"][0]
    feat = conv2d_s2_prelu(feat, wc, bc, ac)
    (wc, bc, ac) = params["conv0"][1]
    feat = conv2d_s2_prelu(feat, wc, bc, ac)

    # four residual conv blocks; skip-add fused into the second conv
    for bi in range(4):
        (w0, b0, a0), (w1, b1, a1) = params[f"convblock{bi}"]
        hmid = conv3x3_prelu(feat, w0, b0, a0)
        feat = conv3x3_prelu(hmid, w1, b1, a1, skip=feat)

    # heads: conv1[0] and conv2[0] merged along Cout (both read `feat`);
    # all 4 parities of each ConvTranspose2d come from one pallas_call.
    (w10, b10, a10) = params["conv1"][0]
    (w20, b20, a20) = params["conv2"][0]
    wA = jnp.concatenate([w10, w20], axis=1)          # (c, c, 4, 4)
    bA = jnp.concatenate([b10, b20], axis=0)
    aA = jnp.concatenate([a10, a20], axis=0)
    headA = conv_transpose_4x4_s2(feat, wA, bA, aA)   # (N, 2h, 2w, c) bf16

    # conv1[1] and conv2[1] merged block-diagonally (Cout = 4 + 1)
    (w11, b11, a11) = params["conv1"][1]              # (c//2, 4, 4, 4)
    (w21, b21, a21) = params["conv2"][1]              # (c//2, 1, 4, 4)
    chalf = w11.shape[0]
    n_flow, n_mask = w11.shape[1], w21.shape[1]
    wB = jnp.zeros((2 * chalf, n_flow + n_mask, 4, 4), jnp.float32)
    wB = wB.at[:chalf, :n_flow].set(w11)
    wB = wB.at[chalf:, n_flow:].set(w21)
    bB = jnp.concatenate([b11, b21], axis=0)
    aB = jnp.concatenate([a11, a21], axis=0)          # all ones -> identity
    headB = conv_transpose_4x4_s2(headA, wB, bB, aB)  # (N, 4h, 4w, 5)

    headB = headB.astype(jnp.float32)
    flow_out = headB[..., :n_flow]
    mask_out = headB[..., n_flow:]

    oh, ow = flow_out.shape[1] * scale, flow_out.shape[2] * scale
    flow_out = bilinear_resize(flow_out, int(oh), int(ow)) * float(scale)
    mask_out = bilinear_resize(mask_out, int(oh), int(ow))

    flow_out = jnp.transpose(flow_out, (0, 3, 1, 2))   # NCHW
    mask_out = jnp.transpose(mask_out, (0, 3, 1, 2))
    return flow_out, mask_out


ifblock_forward_jit = jax.jit(ifblock_forward, static_argnames=("scale",))


# ----------------------------------------------------------------------------
# Pure-JAX f32 reference (lax convs) for the correctness check
# ----------------------------------------------------------------------------
def _ref_forward(params, x, flow):
    hi = jax.lax.Precision.HIGHEST

    def prelu(y, a):
        return jnp.where(y >= 0, y, a[None, :, None, None] * y)

    def convf(y, w, b, stride, pad):
        return jax.lax.conv_general_dilated(
            y, w, (stride, stride), [(pad, pad), (pad, pad)],
            dimension_numbers=("NCHW", "OIHW", "NCHW"),
            precision=hi) + b[None, :, None, None]

    def convT(y, w_t, b, stride=2, pad=1):
        k = w_t.shape[2]
        w = jnp.transpose(w_t[:, :, ::-1, ::-1], (1, 0, 2, 3))
        return jax.lax.conv_general_dilated(
            y, w, (1, 1), [(k - 1 - pad, k - 1 - pad)] * 2,
            lhs_dilation=(stride, stride),
            dimension_numbers=("NCHW", "OIHW", "NCHW"),
            precision=hi) + b[None, :, None, None]

    feat = jnp.concatenate([x, flow], axis=1)
    for (w, b, a) in params["conv0"]:
        feat = prelu(convf(feat, w, b, 2, 1), a)
    for bi in range(4):
        h = feat
        for (w, b, a) in params[f"convblock{bi}"]:
            h = prelu(convf(h, w, b, 1, 1), a)
        feat = h + feat
    (w, b, a) = params["conv1"][0]
    f1 = prelu(convT(feat, w, b), a)
    (w, b, _) = params["conv1"][1]
    flow_o = convT(f1, w, b)
    (w, b, a) = params["conv2"][0]
    m1 = prelu(convT(feat, w, b), a)
    (w, b, _) = params["conv2"][1]
    mask_o = convT(m1, w, b)
    return flow_o, mask_o


# ----------------------------------------------------------------------------
if __name__ == "__main__":
    key = jax.random.PRNGKey(0)
    kp, kx, kf, kx2, kf2 = jax.random.split(key, 5)

    # primary config
    N, Hs, Ws = 2, 16, 16
    x_ch, flow_ch = 6, 4          # in_planes = 10
    c = 64

    params = init_ifblock_params(kp, x_ch + flow_ch, c)
    x = jax.random.normal(kx, (N, x_ch, Hs, Ws), jnp.float32)
    flow = jax.random.normal(kf, (N, flow_ch, Hs, Ws), jnp.float32)

    flow_out, mask_out = ifblock_forward_jit(params, x, flow, scale=1)
    flow_out = jax.block_until_ready(flow_out)
    mask_out = jax.block_until_ready(mask_out)

    assert flow_out.shape == (N, 4, Hs, Ws), flow_out.shape
    assert mask_out.shape == (N, 1, Hs, Ws), mask_out.shape

    # correctness vs f32 lax-conv reference (bf16 activations/MXU -> loose tol)
    flow_ref, mask_ref = _ref_forward(params, x, flow)
    np.testing.assert_allclose(np.asarray(flow_out), np.asarray(flow_ref),
                               rtol=7e-2, atol=7e-2)
    np.testing.assert_allclose(np.asarray(mask_out), np.asarray(mask_ref),
                               rtol=7e-2, atol=7e-2)

    # second config: non-square spatial size (exercises stripe/parity indexing
    # with H != W and a different padded row length)
    H2, W2 = 16, 24
    x2 = jax.random.normal(kx2, (1, x_ch, H2, W2), jnp.float32)
    flow2 = jax.random.normal(kf2, (1, flow_ch, H2, W2), jnp.float32)
    f2, m2 = ifblock_forward_jit(params, x2, flow2, scale=1)
    f2 = jax.block_until_ready(f2)
    m2 = jax.block_until_ready(m2)
    f2_ref, m2_ref = _ref_forward(params, x2, flow2)
    np.testing.assert_allclose(np.asarray(f2), np.asarray(f2_ref),
                               rtol=7e-2, atol=7e-2)
    np.testing.assert_allclose(np.asarray(m2), np.asarray(m2_ref),
                               rtol=7e-2, atol=7e-2)

    print("KERNEL_OK")
</pallas_src>

<mosaic_0001>
module attributes {stable_mosaic.version = 11 : i64} {
  func.func @_mm_bias_prelu_kernel(%arg0: i32, %arg1: memref<64x90xbf16, #tpu.memory_space<vmem>>, %arg2: memref<90x32xbf16, #tpu.memory_space<vmem>>, %arg3: memref<1x32xf32, #tpu.memory_space<vmem>>, %arg4: memref<1x32xf32, #tpu.memory_space<vmem>>, %arg5: memref<64x32xbf16, #tpu.memory_space<vmem>>) attributes {dimension_semantics = [#tpu.dimension_semantics<parallel>], iteration_bounds = array<i64: 2>, scalar_prefetch = 0 : i64, scratch_operands = 0 : i64, tpu.core_type = #tpu.core_type<tc>, window_params = [{transform_indices = @transform_0, window_bounds = array<i64: 64, 90>}, {pipeline_mode = #tpu.pipeline_mode<synchronous>, transform_indices = @transform_1, window_bounds = array<i64: 90, 32>}, {pipeline_mode = #tpu.pipeline_mode<synchronous>, transform_indices = @transform_2, window_bounds = array<i64: 1, 32>}, {pipeline_mode = #tpu.pipeline_mode<synchronous>, transform_indices = @transform_3, window_bounds = array<i64: 1, 32>}, {transform_indices = @transform_4, window_bounds = array<i64: 64, 32>}]} {
    %c0 = arith.constant 0 : index
    %c0_0 = arith.constant 0 : index
    %0 = vector.load %arg1[%c0, %c0_0] : memref<64x90xbf16, #tpu.memory_space<vmem>>, vector<64x90xbf16>
    %c0_1 = arith.constant 0 : index
    %c0_2 = arith.constant 0 : index
    %1 = vector.load %arg2[%c0_1, %c0_2] : memref<90x32xbf16, #tpu.memory_space<vmem>>, vector<90x32xbf16>
    %cst = arith.constant dense<0.000000e+00> : vector<64x32xf32>
    %2 = tpu.matmul %0, %1, %cst {dimension_numbers = #tpu.dot_dimension_numbers<[1], [0], [0], [1], [0, 0, 1, 1], [], []>} : vector<64x90xbf16>, vector<90x32xbf16>, vector<64x32xf32> -> vector<64x32xf32>
    %c0_3 = arith.constant 0 : index
    %c0_4 = arith.constant 0 : index
    %3 = vector.load %arg3[%c0_3, %c0_4] : memref<1x32xf32, #tpu.memory_space<vmem>>, vector<1x32xf32>
    %4 = vector.broadcast %3 : vector<1x32xf32> to vector<64x32xf32>
    %5 = arith.addf %2, %4 : vector<64x32xf32>
    %cst_5 = arith.constant 0.000000e+00 : f32
    %6 = vector.broadcast %cst_5 : f32 to vector<64x32xf32>
    %7 = arith.cmpf oge, %5, %6 : vector<64x32xf32>
    %c0_6 = arith.constant 0 : index
    %c0_7 = arith.constant 0 : index
    %8 = vector.load %arg4[%c0_6, %c0_7] : memref<1x32xf32, #tpu.memory_space<vmem>>, vector<1x32xf32>
    %9 = vector.broadcast %8 : vector<1x32xf32> to vector<64x32xf32>
    %10 = arith.mulf %9, %5 : vector<64x32xf32>
    %11 = arith.select %7, %5, %10 : vector<64x32xi1>, vector<64x32xf32>
    %12 = arith.truncf %11 : vector<64x32xf32> to vector<64x32xbf16>
    %c0_8 = arith.constant 0 : index
    %c0_9 = arith.constant 0 : index
    %13 = vector.load %arg5[%c0_8, %c0_9] : memref<64x32xbf16, #tpu.memory_space<vmem>>, vector<64x32xbf16>
    tpu.vector_store %arg5[%c0_8, %c0_9], %12 {strides = array<i32>} : memref<64x32xbf16, #tpu.memory_space<vmem>>, vector<64x32xbf16>,
    return
  }
  func.func @transform_0(%arg0: i32) -> (i32, i32) {
    %c0_i32 = arith.constant 0 : i32
    %c0_i32_0 = arith.constant 0 : i32
    return %arg0, %c0_i32 : i32, i32
  }
  func.func @transform_1(%arg0: i32) -> (i32, i32) {
    %c0_i32 = arith.constant 0 : i32
    %c0_i32_0 = arith.constant 0 : i32
    %c0_i32_1 = arith.constant 0 : i32
    return %c0_i32, %c0_i32_0 : i32, i32
  }
  func.func @transform_2(%arg0: i32) -> (i32, i32) {
    %c0_i32 = arith.constant 0 : i32
    %c0_i32_0 = arith.constant 0 : i32
    %c0_i32_1 = arith.constant 0 : i32
    return %c0_i32, %c0_i32_0 : i32, i32
  }
  func.func @transform_3(%arg0: i32) -> (i32, i32) {
    %c0_i32 = arith.constant 0 : i32
    %c0_i32_0 = arith.constant 0 : i32
    %c0_i32_1 = arith.constant 0 : i32
    return %c0_i32, %c0_i32_0 : i32, i32
  }
  func.func @transform_4(%arg0: i32) -> (i32, i32) {
    %c0_i32 = arith.constant 0 : i32
    %c0_i32_0 = arith.constant 0 : i32
    return %arg0, %c0_i32 : i32, i32
  }
}

module attributes {stable_mosaic.version = 11 : i64} {
  func.func @_mm_bias_prelu_kernel(%arg0: i32, %arg1: memref<16x288xbf16, #tpu.memory_space<vmem>>, %arg2: memref<288x64xbf16, #tpu.memory_space<vmem>>, %arg3: memref<1x64xf32, #tpu.memory_space<vmem>>, %arg4: memref<1x64xf32, #tpu.memory_space<vmem>>, %arg5: memref<16x64xbf16, #tpu.memory_space<vmem>>) attributes {dimension_semantics = [#tpu.dimension_semantics<parallel>], iteration_bounds = array<i64: 2>, scalar_prefetch = 0 : i64, scratch_operands = 0 : i64, tpu.core_type = #tpu.core_type<tc>, window_params = [{transform_indices = @transform_0, window_bounds = array<i64: 16, 288>}, {pipeline_mode = #tpu.pipeline_mode<synchronous>, transform_indices = @transform_1, window_bounds = array<i64: 288, 64>}, {pipeline_mode = #tpu.pipeline_mode<synchronous>, transform_indices = @transform_2, window_bounds = array<i64: 1, 64>}, {pipeline_mode = #tpu.pipeline_mode<synchronous>, transform_indices = @transform_3, window_bounds = array<i64: 1, 64>}, {transform_indices = @transform_4, window_bounds = array<i64: 16, 64>}]} {
    %c0 = arith.constant 0 : index
    %c0_0 = arith.constant 0 : index
    %0 = vector.load %arg1[%c0, %c0_0] : memref<16x288xbf16, #tpu.memory_space<vmem>>, vector<16x288xbf16>
    %c0_1 = arith.constant 0 : index
    %c0_2 = arith.constant 0 : index
    %1 = vector.load %arg2[%c0_1, %c0_2] : memref<288x64xbf16, #tpu.memory_space<vmem>>, vector<288x64xbf16>
    %cst = arith.constant dense<0.000000e+00> : vector<16x64xf32>
    %2 = tpu.matmul %0, %1, %cst {dimension_numbers = #tpu.dot_dimension_numbers<[1], [0], [0], [1], [0, 0, 1, 1], [], []>} : vector<16x288xbf16>, vector<288x64xbf16>, vector<16x64xf32> -> vector<16x64xf32>
    %c0_3 = arith.constant 0 : index
    %c0_4 = arith.constant 0 : index
    %3 = vector.load %arg3[%c0_3, %c0_4] : memref<1x64xf32, #tpu.memory_space<vmem>>, vector<1x64xf32>
    %4 = vector.broadcast %3 : vector<1x64xf32> to vector<16x64xf32>
    %5 = arith.addf %2, %4 : vector<16x64xf32>
    %cst_5 = arith.constant 0.000000e+00 : f32
    %6 = vector.broadcast %cst_5 : f32 to vector<16x64xf32>
    %7 = arith.cmpf oge, %5, %6 : vector<16x64xf32>
    %c0_6 = arith.constant 0 : index
    %c0_7 = arith.constant 0 : index
    %8 = vector.load %arg4[%c0_6, %c0_7] : memref<1x64xf32, #tpu.memory_space<vmem>>, vector<1x64xf32>
    %9 = vector.broadcast %8 : vector<1x64xf32> to vector<16x64xf32>
    %10 = arith.mulf %9, %5 : vector<16x64xf32>
    %11 = arith.select %7, %5, %10 : vector<16x64xi1>, vector<16x64xf32>
    %12 = arith.truncf %11 : vector<16x64xf32> to vector<16x64xbf16>
    %c0_8 = arith.constant 0 : index
    %c0_9 = arith.constant 0 : index
    %13 = vector.load %arg5[%c0_8, %c0_9] : memref<16x64xbf16, #tpu.memory_space<vmem>>, vector<16x64xbf16>
    tpu.vector_store %arg5[%c0_8, %c0_9], %12 {strides = array<i32>} : memref<16x64xbf16, #tpu.memory_space<vmem>>, vector<16x64xbf16>,
    return
  }
  func.func @transform_0(%arg0: i32) -> (i32, i32) {
    %c0_i32 = arith.constant 0 : i32
    %c0_i32_0 = arith.constant 0 : i32
    return %arg0, %c0_i32 : i32, i32
  }
  func.func @transform_1(%arg0: i32) -> (i32, i32) {
    %c0_i32 = arith.constant 0 : i32
    %c0_i32_0 = arith.constant 0 : i32
    %c0_i32_1 = arith.constant 0 : i32
    return %c0_i32, %c0_i32_0 : i32, i32
  }
  func.func @transform_2(%arg0: i32) -> (i32, i32) {
    %c0_i32 = arith.constant 0 : i32
    %c0_i32_0 = arith.constant 0 : i32
    %c0_i32_1 = arith.constant 0 : i32
    return %c0_i32, %c0_i32_0 : i32, i32
  }
  func.func @transform_3(%arg0: i32) -> (i32, i32) {
    %c0_i32 = arith.constant 0 : i32
    %c0_i32_0 = arith.constant 0 : i32
    %c0_i32_1 = arith.constant 0 : i32
    return %c0_i32, %c0_i32_0 : i32, i32
  }
  func.func @transform_4(%arg0: i32) -> (i32, i32) {
    %c0_i32 = arith.constant 0 : i32
    %c0_i32_0 = arith.constant 0 : i32
    return %arg0, %c0_i32 : i32, i32
  }
}

module attributes {stable_mosaic.version = 11 : i64} {
  func.func @_stripe_conv_kernel(%arg0: i32, %arg1: i32, %arg2: memref<1x24x64xbf16, #tpu.memory_space<vmem>>, %arg3: memref<1x192x64xbf16, #tpu.memory_space<vmem>>, %arg4: memref<1x64xf32, #tpu.memory_space<vmem>>, %arg5: memref<1x64xf32, #tpu.memory_space<vmem>>, %arg6: memref<24x64xbf16, #tpu.memory_space<vmem>>, %arg7: memref<24x64xf32, #tpu.memory_space<vmem>>) attributes {dimension_semantics = [#tpu.dimension_semantics<parallel>, #tpu.dimension_semantics<arbitrary>], iteration_bounds = array<i64: 2, 3>, scalar_prefetch = 0 : i64, scratch_operands = 1 : i64, tpu.core_type = #tpu.core_type<tc>, window_params = [{transform_indices = @transform_0, window_bounds = array<i64: 1, 24, 64>}, {transform_indices = @transform_1, window_bounds = array<i64: 1, 192, 64>}, {pipeline_mode = #tpu.pipeline_mode<synchronous>, transform_indices = @transform_2, window_bounds = array<i64: 1, 64>}, {pipeline_mode = #tpu.pipeline_mode<synchronous>, transform_indices = @transform_3, window_bounds = array<i64: 1, 64>}, {transform_indices = @transform_4, window_bounds = array<i64: 24, 64>}]} {
    %c0_i32 = arith.constant 0 : i32
    %0 = arith.cmpi eq, %arg1, %c0_i32 : i32
    %1 = arith.extui %0 : i1 to i32
    %c0_i32_0 = arith.constant 0 : i32
    %2 = arith.cmpi ne, %1, %c0_i32_0 : i32
    scf.if %2 {
      %cst_13 = arith.constant 0.000000e+00 : f32
      %27 = vector.broadcast %cst_13 : f32 to vector<24x64xf32>
      %c0_14 = arith.constant 0 : index
      %c0_15 = arith.constant 0 : index
      %28 = vector.load %arg7[%c0_14, %c0_15] : memref<24x64xf32, #tpu.memory_space<vmem>>, vector<24x64xf32>
      tpu.vector_store %arg7[%c0_14, %c0_15], %27 {strides = array<i32>} : memref<24x64xf32, #tpu.memory_space<vmem>>, vector<24x64xf32>,
    } else {
    }
    %c0 = arith.constant 0 : index
    %c0_1 = arith.constant 0 : index
    %c0_2 = arith.constant 0 : index
    %3 = vector.load %arg2[%c0, %c0_1, %c0_2] : memref<1x24x64xbf16, #tpu.memory_space<vmem>>, vector<1x24x64xbf16>
    %4 = vector.shape_cast %3 : vector<1x24x64xbf16> to vector<24x64xbf16>
    %c0_3 = arith.constant 0 : index
    %c0_4 = arith.constant 0 : index
    %c0_5 = arith.constant 0 : index
    %5 = vector.load %arg3[%c0_3, %c0_4, %c0_5] : memref<1x192x64xbf16, #tpu.memory_space<vmem>>, vector<1x192x64xbf16>
    %6 = vector.shape_cast %5 : vector<1x192x64xbf16> to vector<192x64xbf16>
    %7 = vector.extract_strided_slice %4 {offsets = [23, 0], sizes = [1, 64], strides = [1, 1]} : vector<24x64xbf16> to vector<1x64xbf16>
    %8 = vector.extract_strided_slice %4 {offsets = [0, 0], sizes = [23, 64], strides = [1, 1]} : vector<24x64xbf16> to vector<23x64xbf16>
    %9 = tpu.concatenate %7, %8 in 0 : vector<1x64xbf16>, vector<23x64xbf16> -> vector<24x64xbf16>
    %10 = vector.extract_strided_slice %4 {offsets = [1, 0], sizes = [23, 64], strides = [1, 1]} : vector<24x64xbf16> to vector<23x64xbf16>
    %11 = vector.extract_strided_slice %4 {offsets = [0, 0], sizes = [1, 64], strides = [1, 1]} : vector<24x64xbf16> to vector<1x64xbf16>
    %12 = tpu.concatenate %10, %11 in 0 : vector<23x64xbf16>, vector<1x64xbf16> -> vector<24x64xbf16>
    %c0_6 = arith.constant 0 : index
    %c0_7 = arith.constant 0 : index
    %13 = vector.load %arg7[%c0_6, %c0_7] : memref<24x64xf32, #tpu.memory_space<vmem>>, vector<24x64xf32>
    %14 = vector.extract_strided_slice %6 {offsets = [0, 0], sizes = [64, 64], strides = [1, 1]} : vector<192x64xbf16> to vector<64x64xbf16>
    %cst = arith.constant dense<0.000000e+00> : vector<24x64xf32>
    %15 = tpu.matmul %9, %14, %cst {dimension_numbers = #tpu.dot_dimension_numbers<[1], [0], [0], [1], [0, 0, 1, 1], [], []>} : vector<24x64xbf16>, vector<64x64xbf16>, vector<24x64xf32> -> vector<24x64xf32>
    %16 = vector.extract_strided_slice %6 {offsets = [64, 0], sizes = [64, 64], strides = [1, 1]} : vector<192x64xbf16> to vector<64x64xbf16>
    %cst_8 = arith.constant dense<0.000000e+00> : vector<24x64xf32>
    %17 = tpu.matmul %4, %16, %cst_8 {dimension_numbers = #tpu.dot_dimension_numbers<[1], [0], [0], [1], [0, 0, 1, 1], [], []>} : vector<24x64xbf16>, vector<64x64xbf16>, vector<24x64xf32> -> vector<24x64xf32>
    %18 = arith.addf %15, %17 : vector<24x64xf32>
    %19 = vector.extract_strided_slice %6 {offsets = [128, 0], sizes = [64, 64], strides = [1, 1]} : vector<192x64xbf16> to vector<64x64xbf16>
    %cst_9 = arith.constant dense<0.000000e+00> : vector<24x64xf32>
    %20 = tpu.matmul %12, %19, %cst_9 {dimension_numbers = #tpu.dot_dimension_numbers<[1], [0], [0], [1], [0, 0, 1, 1], [], []>} : vector<24x64xbf16>, vector<64x64xbf16>, vector<24x64xf32> -> vector<24x64xf32>
    %21 = arith.addf %18, %20 : vector<24x64xf32>
    %22 = arith.addf %13, %21 : vector<24x64xf32>
    %c0_10 = arith.constant 0 : index
    %c0_11 = arith.constant 0 : index
    %23 = vector.load %arg7[%c0_10, %c0_11] : memref<24x64xf32, #tpu.memory_space<vmem>>, vector<24x64xf32>
    tpu.vector_store %arg7[%c0_10, %c0_11], %22 {strides = array<i32>} : memref<24x64xf32, #tpu.memory_space<vmem>>, vector<24x64xf32>,
    %c2_i32 = arith.constant 2 : i32
    %24 = arith.cmpi eq, %arg1, %c2_i32 : i32
    %25 = arith.extui %24 : i1 to i32
    %c0_i32_12 = arith.constant 0 : i32
    %26 = arith.cmpi ne, %25, %c0_i32_12 : i32
    scf.if %26 {
      %c0_13 = arith.constant 0 : index
      %c0_14 = arith.constant 0 : index
      %27 = vector.load %arg7[%c0_13, %c0_14] : memref<24x64xf32, #tpu.memory_space<vmem>>, vector<24x64xf32>
      %c0_15 = arith.constant 0 : index
      %c0_16 = arith.constant 0 : index
      %28 = vector.load %arg4[%c0_15, %c0_16] : memref<1x64xf32, #tpu.memory_space<vmem>>, vector<1x64xf32>
      %29 = vector.broadcast %28 : vector<1x64xf32> to vector<24x64xf32>
      %30 = arith.addf %27, %29 : vector<24x64xf32>
      %cst_17 = arith.constant 0.000000e+00 : f32
      %31 = vector.broadcast %cst_17 : f32 to vector<24x64xf32>
      %32 = arith.cmpf oge, %30, %31 : vector<24x64xf32>
      %c0_18 = arith.constant 0 : index
      %c0_19 = arith.constant 0 : index
      %33 = vector.load %arg5[%c0_18, %c0_19] : memref<1x64xf32, #tpu.memory_space<vmem>>, vector<1x64xf32>
      %34 = vector.broadcast %33 : vector<1x64xf32> to vector<24x64xf32>
      %35 = arith.mulf %34, %30 : vector<24x64xf32>
      %36 = arith.select %32, %30, %35 : vector<24x64xi1>, vector<24x64xf32>
      %37 = arith.truncf %36 : vector<24x64xf32> to vector<24x64xbf16>
      %c0_20 = arith.constant 0 : index
      %c0_21 = arith.constant 0 : index
      %38 = vector.load %arg6[%c0_20, %c0_21] : memref<24x64xbf16, #tpu.memory_space<vmem>>, vector<24x64xbf16>
      tpu.vector_store %arg6[%c0_20, %c0_21], %37 {strides = array<i32>} : memref<24x64xbf16, #tpu.memory_space<vmem>>, vector<24x64xbf16>,
    } else {
    }
    return
  }
  func.func @transform_0(%arg0: i32, %arg1: i32) -> (i32, i32, i32) {
    %c0_i32 = arith.constant 0 : i32
    %c0_i32_0 = arith.constant 0 : i32
    return %arg1, %arg0, %c0_i32 : i32, i32, i32
  }
  func.func @transform_1(%arg0: i32, %arg1: i32) -> (i32, i32, i32) {
    %c0_i32 = arith.constant 0 : i32
    %c0_i32_0 = arith.constant 0 : i32
    %c0_i32_1 = arith.constant 0 : i32
    return %arg1, %c0_i32, %c0_i32_0 : i32, i32, i32
  }
  func.func @transform_2(%arg0: i32, %arg1: i32) -> (i32, i32) {
    %c0_i32 = arith.constant 0 : i32
    %c0_i32_0 = arith.constant 0 : i32
    %c0_i32_1 = arith.constant 0 : i32
    return %c0_i32, %c0_i32_0 : i32, i32
  }
  func.func @transform_3(%arg0: i32, %arg1: i32) -> (i32, i32) {
    %c0_i32 = arith.constant 0 : i32
    %c0_i32_0 = arith.constant 0 : i32
    %c0_i32_1 = arith.constant 0 : i32
    return %c0_i32, %c0_i32_0 : i32, i32
  }
  func.func @transform_4(%arg0: i32, %arg1: i32) -> (i32, i32) {
    %c0_i32 = arith.constant 0 : i32
    %c0_i32_0 = arith.constant 0 : i32
    return %arg0, %c0_i32 : i32, i32
  }
}

module attributes {stable_mosaic.version = 11 : i64} {
  func.func @_stripe_conv_skip_kernel(%arg0: i32, %arg1: i32, %arg2: memref<1x24x64xbf16, #tpu.memory_space<vmem>>, %arg3: memref<1x192x64xbf16, #tpu.memory_space<vmem>>, %arg4: memref<1x64xf32, #tpu.memory_space<vmem>>, %arg5: memref<1x64xf32, #tpu.memory_space<vmem>>, %arg6: memref<24x64xbf16, #tpu.memory_space<vmem>>, %arg7: memref<24x64xbf16, #tpu.memory_space<vmem>>, %arg8: memref<24x64xf32, #tpu.memory_space<vmem>>) attributes {dimension_semantics = [#tpu.dimension_semantics<parallel>, #tpu.dimension_semantics<arbitrary>], iteration_bounds = array<i64: 2, 3>, scalar_prefetch = 0 : i64, scratch_operands = 1 : i64, tpu.core_type = #tpu.core_type<tc>, window_params = [{transform_indices = @transform_0, window_bounds = array<i64: 1, 24, 64>}, {transform_indices = @transform_1, window_bounds = array<i64: 1, 192, 64>}, {pipeline_mode = #tpu.pipeline_mode<synchronous>, transform_indices = @transform_2, window_bounds = array<i64: 1, 64>}, {pipeline_mode = #tpu.pipeline_mode<synchronous>, transform_indices = @transform_3, window_bounds = array<i64: 1, 64>}, {transform_indices = @transform_4, window_bounds = array<i64: 24, 64>}, {transform_indices = @transform_5, window_bounds = array<i64: 24, 64>}]} {
    %c0_i32 = arith.constant 0 : i32
    %0 = arith.cmpi eq, %arg1, %c0_i32 : i32
    %1 = arith.extui %0 : i1 to i32
    %c0_i32_0 = arith.constant 0 : i32
    %2 = arith.cmpi ne, %1, %c0_i32_0 : i32
    scf.if %2 {
      %cst_13 = arith.constant 0.000000e+00 : f32
      %27 = vector.broadcast %cst_13 : f32 to vector<24x64xf32>
      %c0_14 = arith.constant 0 : index
      %c0_15 = arith.constant 0 : index
      %28 = vector.load %arg8[%c0_14, %c0_15] : memref<24x64xf32, #tpu.memory_space<vmem>>, vector<24x64xf32>
      tpu.vector_store %arg8[%c0_14, %c0_15], %27 {strides = array<i32>} : memref<24x64xf32, #tpu.memory_space<vmem>>, vector<24x64xf32>,
    } else {
    }
    %c0 = arith.constant 0 : index
    %c0_1 = arith.constant 0 : index
    %c0_2 = arith.constant 0 : index
    %3 = vector.load %arg2[%c0, %c0_1, %c0_2] : memref<1x24x64xbf16, #tpu.memory_space<vmem>>, vector<1x24x64xbf16>
    %4 = vector.shape_cast %3 : vector<1x24x64xbf16> to vector<24x64xbf16>
    %c0_3 = arith.constant 0 : index
    %c0_4 = arith.constant 0 : index
    %c0_5 = arith.constant 0 : index
    %5 = vector.load %arg3[%c0_3, %c0_4, %c0_5] : memref<1x192x64xbf16, #tpu.memory_space<vmem>>, vector<1x192x64xbf16>
    %6 = vector.shape_cast %5 : vector<1x192x64xbf16> to vector<192x64xbf16>
    %7 = vector.extract_strided_slice %4 {offsets = [23, 0], sizes = [1, 64], strides = [1, 1]} : vector<24x64xbf16> to vector<1x64xbf16>
    %8 = vector.extract_strided_slice %4 {offsets = [0, 0], sizes = [23, 64], strides = [1, 1]} : vector<24x64xbf16> to vector<23x64xbf16>
    %9 = tpu.concatenate %7, %8 in 0 : vector<1x64xbf16>, vector<23x64xbf16> -> vector<24x64xbf16>
    %10 = vector.extract_strided_slice %4 {offsets = [1, 0], sizes = [23, 64], strides = [1, 1]} : vector<24x64xbf16> to vector<23x64xbf16>
    %11 = vector.extract_strided_slice %4 {offsets = [0, 0], sizes = [1, 64], strides = [1, 1]} : vector<24x64xbf16> to vector<1x64xbf16>
    %12 = tpu.concatenate %10, %11 in 0 : vector<23x64xbf16>, vector<1x64xbf16> -> vector<24x64xbf16>
    %c0_6 = arith.constant 0 : index
    %c0_7 = arith.constant 0 : index
    %13 = vector.load %arg8[%c0_6, %c0_7] : memref<24x64xf32, #tpu.memory_space<vmem>>, vector<24x64xf32>
    %14 = vector.extract_strided_slice %6 {offsets = [0, 0], sizes = [64, 64], strides = [1, 1]} : vector<192x64xbf16> to vector<64x64xbf16>
    %cst = arith.constant dense<0.000000e+00> : vector<24x64xf32>
    %15 = tpu.matmul %9, %14, %cst {dimension_numbers = #tpu.dot_dimension_numbers<[1], [0], [0], [1], [0, 0, 1, 1], [], []>} : vector<24x64xbf16>, vector<64x64xbf16>, vector<24x64xf32> -> vector<24x64xf32>
    %16 = vector.extract_strided_slice %6 {offsets = [64, 0], sizes = [64, 64], strides = [1, 1]} : vector<192x64xbf16> to vector<64x64xbf16>
    %cst_8 = arith.constant dense<0.000000e+00> : vector<24x64xf32>
    %17 = tpu.matmul %4, %16, %cst_8 {dimension_numbers = #tpu.dot_dimension_numbers<[1], [0], [0], [1], [0, 0, 1, 1], [], []>} : vector<24x64xbf16>, vector<64x64xbf16>, vector<24x64xf32> -> vector<24x64xf32>
    %18 = arith.addf %15, %17 : vector<24x64xf32>
    %19 = vector.extract_strided_slice %6 {offsets = [128, 0], sizes = [64, 64], strides = [1, 1]} : vector<192x64xbf16> to vector<64x64xbf16>
    %cst_9 = arith.constant dense<0.000000e+00> : vector<24x64xf32>
    %20 = tpu.matmul %12, %19, %cst_9 {dimension_numbers = #tpu.dot_dimension_numbers<[1], [0], [0], [1], [0, 0, 1, 1], [], []>} : vector<24x64xbf16>, vector<64x64xbf16>, vector<24x64xf32> -> vector<24x64xf32>
    %21 = arith.addf %18, %20 : vector<24x64xf32>
    %22 = arith.addf %13, %21 : vector<24x64xf32>
    %c0_10 = arith.constant 0 : index
    %c0_11 = arith.constant 0 : index
    %23 = vector.load %arg8[%c0_10, %c0_11] : memref<24x64xf32, #tpu.memory_space<vmem>>, vector<24x64xf32>
    tpu.vector_store %arg8[%c0_10, %c0_11], %22 {strides = array<i32>} : memref<24x64xf32, #tpu.memory_space<vmem>>, vector<24x64xf32>,
    %c2_i32 = arith.constant 2 : i32
    %24 = arith.cmpi eq, %arg1, %c2_i32 : i32
    %25 = arith.extui %24 : i1 to i32
    %c0_i32_12 = arith.constant 0 : i32
    %26 = arith.cmpi ne, %25, %c0_i32_12 : i32
    scf.if %26 {
      %c0_13 = arith.constant 0 : index
      %c0_14 = arith.constant 0 : index
      %27 = vector.load %arg8[%c0_13, %c0_14] : memref<24x64xf32, #tpu.memory_space<vmem>>, vector<24x64xf32>
      %c0_15 = arith.constant 0 : index
      %c0_16 = arith.constant 0 : index
      %28 = vector.load %arg4[%c0_15, %c0_16] : memref<1x64xf32, #tpu.memory_space<vmem>>, vector<1x64xf32>
      %29 = vector.broadcast %28 : vector<1x64xf32> to vector<24x64xf32>
      %30 = arith.addf %27, %29 : vector<24x64xf32>
      %cst_17 = arith.constant 0.000000e+00 : f32
      %31 = vector.broadcast %cst_17 : f32 to vector<24x64xf32>
      %32 = arith.cmpf oge, %30, %31 : vector<24x64xf32>
      %c0_18 = arith.constant 0 : index
      %c0_19 = arith.constant 0 : index
      %33 = vector.load %arg5[%c0_18, %c0_19] : memref<1x64xf32, #tpu.memory_space<vmem>>, vector<1x64xf32>
      %34 = vector.broadcast %33 : vector<1x64xf32> to vector<24x64xf32>
      %35 = arith.mulf %34, %30 : vector<24x64xf32>
      %36 = arith.select %32, %30, %35 : vector<24x64xi1>, vector<24x64xf32>
      %c0_20 = arith.constant 0 : index
      %c0_21 = arith.constant 0 : index
      %37 = vector.load %arg6[%c0_20, %c0_21] : memref<24x64xbf16, #tpu.memory_space<vmem>>, vector<24x64xbf16>
      %38 = arith.extf %37 : vector<24x64xbf16> to vector<24x64xf32>
      %39 = arith.addf %36, %38 : vector<24x64xf32>
      %40 = arith.truncf %39 : vector<24x64xf32> to vector<24x64xbf16>
      %c0_22 = arith.constant 0 : index
      %c0_23 = arith.constant 0 : index
      %41 = vector.load %arg7[%c0_22, %c0_23] : memref<24x64xbf16, #tpu.memory_space<vmem>>, vector<24x64xbf16>
      tpu.vector_store %arg7[%c0_22, %c0_23], %40 {strides = array<i32>} : memref<24x64xbf16, #tpu.memory_space<vmem>>, vector<24x64xbf16>,
    } else {
    }
    return
  }
  func.func @transform_0(%arg0: i32, %arg1: i32) -> (i32, i32, i32) {
    %c0_i32 = arith.constant 0 : i32
    %c0_i32_0 = arith.constant 0 : i32
    return %arg1, %arg0, %c0_i32 : i32, i32, i32
  }
  func.func @transform_1(%arg0: i32, %arg1: i32) -> (i32, i32, i32) {
    %c0_i32 = arith.constant 0 : i32
    %c0_i32_0 = arith.constant 0 : i32
    %c0_i32_1 = arith.constant 0 : i32
    return %arg1, %c0_i32, %c0_i32_0 : i32, i32, i32
  }
  func.func @transform_2(%arg0: i32, %arg1: i32) -> (i32, i32) {
    %c0_i32 = arith.constant 0 : i32
    %c0_i32_0 = arith.constant 0 : i32
    %c0_i32_1 = arith.constant 0 : i32
    return %c0_i32, %c0_i32_0 : i32, i32
  }
  func.func @transform_3(%arg0: i32, %arg1: i32) -> (i32, i32) {
    %c0_i32 = arith.constant 0 : i32
    %c0_i32_0 = arith.constant 0 : i32
    %c0_i32_1 = arith.constant 0 : i32
    return %c0_i32, %c0_i32_0 : i32, i32
  }
  func.func @transform_4(%arg0: i32, %arg1: i32) -> (i32, i32) {
    %c0_i32 = arith.constant 0 : i32
    %c0_i32_0 = arith.constant 0 : i32
    return %arg0, %c0_i32 : i32, i32
  }
  func.func @transform_5(%arg0: i32, %arg1: i32) -> (i32, i32) {
    %c0_i32 = arith.constant 0 : i32
    %c0_i32_0 = arith.constant 0 : i32
    return %arg0, %c0_i32 : i32, i32
  }
}

module attributes {stable_mosaic.version = 11 : i64} {
  func.func @_stripe_conv_kernel(%arg0: i32, %arg1: i32, %arg2: memref<1x24x64xbf16, #tpu.memory_space<vmem>>, %arg3: memref<1x192x256xbf16, #tpu.memory_space<vmem>>, %arg4: memref<1x256xf32, #tpu.memory_space<vmem>>, %arg5: memref<1x256xf32, #tpu.memory_space<vmem>>, %arg6: memref<24x256xbf16, #tpu.memory_space<vmem>>, %arg7: memref<24x256xf32, #tpu.memory_space<vmem>>) attributes {dimension_semantics = [#tpu.dimension_semantics<parallel>, #tpu.dimension_semantics<arbitrary>], iteration_bounds = array<i64: 2, 3>, scalar_prefetch = 0 : i64, scratch_operands = 1 : i64, tpu.core_type = #tpu.core_type<tc>, window_params = [{transform_indices = @transform_0, window_bounds = array<i64: 1, 24, 64>}, {transform_indices = @transform_1, window_bounds = array<i64: 1, 192, 256>}, {pipeline_mode = #tpu.pipeline_mode<synchronous>, transform_indices = @transform_2, window_bounds = array<i64: 1, 256>}, {pipeline_mode = #tpu.pipeline_mode<synchronous>, transform_indices = @transform_3, window_bounds = array<i64: 1, 256>}, {transform_indices = @transform_4, window_bounds = array<i64: 24, 256>}]} {
    %c0_i32 = arith.constant 0 : i32
    %0 = arith.cmpi eq, %arg1, %c0_i32 : i32
    %1 = arith.extui %0 : i1 to i32
    %c0_i32_0 = arith.constant 0 : i32
    %2 = arith.cmpi ne, %1, %c0_i32_0 : i32
    scf.if %2 {
      %cst_13 = arith.constant 0.000000e+00 : f32
      %27 = vector.broadcast %cst_13 : f32 to vector<24x256xf32>
      %c0_14 = arith.constant 0 : index
      %c0_15 = arith.constant 0 : index
      %28 = vector.load %arg7[%c0_14, %c0_15] : memref<24x256xf32, #tpu.memory_space<vmem>>, vector<24x256xf32>
      tpu.vector_store %arg7[%c0_14, %c0_15], %27 {strides = array<i32>} : memref<24x256xf32, #tpu.memory_space<vmem>>, vector<24x256xf32>,
    } else {
    }
    %c0 = arith.constant 0 : index
    %c0_1 = arith.constant 0 : index
    %c0_2 = arith.constant 0 : index
    %3 = vector.load %arg2[%c0, %c0_1, %c0_2] : memref<1x24x64xbf16, #tpu.memory_space<vmem>>, vector<1x24x64xbf16>
    %4 = vector.shape_cast %3 : vector<1x24x64xbf16> to vector<24x64xbf16>
    %c0_3 = arith.constant 0 : index
    %c0_4 = arith.constant 0 : index
    %c0_5 = arith.constant 0 : index
    %5 = vector.load %arg3[%c0_3, %c0_4, %c0_5] : memref<1x192x256xbf16, #tpu.memory_space<vmem>>, vector<1x192x256xbf16>
    %6 = vector.shape_cast %5 : vector<1x192x256xbf16> to vector<192x256xbf16>
    %7 = vector.extract_strided_slice %4 {offsets = [23, 0], sizes = [1, 64], strides = [1, 1]} : vector<24x64xbf16> to vector<1x64xbf16>
    %8 = vector.extract_strided_slice %4 {offsets = [0, 0], sizes = [23, 64], strides = [1, 1]} : vector<24x64xbf16> to vector<23x64xbf16>
    %9 = tpu.concatenate %7, %8 in 0 : vector<1x64xbf16>, vector<23x64xbf16> -> vector<24x64xbf16>
    %10 = vector.extract_strided_slice %4 {offsets = [1, 0], sizes = [23, 64], strides = [1, 1]} : vector<24x64xbf16> to vector<23x64xbf16>
    %11 = vector.extract_strided_slice %4 {offsets = [0, 0], sizes = [1, 64], strides = [1, 1]} : vector<24x64xbf16> to vector<1x64xbf16>
    %12 = tpu.concatenate %10, %11 in 0 : vector<23x64xbf16>, vector<1x64xbf16> -> vector<24x64xbf16>
    %c0_6 = arith.constant 0 : index
    %c0_7 = arith.constant 0 : index
    %13 = vector.load %arg7[%c0_6, %c0_7] : memref<24x256xf32, #tpu.memory_space<vmem>>, vector<24x256xf32>
    %14 = vector.extract_strided_slice %6 {offsets = [0, 0], sizes = [64, 256], strides = [1, 1]} : vector<192x256xbf16> to vector<64x256xbf16>
    %cst = arith.constant dense<0.000000e+00> : vector<24x256xf32>
    %15 = tpu.matmul %9, %14, %cst {dimension_numbers = #tpu.dot_dimension_numbers<[1], [0], [0], [1], [0, 0, 1, 1], [], []>} : vector<24x64xbf16>, vector<64x256xbf16>, vector<24x256xf32> -> vector<24x256xf32>
    %16 = vector.extract_strided_slice %6 {offsets = [64, 0], sizes = [64, 256], strides = [1, 1]} : vector<192x256xbf16> to vector<64x256xbf16>
    %cst_8 = arith.constant dense<0.000000e+00> : vector<24x256xf32>
    %17 = tpu.matmul %4, %16, %cst_8 {dimension_numbers = #tpu.dot_dimension_numbers<[1], [0], [0], [1], [0, 0, 1, 1], [], []>} : vector<24x64xbf16>, vector<64x256xbf16>, vector<24x256xf32> -> vector<24x256xf32>
    %18 = arith.addf %15, %17 : vector<24x256xf32>
    %19 = vector.extract_strided_slice %6 {offsets = [128, 0], sizes = [64, 256], strides = [1, 1]} : vector<192x256xbf16> to vector<64x256xbf16>
    %cst_9 = arith.constant dense<0.000000e+00> : vector<24x256xf32>
    %20 = tpu.matmul %12, %19, %cst_9 {dimension_numbers = #tpu.dot_dimension_numbers<[1], [0], [0], [1], [0, 0, 1, 1], [], []>} : vector<24x64xbf16>, vector<64x256xbf16>, vector<24x256xf32> -> vector<24x256xf32>
    %21 = arith.addf %18, %20 : vector<24x256xf32>
    %22 = arith.addf %13, %21 : vector<24x256xf32>
    %c0_10 = arith.constant 0 : index
    %c0_11 = arith.constant 0 : index
    %23 = vector.load %arg7[%c0_10, %c0_11] : memref<24x256xf32, #tpu.memory_space<vmem>>, vector<24x256xf32>
    tpu.vector_store %arg7[%c0_10, %c0_11], %22 {strides = array<i32>} : memref<24x256xf32, #tpu.memory_space<vmem>>, vector<24x256xf32>,
    %c2_i32 = arith.constant 2 : i32
    %24 = arith.cmpi eq, %arg1, %c2_i32 : i32
    %25 = arith.extui %24 : i1 to i32
    %c0_i32_12 = arith.constant 0 : i32
    %26 = arith.cmpi ne, %25, %c0_i32_12 : i32
    scf.if %26 {
      %c0_13 = arith.constant 0 : index
      %c0_14 = arith.constant 0 : index
      %27 = vector.load %arg7[%c0_13, %c0_14] : memref<24x256xf32, #tpu.memory_space<vmem>>, vector<24x256xf32>
      %c0_15 = arith.constant 0 : index
      %c0_16 = arith.constant 0 : index
      %28 = vector.load %arg4[%c0_15, %c0_16] : memref<1x256xf32, #tpu.memory_space<vmem>>, vector<1x256xf32>
      %29 = vector.broadcast %28 : vector<1x256xf32> to vector<24x256xf32>
      %30 = arith.addf %27, %29 : vector<24x256xf32>
      %cst_17 = arith.constant 0.000000e+00 : f32
      %31 = vector.broadcast %cst_17 : f32 to vector<24x256xf32>
      %32 = arith.cmpf oge, %30, %31 : vector<24x256xf32>
      %c0_18 = arith.constant 0 : index
      %c0_19 = arith.constant 0 : index
      %33 = vector.load %arg5[%c0_18, %c0_19] : memref<1x256xf32, #tpu.memory_space<vmem>>, vector<1x256xf32>
      %34 = vector.broadcast %33 : vector<1x256xf32> to vector<24x256xf32>
      %35 = arith.mulf %34, %30 : vector<24x256xf32>
      %36 = arith.select %32, %30, %35 : vector<24x256xi1>, vector<24x256xf32>
      %37 = arith.truncf %36 : vector<24x256xf32> to vector<24x256xbf16>
      %c0_20 = arith.constant 0 : index
      %c0_21 = arith.constant 0 : index
      %38 = vector.load %arg6[%c0_20, %c0_21] : memref<24x256xbf16, #tpu.memory_space<vmem>>, vector<24x256xbf16>
      tpu.vector_store %arg6[%c0_20, %c0_21], %37 {strides = array<i32>} : memref<24x256xbf16, #tpu.memory_space<vmem>>, vector<24x256xbf16>,
    } else {
    }
    return
  }
  func.func @transform_0(%arg0: i32, %arg1: i32) -> (i32, i32, i32) {
    %c0_i32 = arith.constant 0 : i32
    %c0_i32_0 = arith.constant 0 : i32
    return %arg1, %arg0, %c0_i32 : i32, i32, i32
  }
  func.func @transform_1(%arg0: i32, %arg1: i32) -> (i32, i32, i32) {
    %c0_i32 = arith.constant 0 : i32
    %c0_i32_0 = arith.constant 0 : i32
    %c0_i32_1 = arith.constant 0 : i32
    return %arg1, %c0_i32, %c0_i32_0 : i32, i32, i32
  }
  func.func @transform_2(%arg0: i32, %arg1: i32) -> (i32, i32) {
    %c0_i32 = arith.constant 0 : i32
    %c0_i32_0 = arith.constant 0 : i32
    %c0_i32_1 = arith.constant 0 : i32
    return %c0_i32, %c0_i32_0 : i32, i32
  }
  func.func @transform_3(%arg0: i32, %arg1: i32) -> (i32, i32) {
    %c0_i32 = arith.constant 0 : i32
    %c0_i32_0 = arith.constant 0 : i32
    %c0_i32_1 = arith.constant 0 : i32
    return %c0_i32, %c0_i32_0 : i32, i32
  }
  func.func @transform_4(%arg0: i32, %arg1: i32) -> (i32, i32) {
    %c0_i32 = arith.constant 0 : i32
    %c0_i32_0 = arith.constant 0 : i32
    return %arg0, %c0_i32 : i32, i32
  }
}

module attributes {stable_mosaic.version = 11 : i64} {
  func.func @_stripe_conv_kernel(%arg0: i32, %arg1: i32, %arg2: memref<1x80x64xbf16, #tpu.memory_space<vmem>>, %arg3: memref<1x192x20xbf16, #tpu.memory_space<vmem>>, %arg4: memref<1x20xf32, #tpu.memory_space<vmem>>, %arg5: memref<1x20xf32, #tpu.memory_space<vmem>>, %arg6: memref<80x20xbf16, #tpu.memory_space<vmem>>, %arg7: memref<80x20xf32, #tpu.memory_space<vmem>>) attributes {dimension_semantics = [#tpu.dimension_semantics<parallel>, #tpu.dimension_semantics<arbitrary>], iteration_bounds = array<i64: 2, 3>, scalar_prefetch = 0 : i64, scratch_operands = 1 : i64, tpu.core_type = #tpu.core_type<tc>, window_params = [{transform_indices = @transform_0, window_bounds = array<i64: 1, 80, 64>}, {transform_indices = @transform_1, window_bounds = array<i64: 1, 192, 20>}, {pipeline_mode = #tpu.pipeline_mode<synchronous>, transform_indices = @transform_2, window_bounds = array<i64: 1, 20>}, {pipeline_mode = #tpu.pipeline_mode<synchronous>, transform_indices = @transform_3, window_bounds = array<i64: 1, 20>}, {transform_indices = @transform_4, window_bounds = array<i64: 80, 20>}]} {
    %c0_i32 = arith.constant 0 : i32
    %0 = arith.cmpi eq, %arg1, %c0_i32 : i32
    %1 = arith.extui %0 : i1 to i32
    %c0_i32_0 = arith.constant 0 : i32
    %2 = arith.cmpi ne, %1, %c0_i32_0 : i32
    scf.if %2 {
      %cst_13 = arith.constant 0.000000e+00 : f32
      %27 = vector.broadcast %cst_13 : f32 to vector<80x20xf32>
      %c0_14 = arith.constant 0 : index
      %c0_15 = arith.constant 0 : index
      %28 = vector.load %arg7[%c0_14, %c0_15] : memref<80x20xf32, #tpu.memory_space<vmem>>, vector<80x20xf32>
      tpu.vector_store %arg7[%c0_14, %c0_15], %27 {strides = array<i32>} : memref<80x20xf32, #tpu.memory_space<vmem>>, vector<80x20xf32>,
    } else {
    }
    %c0 = arith.constant 0 : index
    %c0_1 = arith.constant 0 : index
    %c0_2 = arith.constant 0 : index
    %3 = vector.load %arg2[%c0, %c0_1, %c0_2] : memref<1x80x64xbf16, #tpu.memory_space<vmem>>, vector<1x80x64xbf16>
    %4 = vector.shape_cast %3 : vector<1x80x64xbf16> to vector<80x64xbf16>
    %c0_3 = arith.constant 0 : index
    %c0_4 = arith.constant 0 : index
    %c0_5 = arith.constant 0 : index
    %5 = vector.load %arg3[%c0_3, %c0_4, %c0_5] : memref<1x192x20xbf16, #tpu.memory_space<vmem>>, vector<1x192x20xbf16>
    %6 = vector.shape_cast %5 : vector<1x192x20xbf16> to vector<192x20xbf16>
    %7 = vector.extract_strided_slice %4 {offsets = [79, 0], sizes = [1, 64], strides = [1, 1]} : vector<80x64xbf16> to vector<1x64xbf16>
    %8 = vector.extract_strided_slice %4 {offsets = [0, 0], sizes = [79, 64], strides = [1, 1]} : vector<80x64xbf16> to vector<79x64xbf16>
    %9 = tpu.concatenate %7, %8 in 0 : vector<1x64xbf16>, vector<79x64xbf16> -> vector<80x64xbf16>
    %10 = vector.extract_strided_slice %4 {offsets = [1, 0], sizes = [79, 64], strides = [1, 1]} : vector<80x64xbf16> to vector<79x64xbf16>
    %11 = vector.extract_strided_slice %4 {offsets = [0, 0], sizes = [1, 64], strides = [1, 1]} : vector<80x64xbf16> to vector<1x64xbf16>
    %12 = tpu.concatenate %10, %11 in 0 : vector<79x64xbf16>, vector<1x64xbf16> -> vector<80x64xbf16>
    %c0_6 = arith.constant 0 : index
    %c0_7 = arith.constant 0 : index
    %13 = vector.load %arg7[%c0_6, %c0_7] : memref<80x20xf32, #tpu.memory_space<vmem>>, vector<80x20xf32>
    %14 = vector.extract_strided_slice %6 {offsets = [0, 0], sizes = [64, 20], strides = [1, 1]} : vector<192x20xbf16> to vector<64x20xbf16>
    %cst = arith.constant dense<0.000000e+00> : vector<80x20xf32>
    %15 = tpu.matmul %9, %14, %cst {dimension_numbers = #tpu.dot_dimension_numbers<[1], [0], [0], [1], [0, 0, 1, 1], [], []>} : vector<80x64xbf16>, vector<64x20xbf16>, vector<80x20xf32> -> vector<80x20xf32>
    %16 = vector.extract_strided_slice %6 {offsets = [64, 0], sizes = [64, 20], strides = [1, 1]} : vector<192x20xbf16> to vector<64x20xbf16>
    %cst_8 = arith.constant dense<0.000000e+00> : vector<80x20xf32>
    %17 = tpu.matmul %4, %16, %cst_8 {dimension_numbers = #tpu.dot_dimension_numbers<[1], [0], [0], [1], [0, 0, 1, 1], [], []>} : vector<80x64xbf16>, vector<64x20xbf16>, vector<80x20xf32> -> vector<80x20xf32>
    %18 = arith.addf %15, %17 : vector<80x20xf32>
    %19 = vector.extract_strided_slice %6 {offsets = [128, 0], sizes = [64, 20], strides = [1, 1]} : vector<192x20xbf16> to vector<64x20xbf16>
    %cst_9 = arith.constant dense<0.000000e+00> : vector<80x20xf32>
    %20 = tpu.matmul %12, %19, %cst_9 {dimension_numbers = #tpu.dot_dimension_numbers<[1], [0], [0], [1], [0, 0, 1, 1], [], []>} : vector<80x64xbf16>, vector<64x20xbf16>, vector<80x20xf32> -> vector<80x20xf32>
    %21 = arith.addf %18, %20 : vector<80x20xf32>
    %22 = arith.addf %13, %21 : vector<80x20xf32>
    %c0_10 = arith.constant 0 : index
    %c0_11 = arith.constant 0 : index
    %23 = vector.load %arg7[%c0_10, %c0_11] : memref<80x20xf32, #tpu.memory_space<vmem>>, vector<80x20xf32>
    tpu.vector_store %arg7[%c0_10, %c0_11], %22 {strides = array<i32>} : memref<80x20xf32, #tpu.memory_space<vmem>>, vector<80x20xf32>,
    %c2_i32 = arith.constant 2 : i32
    %24 = arith.cmpi eq, %arg1, %c2_i32 : i32
    %25 = arith.extui %24 : i1 to i32
    %c0_i32_12 = arith.constant 0 : i32
    %26 = arith.cmpi ne, %25, %c0_i32_12 : i32
    scf.if %26 {
      %c0_13 = arith.constant 0 : index
      %c0_14 = arith.constant 0 : index
      %27 = vector.load %arg7[%c0_13, %c0_14] : memref<80x20xf32, #tpu.memory_space<vmem>>, vector<80x20xf32>
      %c0_15 = arith.constant 0 : index
      %c0_16 = arith.constant 0 : index
      %28 = vector.load %arg4[%c0_15, %c0_16] : memref<1x20xf32, #tpu.memory_space<vmem>>, vector<1x20xf32>
      %29 = vector.broadcast %28 : vector<1x20xf32> to vector<80x20xf32>
      %30 = arith.addf %27, %29 : vector<80x20xf32>
      %cst_17 = arith.constant 0.000000e+00 : f32
      %31 = vector.broadcast %cst_17 : f32 to vector<80x20xf32>
      %32 = arith.cmpf oge, %30, %31 : vector<80x20xf32>
      %c0_18 = arith.constant 0 : index
      %c0_19 = arith.constant 0 : index
      %33 = vector.load %arg5[%c0_18, %c0_19] : memref<1x20xf32, #tpu.memory_space<vmem>>, vector<1x20xf32>
      %34 = vector.broadcast %33 : vector<1x20xf32> to vector<80x20xf32>
      %35 = arith.mulf %34, %30 : vector<80x20xf32>
      %36 = arith.select %32, %30, %35 : vector<80x20xi1>, vector<80x20xf32>
      %37 = arith.truncf %36 : vector<80x20xf32> to vector<80x20xbf16>
      %c0_20 = arith.constant 0 : index
      %c0_21 = arith.constant 0 : index
      %38 = vector.load %arg6[%c0_20, %c0_21] : memref<80x20xbf16, #tpu.memory_space<vmem>>, vector<80x20xbf16>
      tpu.vector_store %arg6[%c0_20, %c0_21], %37 {strides = array<i32>} : memref<80x20xbf16, #tpu.memory_space<vmem>>, vector<80x20xbf16>,
    } else {
    }
    return
  }
  func.func @transform_0(%arg0: i32, %arg1: i32) -> (i32, i32, i32) {
    %c0_i32 = arith.constant 0 : i32
    %c0_i32_0 = arith.constant 0 : i32
    return %arg1, %arg0, %c0_i32 : i32, i32, i32
  }
  func.func @transform_1(%arg0: i32, %arg1: i32) -> (i32, i32, i32) {
    %c0_i32 = arith.constant 0 : i32
    %c0_i32_0 = arith.constant 0 : i32
    %c0_i32_1 = arith.constant 0 : i32
    return %arg1, %c0_i32, %c0_i32_0 : i32, i32, i32
  }
  func.func @transform_2(%arg0: i32, %arg1: i32) -> (i32, i32) {
    %c0_i32 = arith.constant 0 : i32
    %c0_i32_0 = arith.constant 0 : i32
    %c0_i32_1 = arith.constant 0 : i32
    return %c0_i32, %c0_i32_0 : i32, i32
  }
  func.func @transform_3(%arg0: i32, %arg1: i32) -> (i32, i32) {
    %c0_i32 = arith.constant 0 : i32
    %c0_i32_0 = arith.constant 0 : i32
    %c0_i32_1 = arith.constant 0 : i32
    return %c0_i32, %c0_i32_0 : i32, i32
  }
  func.func @transform_4(%arg0: i32, %arg1: i32) -> (i32, i32) {
    %c0_i32 = arith.constant 0 : i32
    %c0_i32_0 = arith.constant 0 : i32
    return %arg0, %c0_i32 : i32, i32
  }
}

</mosaic_0001>

<llo_original>
// kernel: tile.27
$region0: #{tile.27}
  #allocation0 [shape = 's32[1]{0}', space=sflag, size = 0x4, scoped, tag = 'scoped memory for tile.27']
  %s0 = inlined_call_operand.vmem [shape: f32[64], index: 0, kind: input, shape index: {}]
  %s1 = inlined_call_operand.vmem [shape: f32[4,64], index: 1, kind: output, shape index: {}]
  // Predicated region
  $region2: #{tile.27} parent=0 // pred_check
    _
  $region3: #{tile.27} parent=0 // pred_check_branch
    %3 = sbr.rel (0) target = $region5
  $region4: #{tile.27} parent=0 // pred_region
    _
  $region5: #{tile.27} parent=0 // pred_fallthru
    _
  %v4 = vld [vmem:[%s0] ss:$0 sm:$0xff]
  %5 = vst [vmem:[%s1] sm:$0xf] %v4

// kernel: tile.33
$region0: #{tile.33}
  #allocation0 [shape = 's32[1]{0}', space=sflag, size = 0x4, scoped, tag = 'scoped memory for tile.33']
  %s0 = inlined_call_operand.vmem [shape: f32[5], index: 0, kind: input, shape index: {}]
  %s1 = inlined_call_operand.vmem [shape: f32[4,5], index: 1, kind: output, shape index: {}]
  // Predicated region
  $region2: #{tile.33} parent=0 // pred_check
    _
  $region3: #{tile.33} parent=0 // pred_check_branch
    %3 = sbr.rel (0) target = $region5
  $region4: #{tile.33} parent=0 // pred_region
    _
  $region5: #{tile.33} parent=0 // pred_fallthru
    _
  %v4 = vld [vmem:[%s0] ss:$0 sm:$0xff]
  %5 = vst [vmem:[%s1] sm:$0xf] %v4

// kernel: tile.38
$region0: #{tile.38}
  %s0 = inlined_call_operand.vmem [shape: f32[4,5], index: 0, kind: input, shape index: {}]
  %s1 = inlined_call_operand.vmem [shape: f32[1,20], index: 1, kind: output, shape index: {}]
  $region1: #{tile.38} parent=0
    #allocation0 [shape = 'u8[4096]{0}', space=vmem, size = 0x1000, scoped, tag = 'scoped mem for output reshape']
    #allocation1 [shape = 'u8[4096]{0}', space=vmem, size = 0x1000, scoped, tag = 'scoped mem for input reshape']
    %s3 = sshll.u32 1, 4
    %s4 = ssub.s32 %s3, 1
    %v5 = vld [vmem:[%s0] sm:%s4]
    %6 = vst [vmem:[#allocation1] sm:%s4] %v5
    %v7 = vld [vmem:[#allocation1] sm:$0x1]
    %vm8 = vcmask 39936
    %9 = vst.msk [vmem:[#allocation0] sm:$0x1] %vm8, %v7
    %s10 = scalar_lea.vmem [#allocation1], 3
    %v11 = vld [vmem:[%s10] sm:$0x1]
    %12 = vrot.lane.b32.xlu0 %v11, 15
    %v13 = vpop.permute.xlu0 %12
    %vm14 = vcmask 162936
    %15 = vst.msk [vmem:[#allocation0] sm:$0x1] %vm14, %v13
    %s16 = scalar_lea.vmem [#allocation1], 2
    %v17 = vld [vmem:[%s16] sm:$0x1]
    %18 = vrot.lane.b32.xlu0 %v17, 10
    %v19 = vpop.permute.xlu0 %18
    %vm20 = vcmask 121936
    %21 = vst.msk [vmem:[#allocation0] sm:$0x1] %vm20, %v19
    %s22 = scalar_lea.vmem [#allocation1], 1
    %v23 = vld [vmem:[%s22] sm:$0x1]
    %24 = vrot.lane.b32.xlu0 %v23, 5
    %v25 = vpop.permute.xlu0 %24
    %vm26 = vcmask 80936
    %27 = vst.msk [vmem:[#allocation0] sm:$0x1] %vm26, %v25
    %s29 = sshll.u32 1, 1
    %s30 = ssub.s32 %s29, 1
    %v32 = vld [vmem:[#allocation0] sm:%s30]
    %s33 = sshll.u32 1, 1
    %s34 = ssub.s32 %s33, 1
    %35 = vst [vmem:[%s1] sm:%s34] %v32

// kernel: tile.29
$region0: #{tile.29}
  %s0 = inlined_call_operand.vmem [shape: f32[4,64], index: 0, kind: input, shape index: {}]
  %s1 = inlined_call_operand.vmem [shape: f32[1,256], index: 1, kind: output, shape index: {}]
  $region1: #{tile.29} parent=0
    #allocation0 [shape = 'u8[8192]{0}', space=vmem, size = 0x2000, scoped, tag = 'scoped mem for output reshape']
    #allocation1 [shape = 'u8[4096]{0}', space=vmem, size = 0x1000, scoped, tag = 'scoped mem for input reshape']
    %s3 = sshll.u32 1, 4
    %s4 = ssub.s32 %s3, 1
    %v5 = vld [vmem:[%s0] sm:%s4]
    %6 = vst [vmem:[#allocation1] sm:%s4] %v5
    %s7 = smov 3
    %v8 = vld [vmem:[#allocation1] ss:$2 sm:%s7]
    %vm9 = vcmask 523264
    %10 = vst.msk [vmem:[#allocation0] ss:$8 sm:$0x3] %vm9, %v8
    %s11 = scalar_lea.vmem [#allocation1], 1
    %s12 = smov 3
    %v13 = vld [vmem:[%s11] ss:$2 sm:%s12]
    %14 = vrot.lane.b32.xlu0 %v13, 64
    %v15 = vpop.permute.xlu0 %14
    %vm16 = vcmask 1048064
    %17 = vst.msk [vmem:[#allocation0] ss:$8 sm:$0x3] %vm16, %v15
    %s19 = sshll.u32 1, 1
    %s20 = ssub.s32 %s19, 1
    %v22 = vld [vmem:[#allocation0] sm:%s20]
    %s23 = sshll.u32 1, 1
    %s24 = ssub.s32 %s23, 1
    %25 = vst [vmem:[%s1] sm:%s24] %v22
    %s26 = scalar_lea.vmem [#allocation0], 8
    %v27 = vld [vmem:[%s26] sm:%s20]
    %s28 = sshll.u32 1, 1
    %s29 = ssub.s32 %s28, 1
    %s30 = scalar_lea.vmem %s1, 1
    %31 = vst [vmem:[%s30] sm:%s29] %v27

// kernel: ifblock_forward.12
$region0: #{ifblock_forward.12}
  #allocation0 [shape = 'u32[]', space=smem, size = 0x4, offset = 0x4, fixed_abs, tag = 'smem constant byte address 0x4 - core index']
  #allocation1 [shape = 'u32[144,128]{1,0:T(1,128)}', space=vmem, size = 0x12000, scoped, tag = 'internal scratch']
  %s0 = inlined_call_operand.vmem [shape: bf16[128,90], index: 0, kind: input, shape index: {}]
  %s1 = inlined_call_operand.vmem [shape: bf16[90,32], index: 1, kind: input, shape index: {}]
  %s2 = inlined_call_operand.vmem [shape: f32[1,32], index: 2, kind: input, shape index: {}]
  %s3 = inlined_call_operand.vmem [shape: f32[1,32], index: 3, kind: input, shape index: {}]
  %s4 = inlined_call_operand.vmem [shape: bf16[128,32], index: 4, kind: output, shape index: {}]
  %s5 = sld [smem:[#allocation0]]
  $region49: #{ifblock_forward.12} parent=0
    _
  %s7 = ssub.s32 1, %s5
  %s8 = scalar_select 0, %s7, %s5
  loop: start=0, step=1, limit=4
  $region2: #{ifblock_forward.12} parent=0 // loop_pre_header
    _
  $region3: #{ifblock_forward.12} parent=0 // loop_header
    %s10 = sphi 0, %s14
    %p11 = scmp.ge.s32.totalorder %s10, 4
    %s20 = sphi 0, %s22
    %s23 = sphi 0, %s20
    %s24 = sphi 0, %s23
    %s40 = sphi 0, %s24
    %s44 = sphi 0, %s44
    %s46 = sphi 0, %s44
    %s47 = sphi 0, %s46
    %s61 = sphi 0, %s47
    %s65 = sphi 0, %s65
    %s67 = sphi 0, %s65
    %s68 = sphi 0, %s67
    %s82 = sphi 0, %s68
    %s86 = sphi 0, %s86
    %s88 = sphi 0, %s86
    %s89 = sphi 0, %s88
    %s103 = sphi 0, %s89
    %s109 = sphi 0, %s111
    %s112 = sphi 0, %s109
    %s113 = sphi 0, %s112
    %s129 = sphi 0, %s113
  $region4: #{ifblock_forward.12} parent=0 // loop_header_branch
    %13 = sbr.rel (%p11) target = $region8
  $region5: #{ifblock_forward.12} parent=0 // loop_body
    %s15 = ssub.s32 %s10, 1
    %s16 = ssub.s32 %s10, 2
    %s17 = sadd.s32 %s10, 1
    %s18 = ssub.s32 %s10, %s17
    %p19 = scmp.eq.s32.totalorder %s18, 0
    %s21 = sadd.s32 %s20, 1
    %s22 = scalar_select %p19, %s20, %s21
    %p25 = pneg %p19
    %p26 = scmp.eq.s32.totalorder %s10, 1
    %p27 = por %p25, %p26
    %p28 = scmp.ne.s32.totalorder %s20, %s23
    %p29 = scmp.eq.s32.totalorder %s10, 0
    %p30 = por %p28, %p29
    %p31 = scmp.ne.s32.totalorder %s20, %s23
    %p32 = scmp.eq.s32.totalorder %s15, 1
    %p33 = por %p31, %p32
    %p34 = scmp.ne.s32.totalorder %s23, %s24
    %p35 = scmp.eq.s32.totalorder %s15, 0
    %p36 = por %p34, %p35
    %p37 = scmp.ne.s32.totalorder %s23, %s24
    %p38 = scmp.eq.s32.totalorder %s16, 1
    %p39 = por %p37, %p38
    %p41 = scmp.ne.s32.totalorder %s24, %s40
    %p42 = scmp.eq.s32.totalorder %s16, 0
    %p43 = por %p41, %p42
    %s45 = sadd.s32 %s44, 1
    %p48 = scmp.eq.s32.totalorder %s10, 1
    %p49 = scmp.ne.s32.totalorder %s44, %s46
    %p50 = scmp.eq.s32.totalorder %s10, 0
    %p51 = por %p49, %p50
    %p52 = scmp.ne.s32.totalorder %s44, %s46
    %p53 = scmp.eq.s32.totalorder %s15, 1
    %p54 = por %p52, %p53
    %p55 = scmp.ne.s32.totalorder %s46, %s47
    %p56 = scmp.eq.s32.totalorder %s15, 0
    %p57 = por %p55, %p56
    %p58 = scmp.ne.s32.totalorder %s46, %s47
    %p59 = scmp.eq.s32.totalorder %s16, 1
    %p60 = por %p58, %p59
    %p62 = scmp.ne.s32.totalorder %s47, %s61
    %p63 = scmp.eq.s32.totalorder %s16, 0
    %p64 = por %p62, %p63
    %s66 = sadd.s32 %s65, 1
    %p69 = scmp.eq.s32.totalorder %s10, 1
    %p70 = scmp.ne.s32.totalorder %s65, %s67
    %p71 = scmp.eq.s32.totalorder %s10, 0
    %p72 = por %p70, %p71
    %p73 = scmp.ne.s32.totalorder %s65, %s67
    %p74 = scmp.eq.s32.totalorder %s15, 1
    %p75 = por %p73, %p74
    %p76 = scmp.ne.s32.totalorder %s67, %s68
    %p77 = scmp.eq.s32.totalorder %s15, 0
    %p78 = por %p76, %p77
    %p79 = scmp.ne.s32.totalorder %s67, %s68
    %p80 = scmp.eq.s32.totalorder %s16, 1
    %p81 = por %p79, %p80
    %p83 = scmp.ne.s32.totalorder %s68, %s82
    %p84 = scmp.eq.s32.totalorder %s16, 0
    %p85 = por %p83, %p84
    %s87 = sadd.s32 %s86, 1
    %p90 = scmp.eq.s32.totalorder %s10, 1
    %p91 = scmp.ne.s32.totalorder %s86, %s88
    %p92 = scmp.eq.s32.totalorder %s10, 0
    %p93 = por %p91, %p92
    %p94 = scmp.ne.s32.totalorder %s86, %s88
    %p95 = scmp.eq.s32.totalorder %s15, 1
    %p96 = por %p94, %p95
    %p97 = scmp.ne.s32.totalorder %s88, %s89
    %p98 = scmp.eq.s32.totalorder %s15, 0
    %p99 = por %p97, %p98
    %p100 = scmp.ne.s32.totalorder %s88, %s89
    %p101 = scmp.eq.s32.totalorder %s16, 1
    %p102 = por %p100, %p101
    %p104 = scmp.ne.s32.totalorder %s89, %s103
    %p105 = scmp.eq.s32.totalorder %s16, 0
    %p106 = por %p104, %p105
    %s107 = ssub.s32 %s10, %s17
    %p108 = scmp.eq.s32.totalorder %s107, 0
    %s110 = sadd.s32 %s109, 1
    %s111 = scalar_select %p108, %s109, %s110
    %p114 = pneg %p108
    %p115 = scmp.eq.s32.totalorder %s10, 1
    %p116 = por %p114, %p115
    %p117 = scmp.ne.s32.totalorder %s109, %s112
    %p118 = scmp.eq.s32.totalorder %s10, 0
    %p119 = por %p117, %p118
    %p120 = scmp.ne.s32.totalorder %s109, %s112
    %p121 = scmp.eq.s32.totalorder %s15, 1
    %p122 = por %p120, %p121
    %p123 = scmp.ne.s32.totalorder %s112, %s113
    %p124 = scmp.eq.s32.totalorder %s15, 0
    %p125 = por %p123, %p124
    %p126 = scmp.ne.s32.totalorder %s112, %s113
    %p127 = scmp.eq.s32.totalorder %s16, 1
    %p128 = por %p126, %p127
    %p130 = scmp.ne.s32.totalorder %s113, %s129
    %p131 = scmp.eq.s32.totalorder %s16, 0
    %p132 = por %p130, %p131
    %p133 = scmp.le.s32.totalorder 1, %s10
    %p134 = scmp.lt.s32.totalorder %s10, 3
    %p135 = pnand %p133, %p134
    %p136 = pneg %p135
    // Predicated region
    $region9: #{ifblock_forward.12} parent=5 // pred_check
      _
    $region10: #{ifblock_forward.12} parent=5 // pred_check_branch
      %138 = sbr.rel (%p135) target = $region12
    $region11: #{ifblock_forward.12} parent=5 // pred_region
      %s139 = ssub.s32 %s10, 1
      // Predicated region
      $region13: #{ifblock_forward.12} parent=11 // pred_check
        %p140 = pneg %p57
      $region14: #{ifblock_forward.12} parent=11 // pred_check_branch
        %142 = sbr.rel (%p140) target = $region16
      $region15: #{ifblock_forward.12} parent=11 // pred_region
        _
      $region16: #{ifblock_forward.12} parent=11 // pred_fallthru
        _
      // Predicated region
      $region17: #{ifblock_forward.12} parent=11 // pred_check
        %p143 = pneg %p78
      $region18: #{ifblock_forward.12} parent=11 // pred_check_branch
        %145 = sbr.rel (%p143) target = $region20
      $region19: #{ifblock_forward.12} parent=11 // pred_region
        _
      $region20: #{ifblock_forward.12} parent=11 // pred_fallthru
        _
      // Predicated region
      $region21: #{ifblock_forward.12} parent=11 // pred_check
        %p146 = pneg %p99
      $region22: #{ifblock_forward.12} parent=11 // pred_check_branch
        %148 = sbr.rel (%p146) target = $region24
      $region23: #{ifblock_forward.12} parent=11 // pred_region
        _
      $region24: #{ifblock_forward.12} parent=11 // pred_fallthru
        _
    $region12: #{ifblock_forward.12} parent=5 // pred_fallthru
      _
    %p149 = scmp.lt.s32.totalorder %s10, 2
    // Predicated region
    $region25: #{ifblock_forward.12} parent=5 // pred_check
      %p150 = pneg %p149
    $region26: #{ifblock_forward.12} parent=5 // pred_check_branch
      %152 = sbr.rel (%p150) target = $region28
    $region27: #{ifblock_forward.12} parent=5 // pred_region
      // Predicated region
      $region29: #{ifblock_forward.12} parent=27 // pred_check
        %p153 = pneg %p30
      $region30: #{ifblock_forward.12} parent=27 // pred_check_branch
        %155 = sbr.rel (%p153) target = $region32
      $region31: #{ifblock_forward.12} parent=27 // pred_region
        %s156 = smul.u32 8, %s10
        %p157 = scmp.lt.s32.totalorder %s156, 15
        %s158 = scalar_select %p157, %s156, 15
        %s159 = smul.addr %s158, 4
        %s160 = scalar_lea.vmem %s0, %s159
        %s161 = smul.u32 8, %s10
      $region32: #{ifblock_forward.12} parent=27 // pred_fallthru
        _
    $region28: #{ifblock_forward.12} parent=5 // pred_fallthru
      _
    %p162 = scmp.le.s32.totalorder 1, %s10
    %p163 = scmp.lt.s32.totalorder %s10, 3
    %p164 = pnand %p162, %p163
    %p165 = pneg %p164
    // Predicated region
    $region33: #{ifblock_forward.12} parent=5 // pred_check
      _
    $region34: #{ifblock_forward.12} parent=5 // pred_check_branch
      %167 = sbr.rel (%p164) target = $region36
    $region35: #{ifblock_forward.12} parent=5 // pred_region
      %s168 = ssub.s32 %s10, 1
      %s169 = smul.u32 8, %s15
      %p170 = scmp.lt.s32.totalorder %s169, 15
      %s171 = scalar_select %p170, %s169, 15
      %s172 = smul.addr %s171, 4
      %s173 = scalar_lea.vmem %s0, %s172
      %p174 = pneg %p36
      %p175 = pneg %p33
      %p176 = pneg %p57
      %p177 = pneg %p54
      %p178 = pneg %p78
      %p179 = pneg %p75
      %p180 = pneg %p99
      %p181 = pneg %p96
      %p182 = pneg %p125
      %p183 = pneg %p122
      %s184 = smul.u32 8, %s15
      %p185 = scmp.lt.s32.totalorder %s184, 15
      %s186 = scalar_select %p185, %s184, 15
      %s187 = smul.addr %s186, 4
      %s188 = scalar_lea.vmem %s4, %s187
      %s189 = smul.u32 8, %s15
      %p190 = scmp.lt.s32.totalorder %s189, 15
      %s191 = scalar_select %p190, %s189, 15
      %s192 = smul.addr %s191, 4
      %s193 = scalar_lea.vmem %s0, %s192
      %s194 = smul.u32 8, %s15
      %s195 = smul.u32 8, %s15
      %p196 = scmp.lt.s32.totalorder %s195, 15
      %s197 = scalar_select %p196, %s195, 15
      %s198 = smul.addr %s197, 4
      %s199 = scalar_lea.vmem %s4, %s198
      %s200 = smul.u32 8, %s15
      %v202 = vld [vmem:[%s193] sm:$0xf]
      %v203 = vld [vmem:[%s193 + $0x4] sm:$0xf]
      %v204 = vld [vmem:[%s193 + $0x8] sm:$0xf]
      %v205 = vld [vmem:[%s193 + $0xc] sm:$0xf]
      %v206 = vld [vmem:[%s193 + $0x10] sm:$0xf]
      %v207 = vld [vmem:[%s193 + $0x14] sm:$0xf]
      %v208 = vld [vmem:[%s193 + $0x18] sm:$0xf]
      %v209 = vld [vmem:[%s193 + $0x1c] sm:$0xf]
      %v210 = vld [vmem:[%s1] sm:$0xf]
      %v211 = vld [vmem:[%s1 + $0x4] sm:$0xf]
      %v212 = vld [vmem:[%s1 + $0x8] sm:$0xf]
      %v213 = vld [vmem:[%s1 + $0xc] sm:$0xf]
      %v214 = vld [vmem:[%s1 + $0x10] sm:$0xf]
      %v215 = vld [vmem:[%s1 + $0x14] sm:$0xf]
      %v216 = vld [vmem:[%s1 + $0x18] sm:$0xf]
      %v217 = vld [vmem:[%s1 + $0x1c] sm:$0xf]
      %v218 = vld [vmem:[%s1 + $0x20] sm:$0xf]
      %v219 = vld [vmem:[%s1 + $0x24] sm:$0xf]
      %v220 = vld [vmem:[%s1 + $0x28] sm:$0xf]
      %v221 = vld [vmem:[%s1 + $0x2c] sm:$0x1]
      %v222 = vld [vmem:[%s2] sm:$0x1]
      %v224 = vlaneseq
      %v225 = vshrl.u32 %v224, 7
      %v226 = vsub.s32 0, %v225
      %v227 = vrot.slane %v222, %v226
      %v237 = vunpack.c.l.b16 %v202
      %v238 = vunpack.c.l.b16 %v203
      %v239 = vunpack.c.l.b16 %v204
      %v240 = vunpack.c.l.b16 %v205
      %v241 = vunpack.c.l.b16 %v206
      %v242 = vunpack.c.l.b16 %v207
      %v243 = vunpack.c.l.b16 %v208
      %v244 = vunpack.c.l.b16 %v209
      %v245 = vpack.c.b16 %v238, %v237
      %v246 = vpack.c.b16 %v240, %v239
      %v247 = vpack.c.b16 %v242, %v241
      %v248 = vpack.c.b16 %v244, %v243
      %v261 = vunpack.c.l.b16 %v210
      %v262 = vunpack.c.l.b16 %v211
      %v263 = vunpack.c.l.b16 %v212
      %v264 = vunpack.c.l.b16 %v213
      %v265 = vunpack.c.l.b16 %v214
      %v266 = vunpack.c.l.b16 %v215
      %v267 = vunpack.c.l.b16 %v216
      %v268 = vunpack.c.l.b16 %v217
      %v269 = vunpack.c.l.b16 %v218
      %v270 = vunpack.c.l.b16 %v219
      %v271 = vunpack.c.l.b16 %v220
      %v272 = vunpack.c.l.b16 %v221
      %v273 = vpack.c.b16 %v262, %v261
      %v274 = vpack.c.b16 %v264, %v263
      %v275 = vpack.c.b16 %v266, %v265
      %v276 = vpack.c.b16 %v268, %v267
      %v277 = vpack.c.b16 %v270, %v269
      %v278 = vpack.c.b16 %v272, %v271
      %vm284 = vcmask 736256
      %v286 = vsel %vm284, %v245, 0
      %v289 = vsel %vm284, %v246, 0
      %v292 = vsel %vm284, %v247, 0
      %v295 = vsel %vm284, %v248, 0
      %vm297 = vcmask 1044480
      %v299 = vsel %vm297, %v278, 0
      %301 = vmatprep.subr.bf16.mxu0 0
      %302 = vmatpush1.bf16.msra.mxu0 0
      %303 = vmatprep.subr.bf16.mxu0 0
      %304 = vmatpush1.bf16.msra.mxu0 0
      %305 = vmatprep.subr.bf16.mxu0 0
      %306 = vmatpush1.bf16.msra.mxu0 %v299
      %307 = vmatprep.subr.bf16.mxu0 0
      %308 = vmatpush1.bf16.msra.mxu0 %v277
      %309 = vmatprep.subr.bf16.mxu0 0
      %310 = vmatpush1.bf16.msra.mxu0 %v276
      %311 = vmatprep.subr.bf16.mxu0 0
      %312 = vmatpush1.bf16.msra.mxu0 %v275
      %313 = vmatprep.subr.bf16.mxu0 0
      %314 = vmatpush1.bf16.msra.mxu0 %v274
      %315 = vmatprep.subr.bf16.mxu0 0
      %316 = vmatpush1.bf16.msra.mxu0 %v273
      %317 = vmatprep.subr.bf16.mxu0 0
      %318 = vmatpush2.bf16.msra.mxu0 0
      %319 = vmatprep.subr.bf16.mxu0 0
      %320 = vmatpush2.bf16.msra.mxu0 0
      %321 = vmatprep.subr.bf16.mxu0 0
      %322 = vmatpush2.bf16.msra.mxu0 0
      %323 = vmatprep.subr.bf16.mxu0 0
      %324 = vmatpush2.bf16.msra.mxu0 0
      %325 = vmatprep.subr.bf16.mxu0 0
      %326 = vmatpush2.bf16.msra.mxu0 0
      %327 = vmatprep.subr.bf16.mxu0 0
      %328 = vmatpush2.bf16.msra.mxu0 0
      %329 = vmatprep.subr.bf16.mxu0 0
      %330 = vmatpush2.bf16.msra.mxu0 0
      %331 = vmatprep.subr.bf16.mxu0 0
      %332 = vmatpush2.bf16.msra.mxu0 0
      %333 = vmatprep.mubr.bf16.mxu0 0
      %334 = vmatmul.mubr.bf16.gmra.mxu0 %v286
      %v335 = vpop.f32.mrf.mxu0
      %v336 = vadd.f32 %v227, %v335
      %v337 = vpop.f32.mrf.mxu0
      %v338 = vpop.f32.mrf.mxu0
      %v339 = vadd.f32 %v227, %v338
      %v340 = vpop.f32.mrf.mxu0
      %341 = vmatprep.mubr.bf16.mxu0 0
      %342 = vmatmul.mubr.bf16.gmra.mxu0 %v289
      %v343 = vpop.f32.mrf.mxu0
      %v344 = vadd.f32 %v227, %v343
      %v345 = vpop.f32.mrf.mxu0
      %v346 = vpop.f32.mrf.mxu0
      %v347 = vadd.f32 %v227, %v346
      %v348 = vpop.f32.mrf.mxu0
      %349 = vmatprep.mubr.bf16.mxu0 0
      %350 = vmatmul.mubr.bf16.gmra.mxu0 %v292
      %v351 = vpop.f32.mrf.mxu0
      %v352 = vadd.f32 %v227, %v351
      %v353 = vpop.f32.mrf.mxu0
      %v354 = vpop.f32.mrf.mxu0
      %v355 = vadd.f32 %v227, %v354
      %v356 = vpop.f32.mrf.mxu0
      %357 = vmatprep.mubr.bf16.mxu0 0
      %358 = vmatmul.mubr.bf16.gmra.mxu0 %v295
      %v359 = vpop.f32.mrf.mxu0
      %v360 = vadd.f32 %v227, %v359
      %v361 = vpop.f32.mrf.mxu0
      %v362 = vpop.f32.mrf.mxu0
      %v363 = vadd.f32 %v227, %v362
      %v364 = vpop.f32.mrf.mxu0
      %365 = vdwg.mxu0
      %vm366 = vcmp.ge.f32.partialorder %v336, 0.0
      %vm367 = vcmp.ge.f32.partialorder %v339, 0.0
      %vm368 = vcmp.ge.f32.partialorder %v344, 0.0
      %vm369 = vcmp.ge.f32.partialorder %v347, 0.0
      %vm370 = vcmp.ge.f32.partialorder %v352, 0.0
      %vm371 = vcmp.ge.f32.partialorder %v355, 0.0
      %vm372 = vcmp.ge.f32.partialorder %v360, 0.0
      %vm373 = vcmp.ge.f32.partialorder %v363, 0.0
      %v374 = vld [vmem:[%s3] sm:$0x1]
      %v376 = vlaneseq
      %v377 = vshrl.u32 %v376, 7
      %v378 = vsub.s32 0, %v377
      %v379 = vrot.slane %v374, %v378
      %v381 = vmul.f32 %v379, %v336
      %v382 = vmul.f32 %v379, %v339
      %v383 = vmul.f32 %v379, %v344
      %v384 = vmul.f32 %v379, %v347
      %v385 = vmul.f32 %v379, %v352
      %v386 = vmul.f32 %v379, %v355
      %v387 = vmul.f32 %v379, %v360
      %v388 = vmul.f32 %v379, %v363
      %v389 = vsel %vm366, %v336, %v381
      %v390 = vsel %vm367, %v339, %v382
      %v391 = vsel %vm368, %v344, %v383
      %v392 = vsel %vm369, %v347, %v384
      %v393 = vsel %vm370, %v352, %v385
      %v394 = vsel %vm371, %v355, %v386
      %v395 = vsel %vm372, %v360, %v387
      %v396 = vsel %vm373, %v363, %v388
      %v397 = vpack.c.bf16 %v390, %v389
      %v398 = vpack.c.bf16 %v392, %v391
      %v399 = vpack.c.bf16 %v394, %v393
      %v400 = vpack.c.bf16 %v396, %v395
      %v405 = vunpack.c.l.b16 %v397
      %v406 = vunpack.c.h.b16 %v397
      %v407 = vunpack.c.l.b16 %v398
      %v408 = vunpack.c.h.b16 %v398
      %v409 = vunpack.c.l.b16 %v399
      %v410 = vunpack.c.h.b16 %v399
      %v411 = vunpack.c.l.b16 %v400
      %v412 = vunpack.c.h.b16 %v400
      %v413 = vpack.c.b16 %v405, %v405
      %v414 = vpack.c.b16 %v406, %v406
      %v415 = vpack.c.b16 %v407, %v407
      %v416 = vpack.c.b16 %v408, %v408
      %v417 = vpack.c.b16 %v409, %v409
      %v418 = vpack.c.b16 %v410, %v410
      %v419 = vpack.c.b16 %v411, %v411
      %v420 = vpack.c.b16 %v412, %v412
      %vm429 = vcmask 257024
      %430 = vst.msk [vmem:[%s199] sm:$0xf] %vm429, %v413
      %431 = vst.msk [vmem:[%s199 + $0x4] sm:$0xf] %vm429, %v414
      %432 = vst.msk [vmem:[%s199 + $0x8] sm:$0xf] %vm429, %v415
      %433 = vst.msk [vmem:[%s199 + $0xc] sm:$0xf] %vm429, %v416
      %434 = vst.msk [vmem:[%s199 + $0x10] sm:$0xf] %vm429, %v417
      %435 = vst.msk [vmem:[%s199 + $0x14] sm:$0xf] %vm429, %v418
      %436 = vst.msk [vmem:[%s199 + $0x18] sm:$0xf] %vm429, %v419
      %437 = vst.msk [vmem:[%s199 + $0x1c] sm:$0xf] %vm429, %v420
      %s438 = smul.u32 8, %s15
      %p439 = scmp.lt.s32.totalorder %s438, 15
      %s440 = scalar_select %p439, %s438, 15
      %s441 = smul.addr %s440, 4
      %s442 = scalar_lea.vmem %s4, %s441
      // Predicated region
      $region37: #{ifblock_forward.12} parent=35 // pred_check
        %p443 = pneg %p122
      $region38: #{ifblock_forward.12} parent=35 // pred_check_branch
        %445 = sbr.rel (%p443) target = $region40
      $region39: #{ifblock_forward.12} parent=35 // pred_region
        %s446 = smul.u32 8, %s15
      $region40: #{ifblock_forward.12} parent=35 // pred_fallthru
        _
    $region36: #{ifblock_forward.12} parent=5 // pred_fallthru
      _
    %p447 = scmp.le.s32.totalorder 2, %s10
    // Predicated region
    $region41: #{ifblock_forward.12} parent=5 // pred_check
      %p448 = pneg %p447
    $region42: #{ifblock_forward.12} parent=5 // pred_check_branch
      %450 = sbr.rel (%p448) target = $region44
    $region43: #{ifblock_forward.12} parent=5 // pred_region
      %s451 = ssub.s32 %s10, 2
      // Predicated region
      $region45: #{ifblock_forward.12} parent=43 // pred_check
        %p452 = pneg %p128
      $region46: #{ifblock_forward.12} parent=43 // pred_check_branch
        %454 = sbr.rel (%p452) target = $region48
      $region47: #{ifblock_forward.12} parent=43 // pred_region
        %s455 = smul.u32 8, %s16
        %p456 = scmp.lt.s32.totalorder %s455, 15
        %s457 = scalar_select %p456, %s455, 15
        %s458 = smul.addr %s457, 4
        %s459 = scalar_lea.vmem %s4, %s458
      $region48: #{ifblock_forward.12} parent=43 // pred_fallthru
        _
    $region44: #{ifblock_forward.12} parent=5 // pred_fallthru
      _
  $region6: #{ifblock_forward.12} parent=0 // loop_footer
    %s14 = sadd.s32 1, %s10
  $region7: #{ifblock_forward.12} parent=0 // loop_footer_branch
    %9 = sbr.rel target = $region3
  $region8: #{ifblock_forward.12} parent=0 // loop_exit
    _

// kernel: ifblock_forward.13
$region0: #{ifblock_forward.13}
  #allocation0 [shape = 'u32[]', space=smem, size = 0x4, offset = 0x4, fixed_abs, tag = 'smem constant byte address 0x4 - core index']
  #allocation1 [shape = 'u32[144,128]{1,0:T(1,128)}', space=vmem, size = 0x12000, scoped, tag = 'internal scratch']
  %s0 = inlined_call_operand.vmem [shape: bf16[32,288], index: 0, kind: input, shape index: {}]
  %s1 = inlined_call_operand.vmem [shape: bf16[288,64], index: 1, kind: input, shape index: {}]
  %s2 = inlined_call_operand.vmem [shape: f32[1,64], index: 2, kind: input, shape index: {}]
  %s3 = inlined_call_operand.vmem [shape: f32[1,64], index: 3, kind: input, shape index: {}]
  %s4 = inlined_call_operand.vmem [shape: bf16[32,64], index: 4, kind: output, shape index: {}]
  %s5 = sld [smem:[#allocation0]]
  $region49: #{ifblock_forward.13} parent=0
    _
  %s7 = ssub.s32 1, %s5
  %s8 = scalar_select 0, %s7, %s5
  loop: start=0, step=1, limit=4
  $region2: #{ifblock_forward.13} parent=0 // loop_pre_header
    _
  $region3: #{ifblock_forward.13} parent=0 // loop_header
    %s10 = sphi 0, %s14
    %p11 = scmp.ge.s32.totalorder %s10, 4
    %s20 = sphi 0, %s22
    %s23 = sphi 0, %s20
    %s24 = sphi 0, %s23
    %s40 = sphi 0, %s24
    %s44 = sphi 0, %s44
    %s46 = sphi 0, %s44
    %s47 = sphi 0, %s46
    %s61 = sphi 0, %s47
    %s65 = sphi 0, %s65
    %s67 = sphi 0, %s65
    %s68 = sphi 0, %s67
    %s82 = sphi 0, %s68
    %s86 = sphi 0, %s86
    %s88 = sphi 0, %s86
    %s89 = sphi 0, %s88
    %s103 = sphi 0, %s89
    %s109 = sphi 0, %s111
    %s112 = sphi 0, %s109
    %s113 = sphi 0, %s112
    %s129 = sphi 0, %s113
  $region4: #{ifblock_forward.13} parent=0 // loop_header_branch
    %13 = sbr.rel (%p11) target = $region8
  $region5: #{ifblock_forward.13} parent=0 // loop_body
    %s15 = ssub.s32 %s10, 1
    %s16 = ssub.s32 %s10, 2
    %s17 = sadd.s32 %s10, 1
    %s18 = ssub.s32 %s10, %s17
    %p19 = scmp.eq.s32.totalorder %s18, 0
    %s21 = sadd.s32 %s20, 1
    %s22 = scalar_select %p19, %s20, %s21
    %p25 = pneg %p19
    %p26 = scmp.eq.s32.totalorder %s10, 1
    %p27 = por %p25, %p26
    %p28 = scmp.ne.s32.totalorder %s20, %s23
    %p29 = scmp.eq.s32.totalorder %s10, 0
    %p30 = por %p28, %p29
    %p31 = scmp.ne.s32.totalorder %s20, %s23
    %p32 = scmp.eq.s32.totalorder %s15, 1
    %p33 = por %p31, %p32
    %p34 = scmp.ne.s32.totalorder %s23, %s24
    %p35 = scmp.eq.s32.totalorder %s15, 0
    %p36 = por %p34, %p35
    %p37 = scmp.ne.s32.totalorder %s23, %s24
    %p38 = scmp.eq.s32.totalorder %s16, 1
    %p39 = por %p37, %p38
    %p41 = scmp.ne.s32.totalorder %s24, %s40
    %p42 = scmp.eq.s32.totalorder %s16, 0
    %p43 = por %p41, %p42
    %s45 = sadd.s32 %s44, 1
    %p48 = scmp.eq.s32.totalorder %s10, 1
    %p49 = scmp.ne.s32.totalorder %s44, %s46
    %p50 = scmp.eq.s32.totalorder %s10, 0
    %p51 = por %p49, %p50
    %p52 = scmp.ne.s32.totalorder %s44, %s46
    %p53 = scmp.eq.s32.totalorder %s15, 1
    %p54 = por %p52, %p53
    %p55 = scmp.ne.s32.totalorder %s46, %s47
    %p56 = scmp.eq.s32.totalorder %s15, 0
    %p57 = por %p55, %p56
    %p58 = scmp.ne.s32.totalorder %s46, %s47
    %p59 = scmp.eq.s32.totalorder %s16, 1
    %p60 = por %p58, %p59
    %p62 = scmp.ne.s32.totalorder %s47, %s61
    %p63 = scmp.eq.s32.totalorder %s16, 0
    %p64 = por %p62, %p63
    %s66 = sadd.s32 %s65, 1
    %p69 = scmp.eq.s32.totalorder %s10, 1
    %p70 = scmp.ne.s32.totalorder %s65, %s67
    %p71 = scmp.eq.s32.totalorder %s10, 0
    %p72 = por %p70, %p71
    %p73 = scmp.ne.s32.totalorder %s65, %s67
    %p74 = scmp.eq.s32.totalorder %s15, 1
    %p75 = por %p73, %p74
    %p76 = scmp.ne.s32.totalorder %s67, %s68
    %p77 = scmp.eq.s32.totalorder %s15, 0
    %p78 = por %p76, %p77
    %p79 = scmp.ne.s32.totalorder %s67, %s68
    %p80 = scmp.eq.s32.totalorder %s16, 1
    %p81 = por %p79, %p80
    %p83 = scmp.ne.s32.totalorder %s68, %s82
    %p84 = scmp.eq.s32.totalorder %s16, 0
    %p85 = por %p83, %p84
    %s87 = sadd.s32 %s86, 1
    %p90 = scmp.eq.s32.totalorder %s10, 1
    %p91 = scmp.ne.s32.totalorder %s86, %s88
    %p92 = scmp.eq.s32.totalorder %s10, 0
    %p93 = por %p91, %p92
    %p94 = scmp.ne.s32.totalorder %s86, %s88
    %p95 = scmp.eq.s32.totalorder %s15, 1
    %p96 = por %p94, %p95
    %p97 = scmp.ne.s32.totalorder %s88, %s89
    %p98 = scmp.eq.s32.totalorder %s15, 0
    %p99 = por %p97, %p98
    %p100 = scmp.ne.s32.totalorder %s88, %s89
    %p101 = scmp.eq.s32.totalorder %s16, 1
    %p102 = por %p100, %p101
    %p104 = scmp.ne.s32.totalorder %s89, %s103
    %p105 = scmp.eq.s32.totalorder %s16, 0
    %p106 = por %p104, %p105
    %s107 = ssub.s32 %s10, %s17
    %p108 = scmp.eq.s32.totalorder %s107, 0
    %s110 = sadd.s32 %s109, 1
    %s111 = scalar_select %p108, %s109, %s110
    %p114 = pneg %p108
    %p115 = scmp.eq.s32.totalorder %s10, 1
    %p116 = por %p114, %p115
    %p117 = scmp.ne.s32.totalorder %s109, %s112
    %p118 = scmp.eq.s32.totalorder %s10, 0
    %p119 = por %p117, %p118
    %p120 = scmp.ne.s32.totalorder %s109, %s112
    %p121 = scmp.eq.s32.totalorder %s15, 1
    %p122 = por %p120, %p121
    %p123 = scmp.ne.s32.totalorder %s112, %s113
    %p124 = scmp.eq.s32.totalorder %s15, 0
    %p125 = por %p123, %p124
    %p126 = scmp.ne.s32.totalorder %s112, %s113
    %p127 = scmp.eq.s32.totalorder %s16, 1
    %p128 = por %p126, %p127
    %p130 = scmp.ne.s32.totalorder %s113, %s129
    %p131 = scmp.eq.s32.totalorder %s16, 0
    %p132 = por %p130, %p131
    %p133 = scmp.le.s32.totalorder 1, %s10
    %p134 = scmp.lt.s32.totalorder %s10, 3
    %p135 = pnand %p133, %p134
    %p136 = pneg %p135
    // Predicated region
    $region9: #{ifblock_forward.13} parent=5 // pred_check
      _
    $region10: #{ifblock_forward.13} parent=5 // pred_check_branch
      %138 = sbr.rel (%p135) target = $region12
    $region11: #{ifblock_forward.13} parent=5 // pred_region
      %s139 = ssub.s32 %s10, 1
      // Predicated region
      $region13: #{ifblock_forward.13} parent=11 // pred_check
        %p140 = pneg %p57
      $region14: #{ifblock_forward.13} parent=11 // pred_check_branch
        %142 = sbr.rel (%p140) target = $region16
      $region15: #{ifblock_forward.13} parent=11 // pred_region
        _
      $region16: #{ifblock_forward.13} parent=11 // pred_fallthru
        _
      // Predicated region
      $region17: #{ifblock_forward.13} parent=11 // pred_check
        %p143 = pneg %p78
      $region18: #{ifblock_forward.13} parent=11 // pred_check_branch
        %145 = sbr.rel (%p143) target = $region20
      $region19: #{ifblock_forward.13} parent=11 // pred_region
        _
      $region20: #{ifblock_forward.13} parent=11 // pred_fallthru
        _
      // Predicated region
      $region21: #{ifblock_forward.13} parent=11 // pred_check
        %p146 = pneg %p99
      $region22: #{ifblock_forward.13} parent=11 // pred_check_branch
        %148 = sbr.rel (%p146) target = $region24
      $region23: #{ifblock_forward.13} parent=11 // pred_region
        _
      $region24: #{ifblock_forward.13} parent=11 // pred_fallthru
        _
    $region12: #{ifblock_forward.13} parent=5 // pred_fallthru
      _
    %p149 = scmp.lt.s32.totalorder %s10, 2
    // Predicated region
    $region25: #{ifblock_forward.13} parent=5 // pred_check
      %p150 = pneg %p149
    $region26: #{ifblock_forward.13} parent=5 // pred_check_branch
      %152 = sbr.rel (%p150) target = $region28
    $region27: #{ifblock_forward.13} parent=5 // pred_region
      // Predicated region
      $region29: #{ifblock_forward.13} parent=27 // pred_check
        %p153 = pneg %p30
      $region30: #{ifblock_forward.13} parent=27 // pred_check_branch
        %155 = sbr.rel (%p153) target = $region32
      $region31: #{ifblock_forward.13} parent=27 // pred_region
        %s156 = smul.u32 2, %s10
        %p157 = scmp.lt.s32.totalorder %s156, 3
        %s158 = scalar_select %p157, %s156, 3
        %s159 = smul.addr %s158, 3
        %s160 = smul.addr %s159, 4
        %s161 = scalar_lea.vmem %s0, %s160
        %s162 = smul.u32 2, %s10
      $region32: #{ifblock_forward.13} parent=27 // pred_fallthru
        _
    $region28: #{ifblock_forward.13} parent=5 // pred_fallthru
      _
    %p163 = scmp.le.s32.totalorder 1, %s10
    %p164 = scmp.lt.s32.totalorder %s10, 3
    %p165 = pnand %p163, %p164
    %p166 = pneg %p165
    // Predicated region
    $region33: #{ifblock_forward.13} parent=5 // pred_check
      _
    $region34: #{ifblock_forward.13} parent=5 // pred_check_branch
      %168 = sbr.rel (%p165) target = $region36
    $region35: #{ifblock_forward.13} parent=5 // pred_region
      %s169 = ssub.s32 %s10, 1
      %s170 = smul.u32 2, %s15
      %p171 = scmp.lt.s32.totalorder %s170, 3
      %s172 = scalar_select %p171, %s170, 3
      %s173 = smul.addr %s172, 3
      %s174 = smul.addr %s173, 4
      %s175 = scalar_lea.vmem %s0, %s174
      %p176 = pneg %p36
      %p177 = pneg %p33
      %p178 = pneg %p57
      %p179 = pneg %p54
      %p180 = pneg %p78
      %p181 = pneg %p75
      %p182 = pneg %p99
      %p183 = pneg %p96
      %p184 = pneg %p125
      %p185 = pneg %p122
      %s186 = smul.u32 2, %s15
      %p187 = scmp.lt.s32.totalorder %s186, 3
      %s188 = scalar_select %p187, %s186, 3
      %s189 = smul.addr %s188, 4
      %s190 = scalar_lea.vmem %s4, %s189
      %s191 = smul.u32 2, %s15
      %p192 = scmp.lt.s32.totalorder %s191, 3
      %s193 = scalar_select %p192, %s191, 3
      %s194 = smul.addr %s193, 3
      %s195 = smul.addr %s194, 4
      %s196 = scalar_lea.vmem %s0, %s195
      %s197 = smul.u32 2, %s15
      %s198 = smul.u32 2, %s15
      %p199 = scmp.lt.s32.totalorder %s198, 3
      %s200 = scalar_select %p199, %s198, 3
      %s201 = smul.addr %s200, 4
      %s202 = scalar_lea.vmem %s4, %s201
      %s203 = smul.u32 2, %s15
      %v205 = vld [vmem:[%s196] sm:$0xff]
      %v206 = vld [vmem:[%s196 + $0x8] sm:$0xf]
      %v207 = vld [vmem:[%s196 + $0xc] sm:$0xff]
      %v208 = vld [vmem:[%s196 + $0x14] sm:$0xf]
      %v209 = vld [vmem:[%s1] sm:$0xf]
      %v210 = vld [vmem:[%s1 + $0x4] sm:$0xf]
      %v211 = vld [vmem:[%s1 + $0x8] sm:$0xf]
      %v212 = vld [vmem:[%s1 + $0xc] sm:$0xf]
      %v213 = vld [vmem:[%s1 + $0x10] sm:$0xf]
      %v214 = vld [vmem:[%s1 + $0x14] sm:$0xf]
      %v215 = vld [vmem:[%s1 + $0x18] sm:$0xf]
      %v216 = vld [vmem:[%s1 + $0x1c] sm:$0xf]
      %v217 = vld [vmem:[%s1 + $0x20] sm:$0xf]
      %v218 = vld [vmem:[%s1 + $0x24] sm:$0xf]
      %v219 = vld [vmem:[%s1 + $0x28] sm:$0xf]
      %v220 = vld [vmem:[%s1 + $0x2c] sm:$0xf]
      %v221 = vld [vmem:[%s1 + $0x30] sm:$0xf]
      %v222 = vld [vmem:[%s1 + $0x34] sm:$0xf]
      %v223 = vld [vmem:[%s1 + $0x38] sm:$0xf]
      %v224 = vld [vmem:[%s1 + $0x3c] sm:$0xf]
      %v225 = vld [vmem:[%s1 + $0x40] sm:$0xf]
      %v226 = vld [vmem:[%s1 + $0x44] sm:$0xf]
      %v227 = vld [vmem:[%s1 + $0x48] sm:$0xf]
      %v228 = vld [vmem:[%s1 + $0x4c] sm:$0xf]
      %v229 = vld [vmem:[%s1 + $0x50] sm:$0xf]
      %v230 = vld [vmem:[%s1 + $0x54] sm:$0xf]
      %v231 = vld [vmem:[%s1 + $0x58] sm:$0xf]
      %v232 = vld [vmem:[%s1 + $0x5c] sm:$0xf]
      %v233 = vld [vmem:[%s1 + $0x60] sm:$0xf]
      %v234 = vld [vmem:[%s1 + $0x64] sm:$0xf]
      %v235 = vld [vmem:[%s1 + $0x68] sm:$0xf]
      %v236 = vld [vmem:[%s1 + $0x6c] sm:$0xf]
      %v237 = vld [vmem:[%s1 + $0x70] sm:$0xf]
      %v238 = vld [vmem:[%s1 + $0x74] sm:$0xf]
      %v239 = vld [vmem:[%s1 + $0x78] sm:$0xf]
      %v240 = vld [vmem:[%s1 + $0x7c] sm:$0xf]
      %v241 = vld [vmem:[%s1 + $0x80] sm:$0xf]
      %v242 = vld [vmem:[%s1 + $0x84] sm:$0xf]
      %v243 = vld [vmem:[%s1 + $0x88] sm:$0xf]
      %v244 = vld [vmem:[%s1 + $0x8c] sm:$0xf]
      %v245 = vld [vmem:[%s2] sm:$0x1]
      %v247 = vlaneseq
      %v248 = vshrl.u32 %v247, 7
      %v249 = vsub.s32 0, %v248
      %v250 = vrot.slane %v245, %v249
      %v256 = vunpack.c.l.b16 %v205
      %v257 = vunpack.c.h.b16 %v205
      %v258 = vunpack.c.l.b16 %v206
      %v259 = vunpack.c.l.b16 %v207
      %v260 = vunpack.c.h.b16 %v207
      %v261 = vunpack.c.l.b16 %v208
      %v262 = vpack.c.b16 %v259, %v256
      %v263 = vpack.c.b16 %v260, %v257
      %v264 = vpack.c.b16 %v261, %v258
      %v303 = vunpack.c.l.b16 %v209
      %v304 = vunpack.c.l.b16 %v210
      %v305 = vunpack.c.l.b16 %v211
      %v306 = vunpack.c.l.b16 %v212
      %v307 = vunpack.c.l.b16 %v213
      %v308 = vunpack.c.l.b16 %v214
      %v309 = vunpack.c.l.b16 %v215
      %v310 = vunpack.c.l.b16 %v216
      %v311 = vunpack.c.l.b16 %v217
      %v312 = vunpack.c.l.b16 %v218
      %v313 = vunpack.c.l.b16 %v219
      %v314 = vunpack.c.l.b16 %v220
      %v315 = vunpack.c.l.b16 %v221
      %v316 = vunpack.c.l.b16 %v222
      %v317 = vunpack.c.l.b16 %v223
      %v318 = vunpack.c.l.b16 %v224
      %v319 = vunpack.c.l.b16 %v225
      %v320 = vunpack.c.l.b16 %v226
      %v321 = vunpack.c.l.b16 %v227
      %v322 = vunpack.c.l.b16 %v228
      %v323 = vunpack.c.l.b16 %v229
      %v324 = vunpack.c.l.b16 %v230
      %v325 = vunpack.c.l.b16 %v231
      %v326 = vunpack.c.l.b16 %v232
      %v327 = vunpack.c.l.b16 %v233
      %v328 = vunpack.c.l.b16 %v234
      %v329 = vunpack.c.l.b16 %v235
      %v330 = vunpack.c.l.b16 %v236
      %v331 = vunpack.c.l.b16 %v237
      %v332 = vunpack.c.l.b16 %v238
      %v333 = vunpack.c.l.b16 %v239
      %v334 = vunpack.c.l.b16 %v240
      %v335 = vunpack.c.l.b16 %v241
      %v336 = vunpack.c.l.b16 %v242
      %v337 = vunpack.c.l.b16 %v243
      %v338 = vunpack.c.l.b16 %v244
      %v339 = vpack.c.b16 %v304, %v303
      %v340 = vpack.c.b16 %v306, %v305
      %v341 = vpack.c.b16 %v308, %v307
      %v342 = vpack.c.b16 %v310, %v309
      %v343 = vpack.c.b16 %v312, %v311
      %v344 = vpack.c.b16 %v314, %v313
      %v345 = vpack.c.b16 %v316, %v315
      %v346 = vpack.c.b16 %v318, %v317
      %v347 = vpack.c.b16 %v320, %v319
      %v348 = vpack.c.b16 %v322, %v321
      %v349 = vpack.c.b16 %v324, %v323
      %v350 = vpack.c.b16 %v326, %v325
      %v351 = vpack.c.b16 %v328, %v327
      %v352 = vpack.c.b16 %v330, %v329
      %v353 = vpack.c.b16 %v332, %v331
      %v354 = vpack.c.b16 %v334, %v333
      %v355 = vpack.c.b16 %v336, %v335
      %v356 = vpack.c.b16 %v338, %v337
      %vm375 = vcmask 261120
      %v377 = vsel %vm375, %v264, 0
      %379 = vmatprep.subr.bf16.mxu0 0
      %380 = vmatpush1.bf16.msra.mxu0 %v346
      %381 = vmatprep.subr.bf16.mxu0 0
      %382 = vmatpush1.bf16.msra.mxu0 %v345
      %383 = vmatprep.subr.bf16.mxu0 0
      %384 = vmatpush1.bf16.msra.mxu0 %v344
      %385 = vmatprep.subr.bf16.mxu0 0
      %386 = vmatpush1.bf16.msra.mxu0 %v343
      %387 = vmatprep.subr.bf16.mxu0 0
      %388 = vmatpush1.bf16.msra.mxu0 %v342
      %389 = vmatprep.subr.bf16.mxu0 0
      %390 = vmatpush1.bf16.msra.mxu0 %v341
      %391 = vmatprep.subr.bf16.mxu0 0
      %392 = vmatpush1.bf16.msra.mxu0 %v340
      %393 = vmatprep.subr.bf16.mxu0 0
      %394 = vmatpush1.bf16.msra.mxu0 %v339
      %395 = vmatprep.subr.bf16.mxu0 0
      %396 = vmatpush2.bf16.msra.mxu0 %v354
      %397 = vmatprep.subr.bf16.mxu0 0
      %398 = vmatpush2.bf16.msra.mxu0 %v353
      %399 = vmatprep.subr.bf16.mxu0 0
      %400 = vmatpush2.bf16.msra.mxu0 %v352
      %401 = vmatprep.subr.bf16.mxu0 0
      %402 = vmatpush2.bf16.msra.mxu0 %v351
      %403 = vmatprep.subr.bf16.mxu0 0
      %404 = vmatpush2.bf16.msra.mxu0 %v350
      %405 = vmatprep.subr.bf16.mxu0 0
      %406 = vmatpush2.bf16.msra.mxu0 %v349
      %407 = vmatprep.subr.bf16.mxu0 0
      %408 = vmatpush2.bf16.msra.mxu0 %v348
      %409 = vmatprep.subr.bf16.mxu0 0
      %410 = vmatpush2.bf16.msra.mxu0 %v347
      %411 = vmatprep.mubr.bf16.mxu0 %v263
      %412 = vmatmul.mubr.bf16.gmra.mxu0 %v262
      %v413 = vpop.f32.mrf.mxu0
      %v414 = vadd.f32 %v250, %v413
      %v415 = vpop.f32.mrf.mxu0
      %v416 = vpop.f32.mrf.mxu0
      %v417 = vadd.f32 %v250, %v416
      %v418 = vpop.f32.mrf.mxu0
      %419 = vdwg.mxu0
      %420 = vmatprep.subr.bf16.mxu0 0
      %421 = vmatpush1.bf16.msra.mxu0 0
      %422 = vmatprep.subr.bf16.mxu0 0
      %423 = vmatpush1.bf16.msra.mxu0 0
      %424 = vmatprep.subr.bf16.mxu0 0
      %425 = vmatpush1.bf16.msra.mxu0 0
      %426 = vmatprep.subr.bf16.mxu0 0
      %427 = vmatpush1.bf16.msra.mxu0 0
      %428 = vmatprep.subr.bf16.mxu0 0
      %429 = vmatpush1.bf16.msra.mxu0 0
      %430 = vmatprep.subr.bf16.mxu0 0
      %431 = vmatpush1.bf16.msra.mxu0 0
      %432 = vmatprep.subr.bf16.mxu0 0
      %433 = vmatpush1.bf16.msra.mxu0 %v356
      %434 = vmatprep.subr.bf16.mxu0 0
      %435 = vmatpush1.bf16.msra.mxu0 %v355
      %436 = vmatprep.subr.bf16.mxu0 0
      %437 = vmatpush2.bf16.msra.mxu0 0
      %438 = vmatprep.subr.bf16.mxu0 0
      %439 = vmatpush2.bf16.msra.mxu0 0
      %440 = vmatprep.subr.bf16.mxu0 0
      %441 = vmatpush2.bf16.msra.mxu0 0
      %442 = vmatprep.subr.bf16.mxu0 0
      %443 = vmatpush2.bf16.msra.mxu0 0
      %444 = vmatprep.subr.bf16.mxu0 0
      %445 = vmatpush2.bf16.msra.mxu0 0
      %446 = vmatprep.subr.bf16.mxu0 0
      %447 = vmatpush2.bf16.msra.mxu0 0
      %448 = vmatprep.subr.bf16.mxu0 0
      %449 = vmatpush2.bf16.msra.mxu0 0
      %450 = vmatprep.subr.bf16.mxu0 0
      %451 = vmatpush2.bf16.msra.mxu0 0
      %452 = vmatprep.mubr.bf16.mxu0 0
      %453 = vmatmul.mubr.bf16.gmra.mxu0 %v377
      %v454 = vpop.f32.mrf.mxu0
      %v455 = vadd.f32 %v414, %v454
      %v456 = vpop.f32.mrf.mxu0
      %v457 = vpop.f32.mrf.mxu0
      %v458 = vadd.f32 %v417, %v457
      %v459 = vpop.f32.mrf.mxu0
      %460 = vdwg.mxu0
      %vm461 = vcmp.ge.f32.partialorder %v455, 0.0
      %vm462 = vcmp.ge.f32.partialorder %v458, 0.0
      %v463 = vld [vmem:[%s3] sm:$0x1]
      %v465 = vlaneseq
      %v466 = vshrl.u32 %v465, 7
      %v467 = vsub.s32 0, %v466
      %v468 = vrot.slane %v463, %v467
      %v470 = vmul.f32 %v468, %v455
      %v471 = vmul.f32 %v468, %v458
      %v472 = vsel %vm461, %v455, %v470
      %v473 = vsel %vm462, %v458, %v471
      %v474 = vpack.c.bf16 %v473, %v472
      %v476 = vunpack.c.l.b16 %v474
      %v477 = vunpack.c.h.b16 %v474
      %v478 = vpack.c.b16 %v476, %v476
      %v479 = vpack.c.b16 %v477, %v477
      %vm482 = vcmask 519168
      %483 = vst.msk [vmem:[%s202] sm:$0xf] %vm482, %v478
      %484 = vst.msk [vmem:[%s202 + $0x4] sm:$0xf] %vm482, %v479
      %s485 = smul.u32 2, %s15
      %p486 = scmp.lt.s32.totalorder %s485, 3
      %s487 = scalar_select %p486, %s485, 3
      %s488 = smul.addr %s487, 4
      %s489 = scalar_lea.vmem %s4, %s488
      // Predicated region
      $region37: #{ifblock_forward.13} parent=35 // pred_check
        %p490 = pneg %p122
      $region38: #{ifblock_forward.13} parent=35 // pred_check_branch
        %492 = sbr.rel (%p490) target = $region40
      $region39: #{ifblock_forward.13} parent=35 // pred_region
        %s493 = smul.u32 2, %s15
      $region40: #{ifblock_forward.13} parent=35 // pred_fallthru
        _
    $region36: #{ifblock_forward.13} parent=5 // pred_fallthru
      _
    %p494 = scmp.le.s32.totalorder 2, %s10
    // Predicated region
    $region41: #{ifblock_forward.13} parent=5 // pred_check
      %p495 = pneg %p494
    $region42: #{ifblock_forward.13} parent=5 // pred_check_branch
      %497 = sbr.rel (%p495) target = $region44
    $region43: #{ifblock_forward.13} parent=5 // pred_region
      %s498 = ssub.s32 %s10, 2
      // Predicated region
      $region45: #{ifblock_forward.13} parent=43 // pred_check
        %p499 = pneg %p128
      $region46: #{ifblock_forward.13} parent=43 // pred_check_branch
        %501 = sbr.rel (%p499) target = $region48
      $region47: #{ifblock_forward.13} parent=43 // pred_region
        %s502 = smul.u32 2, %s16
        %p503 = scmp.lt.s32.totalorder %s502, 3
        %s504 = scalar_select %p503, %s502, 3
        %s505 = smul.addr %s504, 4
        %s506 = scalar_lea.vmem %s4, %s505
      $region48: #{ifblock_forward.13} parent=43 // pred_fallthru
        _
    $region44: #{ifblock_forward.13} parent=5 // pred_fallthru
      _
  $region6: #{ifblock_forward.13} parent=0 // loop_footer
    %s14 = sadd.s32 1, %s10
  $region7: #{ifblock_forward.13} parent=0 // loop_footer_branch
    %9 = sbr.rel target = $region3
  $region8: #{ifblock_forward.13} parent=0 // loop_exit
    _

// kernel: ifblock_forward.14
$region0: #{ifblock_forward.14}
  #allocation0 [shape = 'u32[]', space=smem, size = 0x4, offset = 0x4, fixed_abs, tag = 'smem constant byte address 0x4 - core index']
  #allocation1 [shape = 'u32[144,128]{1,0:T(1,128)}', space=vmem, size = 0x12000, scoped, tag = 'internal scratch']
  #allocation2 [shape = 'f32[24,64]{1,0:T(8,128)}', space=vmem, size = 0x3000, scoped, tag = 'scratch operand']
  %s0 = inlined_call_operand.vmem [shape: bf16[3,48,64], index: 0, kind: input, shape index: {}]
  %s1 = inlined_call_operand.vmem [shape: bf16[3,192,64], index: 1, kind: input, shape index: {}]
  %s2 = inlined_call_operand.vmem [shape: f32[1,64], index: 2, kind: input, shape index: {}]
  %s3 = inlined_call_operand.vmem [shape: f32[1,64], index: 3, kind: input, shape index: {}]
  %s4 = inlined_call_operand.vmem [shape: bf16[48,64], index: 4, kind: output, shape index: {}]
  %s5 = sld [smem:[#allocation0]]
  $region57: #{ifblock_forward.14} parent=0
    _
  %s7 = ssub.s32 1, %s5
  %s8 = scalar_select 0, %s7, %s5
  loop: start=0, step=1, limit=8
  $region2: #{ifblock_forward.14} parent=0 // loop_pre_header
    _
  $region3: #{ifblock_forward.14} parent=0 // loop_header
    %s10 = sphi 0, %s14
    %p11 = scmp.ge.s32.totalorder %s10, 8
    %s17 = sphi 0, %s29
    %s18 = sphi 0, %s25
    %s19 = sphi 0, %s17
    %s20 = sphi 0, %s18
    %s21 = sphi 0, %s19
    %s22 = sphi 0, %s20
    %s34 = sphi 0, %s36
    %s37 = sphi 0, %s34
    %s38 = sphi 0, %s37
    %s54 = sphi 0, %s38
    %s60 = sphi 0, %s62
    %s63 = sphi 0, %s60
    %s64 = sphi 0, %s63
    %s80 = sphi 0, %s64
    %s84 = sphi 0, %s84
    %s86 = sphi 0, %s84
    %s87 = sphi 0, %s86
    %s101 = sphi 0, %s87
    %s105 = sphi 0, %s105
    %s107 = sphi 0, %s105
    %s108 = sphi 0, %s107
    %s122 = sphi 0, %s108
    %s128 = sphi 0, %s130
    %s131 = sphi 0, %s128
    %s132 = sphi 0, %s131
    %s148 = sphi 0, %s132
  $region4: #{ifblock_forward.14} parent=0 // loop_header_branch
    %13 = sbr.rel (%p11) target = $region8
  $region5: #{ifblock_forward.14} parent=0 // loop_body
    %s15 = ssub.s32 %s10, 1
    %s16 = ssub.s32 %s10, 2
    %s23 = sadd.s32 1, %s18
    %p24 = scmp.ge.s32.totalorder %s23, 3
    %s25 = scalar_select %p24, 0, %s23
    %s26 = sadd.s32 1, %s17
    %s27 = scalar_select %p24, %s26, %s17
    %p28 = scmp.ge.s32.totalorder %s27, 2
    %s29 = scalar_select %p28, 0, %s27
    %s30 = ssub.s32 %s18, %s25
    %s31 = ssub.s32 %s17, %s29
    %s32 = sor.u32 %s30, %s31
    %p33 = scmp.eq.s32.totalorder %s32, 0
    %s35 = sadd.s32 %s34, 1
    %s36 = scalar_select %p33, %s34, %s35
    %p39 = pneg %p33
    %p40 = scmp.eq.s32.totalorder %s10, 5
    %p41 = por %p39, %p40
    %p42 = scmp.ne.s32.totalorder %s34, %s37
    %p43 = scmp.eq.s32.totalorder %s10, 0
    %p44 = por %p42, %p43
    %p45 = scmp.ne.s32.totalorder %s34, %s37
    %p46 = scmp.eq.s32.totalorder %s15, 5
    %p47 = por %p45, %p46
    %p48 = scmp.ne.s32.totalorder %s37, %s38
    %p49 = scmp.eq.s32.totalorder %s15, 0
    %p50 = por %p48, %p49
    %p51 = scmp.ne.s32.totalorder %s37, %s38
    %p52 = scmp.eq.s32.totalorder %s16, 5
    %p53 = por %p51, %p52
    %p55 = scmp.ne.s32.totalorder %s38, %s54
    %p56 = scmp.eq.s32.totalorder %s16, 0
    %p57 = por %p55, %p56
    %s58 = ssub.s32 %s18, %s25
    %p59 = scmp.eq.s32.totalorder %s58, 0
    %s61 = sadd.s32 %s60, 1
    %s62 = scalar_select %p59, %s60, %s61
    %p65 = pneg %p59
    %p66 = scmp.eq.s32.totalorder %s10, 5
    %p67 = por %p65, %p66
    %p68 = scmp.ne.s32.totalorder %s60, %s63
    %p69 = scmp.eq.s32.totalorder %s10, 0
    %p70 = por %p68, %p69
    %p71 = scmp.ne.s32.totalorder %s60, %s63
    %p72 = scmp.eq.s32.totalorder %s15, 5
    %p73 = por %p71, %p72
    %p74 = scmp.ne.s32.totalorder %s63, %s64
    %p75 = scmp.eq.s32.totalorder %s15, 0
    %p76 = por %p74, %p75
    %p77 = scmp.ne.s32.totalorder %s63, %s64
    %p78 = scmp.eq.s32.totalorder %s16, 5
    %p79 = por %p77, %p78
    %p81 = scmp.ne.s32.totalorder %s64, %s80
    %p82 = scmp.eq.s32.totalorder %s16, 0
    %p83 = por %p81, %p82
    %s85 = sadd.s32 %s84, 1
    %p88 = scmp.eq.s32.totalorder %s10, 5
    %p89 = scmp.ne.s32.totalorder %s84, %s86
    %p90 = scmp.eq.s32.totalorder %s10, 0
    %p91 = por %p89, %p90
    %p92 = scmp.ne.s32.totalorder %s84, %s86
    %p93 = scmp.eq.s32.totalorder %s15, 5
    %p94 = por %p92, %p93
    %p95 = scmp.ne.s32.totalorder %s86, %s87
    %p96 = scmp.eq.s32.totalorder %s15, 0
    %p97 = por %p95, %p96
    %p98 = scmp.ne.s32.totalorder %s86, %s87
    %p99 = scmp.eq.s32.totalorder %s16, 5
    %p100 = por %p98, %p99
    %p102 = scmp.ne.s32.totalorder %s87, %s101
    %p103 = scmp.eq.s32.totalorder %s16, 0
    %p104 = por %p102, %p103
    %s106 = sadd.s32 %s105, 1
    %p109 = scmp.eq.s32.totalorder %s10, 5
    %p110 = scmp.ne.s32.totalorder %s105, %s107
    %p111 = scmp.eq.s32.totalorder %s10, 0
    %p112 = por %p110, %p111
    %p113 = scmp.ne.s32.totalorder %s105, %s107
    %p114 = scmp.eq.s32.totalorder %s15, 5
    %p115 = por %p113, %p114
    %p116 = scmp.ne.s32.totalorder %s107, %s108
    %p117 = scmp.eq.s32.totalorder %s15, 0
    %p118 = por %p116, %p117
    %p119 = scmp.ne.s32.totalorder %s107, %s108
    %p120 = scmp.eq.s32.totalorder %s16, 5
    %p121 = por %p119, %p120
    %p123 = scmp.ne.s32.totalorder %s108, %s122
    %p124 = scmp.eq.s32.totalorder %s16, 0
    %p125 = por %p123, %p124
    %s126 = ssub.s32 %s17, %s29
    %p127 = scmp.eq.s32.totalorder %s126, 0
    %s129 = sadd.s32 %s128, 1
    %s130 = scalar_select %p127, %s128, %s129
    %p133 = pneg %p127
    %p134 = scmp.eq.s32.totalorder %s10, 5
    %p135 = por %p133, %p134
    %p136 = scmp.ne.s32.totalorder %s128, %s131
    %p137 = scmp.eq.s32.totalorder %s10, 0
    %p138 = por %p136, %p137
    %p139 = scmp.ne.s32.totalorder %s128, %s131
    %p140 = scmp.eq.s32.totalorder %s15, 5
    %p141 = por %p139, %p140
    %p142 = scmp.ne.s32.totalorder %s131, %s132
    %p143 = scmp.eq.s32.totalorder %s15, 0
    %p144 = por %p142, %p143
    %p145 = scmp.ne.s32.totalorder %s131, %s132
    %p146 = scmp.eq.s32.totalorder %s16, 5
    %p147 = por %p145, %p146
    %p149 = scmp.ne.s32.totalorder %s132, %s148
    %p150 = scmp.eq.s32.totalorder %s16, 0
    %p151 = por %p149, %p150
    %p152 = scmp.le.s32.totalorder 1, %s10
    %p153 = scmp.lt.s32.totalorder %s10, 7
    %p154 = pnand %p152, %p153
    %p155 = pneg %p154
    // Predicated region
    $region9: #{ifblock_forward.14} parent=5 // pred_check
      _
    $region10: #{ifblock_forward.14} parent=5 // pred_check_branch
      %157 = sbr.rel (%p154) target = $region12
    $region11: #{ifblock_forward.14} parent=5 // pred_region
      %s158 = ssub.s32 %s10, 1
      // Predicated region
      $region13: #{ifblock_forward.14} parent=11 // pred_check
        %p159 = pneg %p97
      $region14: #{ifblock_forward.14} parent=11 // pred_check_branch
        %161 = sbr.rel (%p159) target = $region16
      $region15: #{ifblock_forward.14} parent=11 // pred_region
        _
      $region16: #{ifblock_forward.14} parent=11 // pred_fallthru
        _
      // Predicated region
      $region17: #{ifblock_forward.14} parent=11 // pred_check
        %p162 = pneg %p118
      $region18: #{ifblock_forward.14} parent=11 // pred_check_branch
        %164 = sbr.rel (%p162) target = $region20
      $region19: #{ifblock_forward.14} parent=11 // pred_region
        _
      $region20: #{ifblock_forward.14} parent=11 // pred_fallthru
        _
    $region12: #{ifblock_forward.14} parent=5 // pred_fallthru
      _
    %p165 = scmp.lt.s32.totalorder %s10, 6
    // Predicated region
    $region21: #{ifblock_forward.14} parent=5 // pred_check
      %p166 = pneg %p165
    $region22: #{ifblock_forward.14} parent=5 // pred_check_branch
      %168 = sbr.rel (%p166) target = $region24
    $region23: #{ifblock_forward.14} parent=5 // pred_region
      // Predicated region
      $region25: #{ifblock_forward.14} parent=23 // pred_check
        %p169 = pneg %p44
      $region26: #{ifblock_forward.14} parent=23 // pred_check_branch
        %171 = sbr.rel (%p169) target = $region28
      $region27: #{ifblock_forward.14} parent=23 // pred_region
        %s172 = smul.u32 3, %s17
        %p173 = scmp.lt.s32.totalorder %s18, 2
        %s174 = scalar_select %p173, %s18, 2
        %p175 = scmp.lt.s32.totalorder %s172, 5
        %s176 = scalar_select %p175, %s172, 5
        %s177 = smul.addr %s174, 6
        %s178 = sadd.s32 %s176, %s177
        %s179 = smul.addr %s178, 4
        %s180 = scalar_lea.vmem %s0, %s179
        %s181 = smul.u32 3, %s17
      $region28: #{ifblock_forward.14} parent=23 // pred_fallthru
        _
      // Predicated region
      $region29: #{ifblock_forward.14} parent=23 // pred_check
        %p182 = pneg %p70
      $region30: #{ifblock_forward.14} parent=23 // pred_check_branch
        %184 = sbr.rel (%p182) target = $region32
      $region31: #{ifblock_forward.14} parent=23 // pred_region
        %p185 = scmp.lt.s32.totalorder %s18, 2
        %s186 = scalar_select %p185, %s18, 2
        %s187 = smul.addr %s186, 24
        %s188 = smul.addr %s187, 4
        %s189 = scalar_lea.vmem %s1, %s188
      $region32: #{ifblock_forward.14} parent=23 // pred_fallthru
        _
    $region24: #{ifblock_forward.14} parent=5 // pred_fallthru
      _
    %p190 = scmp.le.s32.totalorder 1, %s10
    %p191 = scmp.lt.s32.totalorder %s10, 7
    %p192 = pnand %p190, %p191
    %p193 = pneg %p192
    // Predicated region
    $region33: #{ifblock_forward.14} parent=5 // pred_check
      _
    $region34: #{ifblock_forward.14} parent=5 // pred_check_branch
      %195 = sbr.rel (%p192) target = $region36
    $region35: #{ifblock_forward.14} parent=5 // pred_region
      %s196 = ssub.s32 %s10, 1
      %s197 = smul.u32 3, %s19
      %p198 = scmp.lt.s32.totalorder %s20, 2
      %s199 = scalar_select %p198, %s20, 2
      %p200 = scmp.lt.s32.totalorder %s197, 5
      %s201 = scalar_select %p200, %s197, 5
      %s202 = smul.addr %s199, 6
      %s203 = sadd.s32 %s201, %s202
      %s204 = smul.addr %s203, 4
      %s205 = scalar_lea.vmem %s0, %s204
      %p206 = pneg %p50
      %p207 = pneg %p47
      %p208 = scmp.lt.s32.totalorder %s20, 2
      %s209 = scalar_select %p208, %s20, 2
      %s210 = smul.addr %s209, 24
      %s211 = smul.addr %s210, 4
      %s212 = scalar_lea.vmem %s1, %s211
      %p213 = pneg %p76
      %p214 = pneg %p73
      %p215 = pneg %p97
      %p216 = pneg %p94
      %p217 = pneg %p118
      %p218 = pneg %p115
      %p219 = pneg %p144
      %p220 = pneg %p141
      %s221 = smul.u32 3, %s19
      %p222 = scmp.lt.s32.totalorder %s221, 5
      %s223 = scalar_select %p222, %s221, 5
      %s224 = smul.addr %s223, 4
      %s225 = scalar_lea.vmem %s4, %s224
      %s226 = smul.u32 3, %s19
      %p227 = scmp.lt.s32.totalorder %s20, 2
      %s228 = scalar_select %p227, %s20, 2
      %p229 = scmp.lt.s32.totalorder %s226, 5
      %s230 = scalar_select %p229, %s226, 5
      %s231 = smul.addr %s228, 6
      %s232 = sadd.s32 %s230, %s231
      %s233 = smul.addr %s232, 4
      %s234 = scalar_lea.vmem %s0, %s233
      %s235 = smul.u32 3, %s19
      %p236 = scmp.lt.s32.totalorder %s20, 2
      %s237 = scalar_select %p236, %s20, 2
      %s238 = smul.addr %s237, 24
      %s239 = smul.addr %s238, 4
      %s240 = scalar_lea.vmem %s1, %s239
      %s241 = smul.u32 3, %s19
      %p242 = scmp.lt.s32.totalorder %s241, 5
      %s243 = scalar_select %p242, %s241, 5
      %s244 = smul.addr %s243, 4
      %s245 = scalar_lea.vmem %s4, %s244
      %s246 = smul.u32 3, %s19
      %p248 = scmp.eq.s32.totalorder %s20, 0
      // Predicated region
      $region37: #{ifblock_forward.14} parent=35 // pred_check
        %p249 = pneg %p248
      $region38: #{ifblock_forward.14} parent=35 // pred_check_branch
        %251 = sbr.rel (%p249) target = $region40
      $region39: #{ifblock_forward.14} parent=35 // pred_region
        %vm252 = vcmask 523264
        %253 = vst.msk [vmem:[#allocation2] sm:$0xff] %vm252, 0.0
        %254 = vst.msk [vmem:[#allocation2 + $0x8] sm:$0xff] %vm252, 0.0
        %255 = vst.msk [vmem:[#allocation2 + $0x10] sm:$0xff] %vm252, 0.0
      $region40: #{ifblock_forward.14} parent=35 // pred_fallthru
        _
      %v256 = vld [vmem:[%s234] sm:$0xf]
      %v257 = vld [vmem:[%s234 + $0x4] sm:$0xf]
      %v258 = vld [vmem:[%s234 + $0x8] sm:$0xf]
      %v259 = vld [vmem:[%s240] sm:$0xf]
      %v260 = vld [vmem:[%s240 + $0x4] sm:$0xf]
      %v261 = vld [vmem:[%s240 + $0x8] sm:$0xf]
      %v262 = vld [vmem:[%s240 + $0xc] sm:$0xf]
      %v263 = vld [vmem:[%s240 + $0x10] sm:$0xf]
      %v264 = vld [vmem:[%s240 + $0x14] sm:$0xf]
      %v265 = vld [vmem:[%s240 + $0x18] sm:$0xf]
      %v266 = vld [vmem:[%s240 + $0x1c] sm:$0xf]
      %v267 = vld [vmem:[%s240 + $0x20] sm:$0xf]
      %v268 = vld [vmem:[%s240 + $0x24] sm:$0xf]
      %v269 = vld [vmem:[%s240 + $0x28] sm:$0xf]
      %v270 = vld [vmem:[%s240 + $0x2c] sm:$0xf]
      %v271 = vld [vmem:[%s240 + $0x30] sm:$0xf]
      %v272 = vld [vmem:[%s240 + $0x34] sm:$0xf]
      %v273 = vld [vmem:[%s240 + $0x38] sm:$0xf]
      %v274 = vld [vmem:[%s240 + $0x3c] sm:$0xf]
      %v275 = vld [vmem:[%s240 + $0x40] sm:$0xf]
      %v276 = vld [vmem:[%s240 + $0x44] sm:$0xf]
      %v277 = vld [vmem:[%s240 + $0x48] sm:$0xf]
      %v278 = vld [vmem:[%s240 + $0x4c] sm:$0xf]
      %v279 = vld [vmem:[%s240 + $0x50] sm:$0xf]
      %v280 = vld [vmem:[%s240 + $0x54] sm:$0xf]
      %v281 = vld [vmem:[%s240 + $0x58] sm:$0xf]
      %v282 = vld [vmem:[%s240 + $0x5c] sm:$0xf]
      %v284 = vunpack.c.l.b16 %v258
      %v285 = vpack.c.b16 %v284, %v284
      %v287 = vshrl.u32 %v285, 16
      %v289 = vrot.slane %v287, 3
      %v293 = vunpack.c.l.b16 %v256
      %v294 = vunpack.c.l.b16 %v257
      %v295 = vpack.c.b16 %v294, %v293
      %vm296 = vsmask.f32 256
      %v298 = vshrl.u32 %v295, 16
      %v300 = vrot.slane %v298, 7
      %v301 = vshll.u32 %v295, 16
      %v303 = vor.u32 %v300, %v301
      %v304 = vrot.slane %v287, 7
      %v305 = vshll.u32 %v285, 16
      %v307 = vor.u32 %v304, %v305
      %v308 = vsel %vm296, %v300, %v307
      %vm310 = vcmask 1040384
      %vm311 = vmand %vm310, %vm296
      %v312 = vsel %vm311, %v289, %v303
      %vm313 = vsmask.f32 7424
      %v314 = vrot.slane %v301, 1
      %v315 = vor.u32 %v298, %v314
      %v316 = vrot.slane %v305, 1
      %v317 = vsel %vm313, %v315, %v316
      %v318 = vor.u32 %v287, %v316
      %v320 = vpack.c.b16 %v293, %v293
      %v322 = vshll.u32 %v320, 16
      %v324 = vrot.slane %v322, 5
      %vm326 = vcmask 1043456
      %vm327 = vsmask.f32 3328
      %vm328 = vmand %vm326, %vm327
      %v329 = vsel %vm328, %v318, %v324
      %v330 = vld [vmem:[#allocation2] sm:$0xff]
      %v331 = vld [vmem:[#allocation2 + $0x8] sm:$0xff]
      %v332 = vld [vmem:[#allocation2 + $0x10] sm:$0xff]
      %v341 = vunpack.c.l.b16 %v267
      %v342 = vunpack.c.l.b16 %v268
      %v343 = vunpack.c.l.b16 %v269
      %v344 = vunpack.c.l.b16 %v270
      %v345 = vunpack.c.l.b16 %v271
      %v346 = vunpack.c.l.b16 %v272
      %v347 = vunpack.c.l.b16 %v273
      %v348 = vunpack.c.l.b16 %v274
      %v349 = vpack.c.b16 %v342, %v341
      %v350 = vpack.c.b16 %v344, %v343
      %v351 = vpack.c.b16 %v346, %v345
      %v352 = vpack.c.b16 %v348, %v347
      %vm357 = vcmask 523264
      %v358 = vsel %vm357, %v295, 0
      %v360 = vsel %vm357, %v285, 0
      %362 = vmatprep.subr.bf16.mxu0 0
      %363 = vmatpush1.bf16.msra.mxu0 0
      %364 = vmatprep.subr.bf16.mxu0 0
      %365 = vmatpush1.bf16.msra.mxu0 0
      %366 = vmatprep.subr.bf16.mxu0 0
      %367 = vmatpush1.bf16.msra.mxu0 0
      %368 = vmatprep.subr.bf16.mxu0 0
      %369 = vmatpush1.bf16.msra.mxu0 0
      %370 = vmatprep.subr.bf16.mxu0 0
      %371 = vmatpush1.bf16.msra.mxu0 %v352
      %372 = vmatprep.subr.bf16.mxu0 0
      %373 = vmatpush1.bf16.msra.mxu0 %v351
      %374 = vmatprep.subr.bf16.mxu0 0
      %375 = vmatpush1.bf16.msra.mxu0 %v350
      %376 = vmatprep.subr.bf16.mxu0 0
      %377 = vmatpush1.bf16.msra.mxu0 %v349
      %378 = vmatprep.subr.bf16.mxu0 0
      %379 = vmatpush2.bf16.msra.mxu0 0
      %380 = vmatprep.subr.bf16.mxu0 0
      %381 = vmatpush2.bf16.msra.mxu0 0
      %382 = vmatprep.subr.bf16.mxu0 0
      %383 = vmatpush2.bf16.msra.mxu0 0
      %384 = vmatprep.subr.bf16.mxu0 0
      %385 = vmatpush2.bf16.msra.mxu0 0
      %386 = vmatprep.subr.bf16.mxu0 0
      %387 = vmatpush2.bf16.msra.mxu0 0
      %388 = vmatprep.subr.bf16.mxu0 0
      %389 = vmatpush2.bf16.msra.mxu0 0
      %390 = vmatprep.subr.bf16.mxu0 0
      %391 = vmatpush2.bf16.msra.mxu0 0
      %392 = vmatprep.subr.bf16.mxu0 0
      %393 = vmatpush2.bf16.msra.mxu0 0
      %394 = vmatprep.mubr.bf16.mxu0 0
      %395 = vmatmul.mubr.bf16.gmra.mxu0 %v358
      %v396 = vpop.f32.mrf.mxu0
      %v397 = vadd.f32 0.0, %v396
      %v398 = vpop.f32.mrf.mxu0
      %v399 = vpop.f32.mrf.mxu0
      %v400 = vadd.f32 0.0, %v399
      %v401 = vpop.f32.mrf.mxu0
      %402 = vmatprep.mubr.bf16.mxu0 0
      %403 = vmatmul.mubr.bf16.gmra.mxu0 %v360
      %v404 = vpop.f32.mrf.mxu0
      %v405 = vadd.f32 0.0, %v404
      %v406 = vpop.f32.mrf.mxu0
      %v407 = vpop.f32.mrf.mxu0
      %v408 = vpop.f32.mrf.mxu0
      %409 = vdwg.mxu0
      %v418 = vunpack.c.l.b16 %v259
      %v419 = vunpack.c.l.b16 %v260
      %v420 = vunpack.c.l.b16 %v261
      %v421 = vunpack.c.l.b16 %v262
      %v422 = vunpack.c.l.b16 %v263
      %v423 = vunpack.c.l.b16 %v264
      %v424 = vunpack.c.l.b16 %v265
      %v425 = vunpack.c.l.b16 %v266
      %v426 = vpack.c.b16 %v419, %v418
      %v427 = vpack.c.b16 %v421, %v420
      %v428 = vpack.c.b16 %v423, %v422
      %v429 = vpack.c.b16 %v425, %v424
      %v435 = vsel %vm357, %v312, 0
      %v438 = vsel %vm357, %v308, 0
      %440 = vmatprep.subr.bf16.mxu0 0
      %441 = vmatpush1.bf16.msra.mxu0 0
      %442 = vmatprep.subr.bf16.mxu0 0
      %443 = vmatpush1.bf16.msra.mxu0 0
      %444 = vmatprep.subr.bf16.mxu0 0
      %445 = vmatpush1.bf16.msra.mxu0 0
      %446 = vmatprep.subr.bf16.mxu0 0
      %447 = vmatpush1.bf16.msra.mxu0 0
      %448 = vmatprep.subr.bf16.mxu0 0
      %449 = vmatpush1.bf16.msra.mxu0 %v429
      %450 = vmatprep.subr.bf16.mxu0 0
      %451 = vmatpush1.bf16.msra.mxu0 %v428
      %452 = vmatprep.subr.bf16.mxu0 0
      %453 = vmatpush1.bf16.msra.mxu0 %v427
      %454 = vmatprep.subr.bf16.mxu0 0
      %455 = vmatpush1.bf16.msra.mxu0 %v426
      %456 = vmatprep.subr.bf16.mxu0 0
      %457 = vmatpush2.bf16.msra.mxu0 0
      %458 = vmatprep.subr.bf16.mxu0 0
      %459 = vmatpush2.bf16.msra.mxu0 0
      %460 = vmatprep.subr.bf16.mxu0 0
      %461 = vmatpush2.bf16.msra.mxu0 0
      %462 = vmatprep.subr.bf16.mxu0 0
      %463 = vmatpush2.bf16.msra.mxu0 0
      %464 = vmatprep.subr.bf16.mxu0 0
      %465 = vmatpush2.bf16.msra.mxu0 0
      %466 = vmatprep.subr.bf16.mxu0 0
      %467 = vmatpush2.bf16.msra.mxu0 0
      %468 = vmatprep.subr.bf16.mxu0 0
      %469 = vmatpush2.bf16.msra.mxu0 0
      %470 = vmatprep.subr.bf16.mxu0 0
      %471 = vmatpush2.bf16.msra.mxu0 0
      %472 = vmatprep.mubr.bf16.mxu0 0
      %473 = vmatmul.mubr.bf16.gmra.mxu0 %v435
      %v474 = vpop.f32.mrf.mxu0
      %v475 = vadd.f32 %v397, %v474
      %v476 = vpop.f32.mrf.mxu0
      %v477 = vpop.f32.mrf.mxu0
      %v478 = vadd.f32 %v400, %v477
      %v479 = vpop.f32.mrf.mxu0
      %480 = vmatprep.mubr.bf16.mxu0 0
      %481 = vmatmul.mubr.bf16.gmra.mxu0 %v438
      %v482 = vpop.f32.mrf.mxu0
      %v483 = vadd.f32 %v405, %v482
      %v484 = vpop.f32.mrf.mxu0
      %v485 = vpop.f32.mrf.mxu0
      %v486 = vpop.f32.mrf.mxu0
      %487 = vdwg.mxu0
      %v496 = vunpack.c.l.b16 %v275
      %v497 = vunpack.c.l.b16 %v276
      %v498 = vunpack.c.l.b16 %v277
      %v499 = vunpack.c.l.b16 %v278
      %v500 = vunpack.c.l.b16 %v279
      %v501 = vunpack.c.l.b16 %v280
      %v502 = vunpack.c.l.b16 %v281
      %v503 = vunpack.c.l.b16 %v282
      %v504 = vpack.c.b16 %v497, %v496
      %v505 = vpack.c.b16 %v499, %v498
      %v506 = vpack.c.b16 %v501, %v500
      %v507 = vpack.c.b16 %v503, %v502
      %v513 = vsel %vm357, %v317, 0
      %v516 = vsel %vm357, %v329, 0
      %518 = vmatprep.subr.bf16.mxu0 0
      %519 = vmatpush1.bf16.msra.mxu0 0
      %520 = vmatprep.subr.bf16.mxu0 0
      %521 = vmatpush1.bf16.msra.mxu0 0
      %522 = vmatprep.subr.bf16.mxu0 0
      %523 = vmatpush1.bf16.msra.mxu0 0
      %524 = vmatprep.subr.bf16.mxu0 0
      %525 = vmatpush1.bf16.msra.mxu0 0
      %526 = vmatprep.subr.bf16.mxu0 0
      %527 = vmatpush1.bf16.msra.mxu0 %v507
      %528 = vmatprep.subr.bf16.mxu0 0
      %529 = vmatpush1.bf16.msra.mxu0 %v506
      %530 = vmatprep.subr.bf16.mxu0 0
      %531 = vmatpush1.bf16.msra.mxu0 %v505
      %532 = vmatprep.subr.bf16.mxu0 0
      %533 = vmatpush1.bf16.msra.mxu0 %v504
      %534 = vmatprep.subr.bf16.mxu0 0
      %535 = vmatpush2.bf16.msra.mxu0 0
      %536 = vmatprep.subr.bf16.mxu0 0
      %537 = vmatpush2.bf16.msra.mxu0 0
      %538 = vmatprep.subr.bf16.mxu0 0
      %539 = vmatpush2.bf16.msra.mxu0 0
      %540 = vmatprep.subr.bf16.mxu0 0
      %541 = vmatpush2.bf16.msra.mxu0 0
      %542 = vmatprep.subr.bf16.mxu0 0
      %543 = vmatpush2.bf16.msra.mxu0 0
      %544 = vmatprep.subr.bf16.mxu0 0
      %545 = vmatpush2.bf16.msra.mxu0 0
      %546 = vmatprep.subr.bf16.mxu0 0
      %547 = vmatpush2.bf16.msra.mxu0 0
      %548 = vmatprep.subr.bf16.mxu0 0
      %549 = vmatpush2.bf16.msra.mxu0 0
      %550 = vmatprep.mubr.bf16.mxu0 0
      %551 = vmatmul.mubr.bf16.gmra.mxu0 %v513
      %v552 = vpop.f32.mrf.mxu0
      %v553 = vadd.f32 0.0, %v552
      %v554 = vpop.f32.mrf.mxu0
      %v555 = vpop.f32.mrf.mxu0
      %v556 = vadd.f32 0.0, %v555
      %v557 = vpop.f32.mrf.mxu0
      %558 = vmatprep.mubr.bf16.mxu0 0
      %559 = vmatmul.mubr.bf16.gmra.mxu0 %v516
      %v560 = vpop.f32.mrf.mxu0
      %v561 = vadd.f32 0.0, %v560
      %v562 = vpop.f32.mrf.mxu0
      %v563 = vpop.f32.mrf.mxu0
      %v564 = vpop.f32.mrf.mxu0
      %565 = vdwg.mxu0
      %v566 = vadd.f32 %v475, %v553
      %v567 = vadd.f32 %v478, %v556
      %v568 = vadd.f32 %v483, %v561
      %v569 = vadd.f32 %v330, %v566
      %v570 = vadd.f32 %v331, %v567
      %v571 = vadd.f32 %v332, %v568
      %572 = vst.msk [vmem:[#allocation2] sm:$0xff] %vm357, %v569
      %573 = vst.msk [vmem:[#allocation2 + $0x8] sm:$0xff] %vm357, %v570
      %574 = vst.msk [vmem:[#allocation2 + $0x10] sm:$0xff] %vm357, %v571
      %p575 = scmp.eq.s32.totalorder %s20, 2
      // Predicated region
      $region41: #{ifblock_forward.14} parent=35 // pred_check
        %p576 = pneg %p575
      $region42: #{ifblock_forward.14} parent=35 // pred_check_branch
        %578 = sbr.rel (%p576) target = $region44
      $region43: #{ifblock_forward.14} parent=35 // pred_region
        %v579 = vld [vmem:[#allocation2] sm:$0xff]
        %v580 = vld [vmem:[#allocation2 + $0x8] sm:$0xff]
        %v581 = vld [vmem:[#allocation2 + $0x10] sm:$0xff]
        %v582 = vld [vmem:[%s2] sm:$0x1]
        %v584 = vlaneseq
        %v585 = vshrl.u32 %v584, 7
        %v586 = vsub.s32 0, %v585
        %v587 = vrot.slane %v582, %v586
        %v589 = vadd.f32 %v579, %v587
        %v590 = vadd.f32 %v580, %v587
        %v591 = vadd.f32 %v581, %v587
        %vm592 = vcmp.ge.f32.partialorder %v589, 0.0
        %vm593 = vcmp.ge.f32.partialorder %v590, 0.0
        %vm594 = vcmp.ge.f32.partialorder %v591, 0.0
        %v595 = vld [vmem:[%s3] sm:$0x1]
        %v597 = vlaneseq
        %v598 = vshrl.u32 %v597, 7
        %v599 = vsub.s32 0, %v598
        %v600 = vrot.slane %v595, %v599
        %v602 = vmul.f32 %v600, %v589
        %v603 = vmul.f32 %v600, %v590
        %v604 = vmul.f32 %v600, %v591
        %v605 = vsel %vm592, %v589, %v602
        %v606 = vsel %vm593, %v590, %v603
        %v607 = vsel %vm594, %v591, %v604
        %v608 = vpack.c.bf16 %v606, %v605
        %v609 = vpack.c.bf16 %v607, %v607
        %v612 = vunpack.c.l.b16 %v608
        %v613 = vunpack.c.h.b16 %v608
        %v614 = vunpack.c.l.b16 %v609
        %v615 = vpack.c.b16 %v612, %v612
        %v616 = vpack.c.b16 %v613, %v613
        %v617 = vpack.c.b16 %v614, %v614
        %vm621 = vcmask 519168
        %622 = vst.msk [vmem:[%s245] sm:$0xf] %vm621, %v615
        %623 = vst.msk [vmem:[%s245 + $0x4] sm:$0xf] %vm621, %v616
        %624 = vst.msk [vmem:[%s245 + $0x8] sm:$0xf] %vm621, %v617
      $region44: #{ifblock_forward.14} parent=35 // pred_fallthru
        _
      %s625 = smul.u32 3, %s19
      %p626 = scmp.lt.s32.totalorder %s625, 5
      %s627 = scalar_select %p626, %s625, 5
      %s628 = smul.addr %s627, 4
      %s629 = scalar_lea.vmem %s4, %s628
      // Predicated region
      $region45: #{ifblock_forward.14} parent=35 // pred_check
        %p630 = pneg %p141
      $region46: #{ifblock_forward.14} parent=35 // pred_check_branch
        %632 = sbr.rel (%p630) target = $region48
      $region47: #{ifblock_forward.14} parent=35 // pred_region
        %s633 = smul.u32 3, %s19
      $region48: #{ifblock_forward.14} parent=35 // pred_fallthru
        _
    $region36: #{ifblock_forward.14} parent=5 // pred_fallthru
      _
    %p634 = scmp.le.s32.totalorder 2, %s10
    // Predicated region
    $region49: #{ifblock_forward.14} parent=5 // pred_check
      %p635 = pneg %p634
    $region50: #{ifblock_forward.14} parent=5 // pred_check_branch
      %637 = sbr.rel (%p635) target = $region52
    $region51: #{ifblock_forward.14} parent=5 // pred_region
      %s638 = ssub.s32 %s10, 2
      // Predicated region
      $region53: #{ifblock_forward.14} parent=51 // pred_check
        %p639 = pneg %p147
      $region54: #{ifblock_forward.14} parent=51 // pred_check_branch
        %641 = sbr.rel (%p639) target = $region56
      $region55: #{ifblock_forward.14} parent=51 // pred_region
        %s642 = smul.u32 3, %s21
        %p643 = scmp.lt.s32.totalorder %s642, 5
        %s644 = scalar_select %p643, %s642, 5
        %s645 = smul.addr %s644, 4
        %s646 = scalar_lea.vmem %s4, %s645
      $region56: #{ifblock_forward.14} parent=51 // pred_fallthru
        _
    $region52: #{ifblock_forward.14} parent=5 // pred_fallthru
      _
  $region6: #{ifblock_forward.14} parent=0 // loop_footer
    %s14 = sadd.s32 1, %s10
  $region7: #{ifblock_forward.14} parent=0 // loop_footer_branch
    %9 = sbr.rel target = $region3
  $region8: #{ifblock_forward.14} parent=0 // loop_exit
    _

// kernel: ifblock_forward.15
$region0: #{ifblock_forward.15}
  #allocation0 [shape = 'u32[]', space=smem, size = 0x4, offset = 0x4, fixed_abs, tag = 'smem constant byte address 0x4 - core index']
  #allocation1 [shape = 'u32[144,128]{1,0:T(1,128)}', space=vmem, size = 0x12000, scoped, tag = 'internal scratch']
  #allocation2 [shape = 'f32[24,64]{1,0:T(8,128)}', space=vmem, size = 0x3000, scoped, tag = 'scratch operand']
  %s0 = inlined_call_operand.vmem [shape: bf16[3,48,64], index: 0, kind: input, shape index: {}]
  %s1 = inlined_call_operand.vmem [shape: bf16[3,192,64], index: 1, kind: input, shape index: {}]
  %s2 = inlined_call_operand.vmem [shape: f32[1,64], index: 2, kind: input, shape index: {}]
  %s3 = inlined_call_operand.vmem [shape: f32[1,64], index: 3, kind: input, shape index: {}]
  %s4 = inlined_call_operand.vmem [shape: bf16[48,64], index: 4, kind: input, shape index: {}]
  %s5 = inlined_call_operand.vmem [shape: bf16[48,64], index: 5, kind: output, shape index: {}]
  %s6 = sld [smem:[#allocation0]]
  $region61: #{ifblock_forward.15} parent=0
    _
  %s8 = ssub.s32 1, %s6
  %s9 = scalar_select 0, %s8, %s6
  loop: start=0, step=1, limit=8
  $region2: #{ifblock_forward.15} parent=0 // loop_pre_header
    _
  $region3: #{ifblock_forward.15} parent=0 // loop_header
    %s11 = sphi 0, %s15
    %p12 = scmp.ge.s32.totalorder %s11, 8
    %s18 = sphi 0, %s30
    %s19 = sphi 0, %s26
    %s20 = sphi 0, %s18
    %s21 = sphi 0, %s19
    %s22 = sphi 0, %s20
    %s23 = sphi 0, %s21
    %s35 = sphi 0, %s37
    %s38 = sphi 0, %s35
    %s39 = sphi 0, %s38
    %s55 = sphi 0, %s39
    %s61 = sphi 0, %s63
    %s64 = sphi 0, %s61
    %s65 = sphi 0, %s64
    %s81 = sphi 0, %s65
    %s85 = sphi 0, %s85
    %s87 = sphi 0, %s85
    %s88 = sphi 0, %s87
    %s102 = sphi 0, %s88
    %s106 = sphi 0, %s106
    %s108 = sphi 0, %s106
    %s109 = sphi 0, %s108
    %s123 = sphi 0, %s109
    %s129 = sphi 0, %s131
    %s132 = sphi 0, %s129
    %s133 = sphi 0, %s132
    %s149 = sphi 0, %s133
    %s155 = sphi 0, %s157
    %s158 = sphi 0, %s155
    %s159 = sphi 0, %s158
    %s175 = sphi 0, %s159
  $region4: #{ifblock_forward.15} parent=0 // loop_header_branch
    %14 = sbr.rel (%p12) target = $region8
  $region5: #{ifblock_forward.15} parent=0 // loop_body
    %s16 = ssub.s32 %s11, 1
    %s17 = ssub.s32 %s11, 2
    %s24 = sadd.s32 1, %s19
    %p25 = scmp.ge.s32.totalorder %s24, 3
    %s26 = scalar_select %p25, 0, %s24
    %s27 = sadd.s32 1, %s18
    %s28 = scalar_select %p25, %s27, %s18
    %p29 = scmp.ge.s32.totalorder %s28, 2
    %s30 = scalar_select %p29, 0, %s28
    %s31 = ssub.s32 %s19, %s26
    %s32 = ssub.s32 %s18, %s30
    %s33 = sor.u32 %s31, %s32
    %p34 = scmp.eq.s32.totalorder %s33, 0
    %s36 = sadd.s32 %s35, 1
    %s37 = scalar_select %p34, %s35, %s36
    %p40 = pneg %p34
    %p41 = scmp.eq.s32.totalorder %s11, 5
    %p42 = por %p40, %p41
    %p43 = scmp.ne.s32.totalorder %s35, %s38
    %p44 = scmp.eq.s32.totalorder %s11, 0
    %p45 = por %p43, %p44
    %p46 = scmp.ne.s32.totalorder %s35, %s38
    %p47 = scmp.eq.s32.totalorder %s16, 5
    %p48 = por %p46, %p47
    %p49 = scmp.ne.s32.totalorder %s38, %s39
    %p50 = scmp.eq.s32.totalorder %s16, 0
    %p51 = por %p49, %p50
    %p52 = scmp.ne.s32.totalorder %s38, %s39
    %p53 = scmp.eq.s32.totalorder %s17, 5
    %p54 = por %p52, %p53
    %p56 = scmp.ne.s32.totalorder %s39, %s55
    %p57 = scmp.eq.s32.totalorder %s17, 0
    %p58 = por %p56, %p57
    %s59 = ssub.s32 %s19, %s26
    %p60 = scmp.eq.s32.totalorder %s59, 0
    %s62 = sadd.s32 %s61, 1
    %s63 = scalar_select %p60, %s61, %s62
    %p66 = pneg %p60
    %p67 = scmp.eq.s32.totalorder %s11, 5
    %p68 = por %p66, %p67
    %p69 = scmp.ne.s32.totalorder %s61, %s64
    %p70 = scmp.eq.s32.totalorder %s11, 0
    %p71 = por %p69, %p70
    %p72 = scmp.ne.s32.totalorder %s61, %s64
    %p73 = scmp.eq.s32.totalorder %s16, 5
    %p74 = por %p72, %p73
    %p75 = scmp.ne.s32.totalorder %s64, %s65
    %p76 = scmp.eq.s32.totalorder %s16, 0
    %p77 = por %p75, %p76
    %p78 = scmp.ne.s32.totalorder %s64, %s65
    %p79 = scmp.eq.s32.totalorder %s17, 5
    %p80 = por %p78, %p79
    %p82 = scmp.ne.s32.totalorder %s65, %s81
    %p83 = scmp.eq.s32.totalorder %s17, 0
    %p84 = por %p82, %p83
    %s86 = sadd.s32 %s85, 1
    %p89 = scmp.eq.s32.totalorder %s11, 5
    %p90 = scmp.ne.s32.totalorder %s85, %s87
    %p91 = scmp.eq.s32.totalorder %s11, 0
    %p92 = por %p90, %p91
    %p93 = scmp.ne.s32.totalorder %s85, %s87
    %p94 = scmp.eq.s32.totalorder %s16, 5
    %p95 = por %p93, %p94
    %p96 = scmp.ne.s32.totalorder %s87, %s88
    %p97 = scmp.eq.s32.totalorder %s16, 0
    %p98 = por %p96, %p97
    %p99 = scmp.ne.s32.totalorder %s87, %s88
    %p100 = scmp.eq.s32.totalorder %s17, 5
    %p101 = por %p99, %p100
    %p103 = scmp.ne.s32.totalorder %s88, %s102
    %p104 = scmp.eq.s32.totalorder %s17, 0
    %p105 = por %p103, %p104
    %s107 = sadd.s32 %s106, 1
    %p110 = scmp.eq.s32.totalorder %s11, 5
    %p111 = scmp.ne.s32.totalorder %s106, %s108
    %p112 = scmp.eq.s32.totalorder %s11, 0
    %p113 = por %p111, %p112
    %p114 = scmp.ne.s32.totalorder %s106, %s108
    %p115 = scmp.eq.s32.totalorder %s16, 5
    %p116 = por %p114, %p115
    %p117 = scmp.ne.s32.totalorder %s108, %s109
    %p118 = scmp.eq.s32.totalorder %s16, 0
    %p119 = por %p117, %p118
    %p120 = scmp.ne.s32.totalorder %s108, %s109
    %p121 = scmp.eq.s32.totalorder %s17, 5
    %p122 = por %p120, %p121
    %p124 = scmp.ne.s32.totalorder %s109, %s123
    %p125 = scmp.eq.s32.totalorder %s17, 0
    %p126 = por %p124, %p125
    %s127 = ssub.s32 %s18, %s30
    %p128 = scmp.eq.s32.totalorder %s127, 0
    %s130 = sadd.s32 %s129, 1
    %s131 = scalar_select %p128, %s129, %s130
    %p134 = pneg %p128
    %p135 = scmp.eq.s32.totalorder %s11, 5
    %p136 = por %p134, %p135
    %p137 = scmp.ne.s32.totalorder %s129, %s132
    %p138 = scmp.eq.s32.totalorder %s11, 0
    %p139 = por %p137, %p138
    %p140 = scmp.ne.s32.totalorder %s129, %s132
    %p141 = scmp.eq.s32.totalorder %s16, 5
    %p142 = por %p140, %p141
    %p143 = scmp.ne.s32.totalorder %s132, %s133
    %p144 = scmp.eq.s32.totalorder %s16, 0
    %p145 = por %p143, %p144
    %p146 = scmp.ne.s32.totalorder %s132, %s133
    %p147 = scmp.eq.s32.totalorder %s17, 5
    %p148 = por %p146, %p147
    %p150 = scmp.ne.s32.totalorder %s133, %s149
    %p151 = scmp.eq.s32.totalorder %s17, 0
    %p152 = por %p150, %p151
    %s153 = ssub.s32 %s18, %s30
    %p154 = scmp.eq.s32.totalorder %s153, 0
    %s156 = sadd.s32 %s155, 1
    %s157 = scalar_select %p154, %s155, %s156
    %p160 = pneg %p154
    %p161 = scmp.eq.s32.totalorder %s11, 5
    %p162 = por %p160, %p161
    %p163 = scmp.ne.s32.totalorder %s155, %s158
    %p164 = scmp.eq.s32.totalorder %s11, 0
    %p165 = por %p163, %p164
    %p166 = scmp.ne.s32.totalorder %s155, %s158
    %p167 = scmp.eq.s32.totalorder %s16, 5
    %p168 = por %p166, %p167
    %p169 = scmp.ne.s32.totalorder %s158, %s159
    %p170 = scmp.eq.s32.totalorder %s16, 0
    %p171 = por %p169, %p170
    %p172 = scmp.ne.s32.totalorder %s158, %s159
    %p173 = scmp.eq.s32.totalorder %s17, 5
    %p174 = por %p172, %p173
    %p176 = scmp.ne.s32.totalorder %s159, %s175
    %p177 = scmp.eq.s32.totalorder %s17, 0
    %p178 = por %p176, %p177
    %p179 = scmp.le.s32.totalorder 1, %s11
    %p180 = scmp.lt.s32.totalorder %s11, 7
    %p181 = pnand %p179, %p180
    %p182 = pneg %p181
    // Predicated region
    $region9: #{ifblock_forward.15} parent=5 // pred_check
      _
    $region10: #{ifblock_forward.15} parent=5 // pred_check_branch
      %184 = sbr.rel (%p181) target = $region12
    $region11: #{ifblock_forward.15} parent=5 // pred_region
      %s185 = ssub.s32 %s11, 1
      // Predicated region
      $region13: #{ifblock_forward.15} parent=11 // pred_check
        %p186 = pneg %p98
      $region14: #{ifblock_forward.15} parent=11 // pred_check_branch
        %188 = sbr.rel (%p186) target = $region16
      $region15: #{ifblock_forward.15} parent=11 // pred_region
        _
      $region16: #{ifblock_forward.15} parent=11 // pred_fallthru
        _
      // Predicated region
      $region17: #{ifblock_forward.15} parent=11 // pred_check
        %p189 = pneg %p119
      $region18: #{ifblock_forward.15} parent=11 // pred_check_branch
        %191 = sbr.rel (%p189) target = $region20
      $region19: #{ifblock_forward.15} parent=11 // pred_region
        _
      $region20: #{ifblock_forward.15} parent=11 // pred_fallthru
        _
    $region12: #{ifblock_forward.15} parent=5 // pred_fallthru
      _
    %p192 = scmp.lt.s32.totalorder %s11, 6
    // Predicated region
    $region21: #{ifblock_forward.15} parent=5 // pred_check
      %p193 = pneg %p192
    $region22: #{ifblock_forward.15} parent=5 // pred_check_branch
      %195 = sbr.rel (%p193) target = $region24
    $region23: #{ifblock_forward.15} parent=5 // pred_region
      // Predicated region
      $region25: #{ifblock_forward.15} parent=23 // pred_check
        %p196 = pneg %p45
      $region26: #{ifblock_forward.15} parent=23 // pred_check_branch
        %198 = sbr.rel (%p196) target = $region28
      $region27: #{ifblock_forward.15} parent=23 // pred_region
        %s199 = smul.u32 3, %s18
        %p200 = scmp.lt.s32.totalorder %s19, 2
        %s201 = scalar_select %p200, %s19, 2
        %p202 = scmp.lt.s32.totalorder %s199, 5
        %s203 = scalar_select %p202, %s199, 5
        %s204 = smul.addr %s201, 6
        %s205 = sadd.s32 %s203, %s204
        %s206 = smul.addr %s205, 4
        %s207 = scalar_lea.vmem %s0, %s206
        %s208 = smul.u32 3, %s18
      $region28: #{ifblock_forward.15} parent=23 // pred_fallthru
        _
      // Predicated region
      $region29: #{ifblock_forward.15} parent=23 // pred_check
        %p209 = pneg %p71
      $region30: #{ifblock_forward.15} parent=23 // pred_check_branch
        %211 = sbr.rel (%p209) target = $region32
      $region31: #{ifblock_forward.15} parent=23 // pred_region
        %p212 = scmp.lt.s32.totalorder %s19, 2
        %s213 = scalar_select %p212, %s19, 2
        %s214 = smul.addr %s213, 24
        %s215 = smul.addr %s214, 4
        %s216 = scalar_lea.vmem %s1, %s215
      $region32: #{ifblock_forward.15} parent=23 // pred_fallthru
        _
      // Predicated region
      $region33: #{ifblock_forward.15} parent=23 // pred_check
        %p217 = pneg %p139
      $region34: #{ifblock_forward.15} parent=23 // pred_check_branch
        %219 = sbr.rel (%p217) target = $region36
      $region35: #{ifblock_forward.15} parent=23 // pred_region
        %s220 = smul.u32 3, %s18
        %p221 = scmp.lt.s32.totalorder %s220, 5
        %s222 = scalar_select %p221, %s220, 5
        %s223 = smul.addr %s222, 4
        %s224 = scalar_lea.vmem %s4, %s223
        %s225 = smul.u32 3, %s18
      $region36: #{ifblock_forward.15} parent=23 // pred_fallthru
        _
    $region24: #{ifblock_forward.15} parent=5 // pred_fallthru
      _
    %p226 = scmp.le.s32.totalorder 1, %s11
    %p227 = scmp.lt.s32.totalorder %s11, 7
    %p228 = pnand %p226, %p227
    %p229 = pneg %p228
    // Predicated region
    $region37: #{ifblock_forward.15} parent=5 // pred_check
      _
    $region38: #{ifblock_forward.15} parent=5 // pred_check_branch
      %231 = sbr.rel (%p228) target = $region40
    $region39: #{ifblock_forward.15} parent=5 // pred_region
      %s232 = ssub.s32 %s11, 1
      %s233 = smul.u32 3, %s20
      %p234 = scmp.lt.s32.totalorder %s21, 2
      %s235 = scalar_select %p234, %s21, 2
      %p236 = scmp.lt.s32.totalorder %s233, 5
      %s237 = scalar_select %p236, %s233, 5
      %s238 = smul.addr %s235, 6
      %s239 = sadd.s32 %s237, %s238
      %s240 = smul.addr %s239, 4
      %s241 = scalar_lea.vmem %s0, %s240
      %p242 = pneg %p51
      %p243 = pneg %p48
      %p244 = scmp.lt.s32.totalorder %s21, 2
      %s245 = scalar_select %p244, %s21, 2
      %s246 = smul.addr %s245, 24
      %s247 = smul.addr %s246, 4
      %s248 = scalar_lea.vmem %s1, %s247
      %p249 = pneg %p77
      %p250 = pneg %p74
      %p251 = pneg %p98
      %p252 = pneg %p95
      %p253 = pneg %p119
      %p254 = pneg %p116
      %s255 = smul.u32 3, %s20
      %p256 = scmp.lt.s32.totalorder %s255, 5
      %s257 = scalar_select %p256, %s255, 5
      %s258 = smul.addr %s257, 4
      %s259 = scalar_lea.vmem %s4, %s258
      %p260 = pneg %p145
      %p261 = pneg %p142
      %p262 = pneg %p171
      %p263 = pneg %p168
      %s264 = smul.u32 3, %s20
      %p265 = scmp.lt.s32.totalorder %s264, 5
      %s266 = scalar_select %p265, %s264, 5
      %s267 = smul.addr %s266, 4
      %s268 = scalar_lea.vmem %s5, %s267
      %s269 = smul.u32 3, %s20
      %p270 = scmp.lt.s32.totalorder %s21, 2
      %s271 = scalar_select %p270, %s21, 2
      %p272 = scmp.lt.s32.totalorder %s269, 5
      %s273 = scalar_select %p272, %s269, 5
      %s274 = smul.addr %s271, 6
      %s275 = sadd.s32 %s273, %s274
      %s276 = smul.addr %s275, 4
      %s277 = scalar_lea.vmem %s0, %s276
      %s278 = smul.u32 3, %s20
      %p279 = scmp.lt.s32.totalorder %s21, 2
      %s280 = scalar_select %p279, %s21, 2
      %s281 = smul.addr %s280, 24
      %s282 = smul.addr %s281, 4
      %s283 = scalar_lea.vmem %s1, %s282
      %s284 = smul.u32 3, %s20
      %p285 = scmp.lt.s32.totalorder %s284, 5
      %s286 = scalar_select %p285, %s284, 5
      %s287 = smul.addr %s286, 4
      %s288 = scalar_lea.vmem %s4, %s287
      %s289 = smul.u32 3, %s20
      %s290 = smul.u32 3, %s20
      %p291 = scmp.lt.s32.totalorder %s290, 5
      %s292 = scalar_select %p291, %s290, 5
      %s293 = smul.addr %s292, 4
      %s294 = scalar_lea.vmem %s5, %s293
      %s295 = smul.u32 3, %s20
      %p297 = scmp.eq.s32.totalorder %s21, 0
      // Predicated region
      $region41: #{ifblock_forward.15} parent=39 // pred_check
        %p298 = pneg %p297
      $region42: #{ifblock_forward.15} parent=39 // pred_check_branch
        %300 = sbr.rel (%p298) target = $region44
      $region43: #{ifblock_forward.15} parent=39 // pred_region
        %vm301 = vcmask 523264
        %302 = vst.msk [vmem:[#allocation2] sm:$0xff] %vm301, 0.0
        %303 = vst.msk [vmem:[#allocation2 + $0x8] sm:$0xff] %vm301, 0.0
        %304 = vst.msk [vmem:[#allocation2 + $0x10] sm:$0xff] %vm301, 0.0
      $region44: #{ifblock_forward.15} parent=39 // pred_fallthru
        _
      %v305 = vld [vmem:[%s277] sm:$0xf]
      %v306 = vld [vmem:[%s277 + $0x4] sm:$0xf]
      %v307 = vld [vmem:[%s277 + $0x8] sm:$0xf]
      %v308 = vld [vmem:[%s283] sm:$0xf]
      %v309 = vld [vmem:[%s283 + $0x4] sm:$0xf]
      %v310 = vld [vmem:[%s283 + $0x8] sm:$0xf]
      %v311 = vld [vmem:[%s283 + $0xc] sm:$0xf]
      %v312 = vld [vmem:[%s283 + $0x10] sm:$0xf]
      %v313 = vld [vmem:[%s283 + $0x14] sm:$0xf]
      %v314 = vld [vmem:[%s283 + $0x18] sm:$0xf]
      %v315 = vld [vmem:[%s283 + $0x1c] sm:$0xf]
      %v316 = vld [vmem:[%s283 + $0x20] sm:$0xf]
      %v317 = vld [vmem:[%s283 + $0x24] sm:$0xf]
      %v318 = vld [vmem:[%s283 + $0x28] sm:$0xf]
      %v319 = vld [vmem:[%s283 + $0x2c] sm:$0xf]
      %v320 = vld [vmem:[%s283 + $0x30] sm:$0xf]
      %v321 = vld [vmem:[%s283 + $0x34] sm:$0xf]
      %v322 = vld [vmem:[%s283 + $0x38] sm:$0xf]
      %v323 = vld [vmem:[%s283 + $0x3c] sm:$0xf]
      %v324 = vld [vmem:[%s283 + $0x40] sm:$0xf]
      %v325 = vld [vmem:[%s283 + $0x44] sm:$0xf]
      %v326 = vld [vmem:[%s283 + $0x48] sm:$0xf]
      %v327 = vld [vmem:[%s283 + $0x4c] sm:$0xf]
      %v328 = vld [vmem:[%s283 + $0x50] sm:$0xf]
      %v329 = vld [vmem:[%s283 + $0x54] sm:$0xf]
      %v330 = vld [vmem:[%s283 + $0x58] sm:$0xf]
      %v331 = vld [vmem:[%s283 + $0x5c] sm:$0xf]
      %v333 = vunpack.c.l.b16 %v307
      %v334 = vpack.c.b16 %v333, %v333
      %v336 = vshrl.u32 %v334, 16
      %v338 = vrot.slane %v336, 3
      %v342 = vunpack.c.l.b16 %v305
      %v343 = vunpack.c.l.b16 %v306
      %v344 = vpack.c.b16 %v343, %v342
      %vm345 = vsmask.f32 256
      %v347 = vshrl.u32 %v344, 16
      %v349 = vrot.slane %v347, 7
      %v350 = vshll.u32 %v344, 16
      %v352 = vor.u32 %v349, %v350
      %v353 = vrot.slane %v336, 7
      %v354 = vshll.u32 %v334, 16
      %v356 = vor.u32 %v353, %v354
      %v357 = vsel %vm345, %v349, %v356
      %vm359 = vcmask 1040384
      %vm360 = vmand %vm359, %vm345
      %v361 = vsel %vm360, %v338, %v352
      %vm362 = vsmask.f32 7424
      %v363 = vrot.slane %v350, 1
      %v364 = vor.u32 %v347, %v363
      %v365 = vrot.slane %v354, 1
      %v366 = vsel %vm362, %v364, %v365
      %v367 = vor.u32 %v336, %v365
      %v369 = vpack.c.b16 %v342, %v342
      %v371 = vshll.u32 %v369, 16
      %v373 = vrot.slane %v371, 5
      %vm375 = vcmask 1043456
      %vm376 = vsmask.f32 3328
      %vm377 = vmand %vm375, %vm376
      %v378 = vsel %vm377, %v367, %v373
      %v379 = vld [vmem:[#allocation2] sm:$0xff]
      %v380 = vld [vmem:[#allocation2 + $0x8] sm:$0xff]
      %v381 = vld [vmem:[#allocation2 + $0x10] sm:$0xff]
      %v390 = vunpack.c.l.b16 %v316
      %v391 = vunpack.c.l.b16 %v317
      %v392 = vunpack.c.l.b16 %v318
      %v393 = vunpack.c.l.b16 %v319
      %v394 = vunpack.c.l.b16 %v320
      %v395 = vunpack.c.l.b16 %v321
      %v396 = vunpack.c.l.b16 %v322
      %v397 = vunpack.c.l.b16 %v323
      %v398 = vpack.c.b16 %v391, %v390
      %v399 = vpack.c.b16 %v393, %v392
      %v400 = vpack.c.b16 %v395, %v394
      %v401 = vpack.c.b16 %v397, %v396
      %vm406 = vcmask 523264
      %v407 = vsel %vm406, %v344, 0
      %v409 = vsel %vm406, %v334, 0
      %411 = vmatprep.subr.bf16.mxu0 0
      %412 = vmatpush1.bf16.msra.mxu0 0
      %413 = vmatprep.subr.bf16.mxu0 0
      %414 = vmatpush1.bf16.msra.mxu0 0
      %415 = vmatprep.subr.bf16.mxu0 0
      %416 = vmatpush1.bf16.msra.mxu0 0
      %417 = vmatprep.subr.bf16.mxu0 0
      %418 = vmatpush1.bf16.msra.mxu0 0
      %419 = vmatprep.subr.bf16.mxu0 0
      %420 = vmatpush1.bf16.msra.mxu0 %v401
      %421 = vmatprep.subr.bf16.mxu0 0
      %422 = vmatpush1.bf16.msra.mxu0 %v400
      %423 = vmatprep.subr.bf16.mxu0 0
      %424 = vmatpush1.bf16.msra.mxu0 %v399
      %425 = vmatprep.subr.bf16.mxu0 0
      %426 = vmatpush1.bf16.msra.mxu0 %v398
      %427 = vmatprep.subr.bf16.mxu0 0
      %428 = vmatpush2.bf16.msra.mxu0 0
      %429 = vmatprep.subr.bf16.mxu0 0
      %430 = vmatpush2.bf16.msra.mxu0 0
      %431 = vmatprep.subr.bf16.mxu0 0
      %432 = vmatpush2.bf16.msra.mxu0 0
      %433 = vmatprep.subr.bf16.mxu0 0
      %434 = vmatpush2.bf16.msra.mxu0 0
      %435 = vmatprep.subr.bf16.mxu0 0
      %436 = vmatpush2.bf16.msra.mxu0 0
      %437 = vmatprep.subr.bf16.mxu0 0
      %438 = vmatpush2.bf16.msra.mxu0 0
      %439 = vmatprep.subr.bf16.mxu0 0
      %440 = vmatpush2.bf16.msra.mxu0 0
      %441 = vmatprep.subr.bf16.mxu0 0
      %442 = vmatpush2.bf16.msra.mxu0 0
      %443 = vmatprep.mubr.bf16.mxu0 0
      %444 = vmatmul.mubr.bf16.gmra.mxu0 %v407
      %v445 = vpop.f32.mrf.mxu0
      %v446 = vadd.f32 0.0, %v445
      %v447 = vpop.f32.mrf.mxu0
      %v448 = vpop.f32.mrf.mxu0
      %v449 = vadd.f32 0.0, %v448
      %v450 = vpop.f32.mrf.mxu0
      %451 = vmatprep.mubr.bf16.mxu0 0
      %452 = vmatmul.mubr.bf16.gmra.mxu0 %v409
      %v453 = vpop.f32.mrf.mxu0
      %v454 = vadd.f32 0.0, %v453
      %v455 = vpop.f32.mrf.mxu0
      %v456 = vpop.f32.mrf.mxu0
      %v457 = vpop.f32.mrf.mxu0
      %458 = vdwg.mxu0
      %v467 = vunpack.c.l.b16 %v308
      %v468 = vunpack.c.l.b16 %v309
      %v469 = vunpack.c.l.b16 %v310
      %v470 = vunpack.c.l.b16 %v311
      %v471 = vunpack.c.l.b16 %v312
      %v472 = vunpack.c.l.b16 %v313
      %v473 = vunpack.c.l.b16 %v314
      %v474 = vunpack.c.l.b16 %v315
      %v475 = vpack.c.b16 %v468, %v467
      %v476 = vpack.c.b16 %v470, %v469
      %v477 = vpack.c.b16 %v472, %v471
      %v478 = vpack.c.b16 %v474, %v473
      %v484 = vsel %vm406, %v361, 0
      %v487 = vsel %vm406, %v357, 0
      %489 = vmatprep.subr.bf16.mxu0 0
      %490 = vmatpush1.bf16.msra.mxu0 0
      %491 = vmatprep.subr.bf16.mxu0 0
      %492 = vmatpush1.bf16.msra.mxu0 0
      %493 = vmatprep.subr.bf16.mxu0 0
      %494 = vmatpush1.bf16.msra.mxu0 0
      %495 = vmatprep.subr.bf16.mxu0 0
      %496 = vmatpush1.bf16.msra.mxu0 0
      %497 = vmatprep.subr.bf16.mxu0 0
      %498 = vmatpush1.bf16.msra.mxu0 %v478
      %499 = vmatprep.subr.bf16.mxu0 0
      %500 = vmatpush1.bf16.msra.mxu0 %v477
      %501 = vmatprep.subr.bf16.mxu0 0
      %502 = vmatpush1.bf16.msra.mxu0 %v476
      %503 = vmatprep.subr.bf16.mxu0 0
      %504 = vmatpush1.bf16.msra.mxu0 %v475
      %505 = vmatprep.subr.bf16.mxu0 0
      %506 = vmatpush2.bf16.msra.mxu0 0
      %507 = vmatprep.subr.bf16.mxu0 0
      %508 = vmatpush2.bf16.msra.mxu0 0
      %509 = vmatprep.subr.bf16.mxu0 0
      %510 = vmatpush2.bf16.msra.mxu0 0
      %511 = vmatprep.subr.bf16.mxu0 0
      %512 = vmatpush2.bf16.msra.mxu0 0
      %513 = vmatprep.subr.bf16.mxu0 0
      %514 = vmatpush2.bf16.msra.mxu0 0
      %515 = vmatprep.subr.bf16.mxu0 0
      %516 = vmatpush2.bf16.msra.mxu0 0
      %517 = vmatprep.subr.bf16.mxu0 0
      %518 = vmatpush2.bf16.msra.mxu0 0
      %519 = vmatprep.subr.bf16.mxu0 0
      %520 = vmatpush2.bf16.msra.mxu0 0
      %521 = vmatprep.mubr.bf16.mxu0 0
      %522 = vmatmul.mubr.bf16.gmra.mxu0 %v484
      %v523 = vpop.f32.mrf.mxu0
      %v524 = vadd.f32 %v446, %v523
      %v525 = vpop.f32.mrf.mxu0
      %v526 = vpop.f32.mrf.mxu0
      %v527 = vadd.f32 %v449, %v526
      %v528 = vpop.f32.mrf.mxu0
      %529 = vmatprep.mubr.bf16.mxu0 0
      %530 = vmatmul.mubr.bf16.gmra.mxu0 %v487
      %v531 = vpop.f32.mrf.mxu0
      %v532 = vadd.f32 %v454, %v531
      %v533 = vpop.f32.mrf.mxu0
      %v534 = vpop.f32.mrf.mxu0
      %v535 = vpop.f32.mrf.mxu0
      %536 = vdwg.mxu0
      %v545 = vunpack.c.l.b16 %v324
      %v546 = vunpack.c.l.b16 %v325
      %v547 = vunpack.c.l.b16 %v326
      %v548 = vunpack.c.l.b16 %v327
      %v549 = vunpack.c.l.b16 %v328
      %v550 = vunpack.c.l.b16 %v329
      %v551 = vunpack.c.l.b16 %v330
      %v552 = vunpack.c.l.b16 %v331
      %v553 = vpack.c.b16 %v546, %v545
      %v554 = vpack.c.b16 %v548, %v547
      %v555 = vpack.c.b16 %v550, %v549
      %v556 = vpack.c.b16 %v552, %v551
      %v562 = vsel %vm406, %v366, 0
      %v565 = vsel %vm406, %v378, 0
      %567 = vmatprep.subr.bf16.mxu0 0
      %568 = vmatpush1.bf16.msra.mxu0 0
      %569 = vmatprep.subr.bf16.mxu0 0
      %570 = vmatpush1.bf16.msra.mxu0 0
      %571 = vmatprep.subr.bf16.mxu0 0
      %572 = vmatpush1.bf16.msra.mxu0 0
      %573 = vmatprep.subr.bf16.mxu0 0
      %574 = vmatpush1.bf16.msra.mxu0 0
      %575 = vmatprep.subr.bf16.mxu0 0
      %576 = vmatpush1.bf16.msra.mxu0 %v556
      %577 = vmatprep.subr.bf16.mxu0 0
      %578 = vmatpush1.bf16.msra.mxu0 %v555
      %579 = vmatprep.subr.bf16.mxu0 0
      %580 = vmatpush1.bf16.msra.mxu0 %v554
      %581 = vmatprep.subr.bf16.mxu0 0
      %582 = vmatpush1.bf16.msra.mxu0 %v553
      %583 = vmatprep.subr.bf16.mxu0 0
      %584 = vmatpush2.bf16.msra.mxu0 0
      %585 = vmatprep.subr.bf16.mxu0 0
      %586 = vmatpush2.bf16.msra.mxu0 0
      %587 = vmatprep.subr.bf16.mxu0 0
      %588 = vmatpush2.bf16.msra.mxu0 0
      %589 = vmatprep.subr.bf16.mxu0 0
      %590 = vmatpush2.bf16.msra.mxu0 0
      %591 = vmatprep.subr.bf16.mxu0 0
      %592 = vmatpush2.bf16.msra.mxu0 0
      %593 = vmatprep.subr.bf16.mxu0 0
      %594 = vmatpush2.bf16.msra.mxu0 0
      %595 = vmatprep.subr.bf16.mxu0 0
      %596 = vmatpush2.bf16.msra.mxu0 0
      %597 = vmatprep.subr.bf16.mxu0 0
      %598 = vmatpush2.bf16.msra.mxu0 0
      %599 = vmatprep.mubr.bf16.mxu0 0
      %600 = vmatmul.mubr.bf16.gmra.mxu0 %v562
      %v601 = vpop.f32.mrf.mxu0
      %v602 = vadd.f32 0.0, %v601
      %v603 = vpop.f32.mrf.mxu0
      %v604 = vpop.f32.mrf.mxu0
      %v605 = vadd.f32 0.0, %v604
      %v606 = vpop.f32.mrf.mxu0
      %607 = vmatprep.mubr.bf16.mxu0 0
      %608 = vmatmul.mubr.bf16.gmra.mxu0 %v565
      %v609 = vpop.f32.mrf.mxu0
      %v610 = vadd.f32 0.0, %v609
      %v611 = vpop.f32.mrf.mxu0
      %v612 = vpop.f32.mrf.mxu0
      %v613 = vpop.f32.mrf.mxu0
      %614 = vdwg.mxu0
      %v615 = vadd.f32 %v524, %v602
      %v616 = vadd.f32 %v527, %v605
      %v617 = vadd.f32 %v532, %v610
      %v618 = vadd.f32 %v379, %v615
      %v619 = vadd.f32 %v380, %v616
      %v620 = vadd.f32 %v381, %v617
      %621 = vst.msk [vmem:[#allocation2] sm:$0xff] %vm406, %v618
      %622 = vst.msk [vmem:[#allocation2 + $0x8] sm:$0xff] %vm406, %v619
      %623 = vst.msk [vmem:[#allocation2 + $0x10] sm:$0xff] %vm406, %v620
      %p624 = scmp.eq.s32.totalorder %s21, 2
      // Predicated region
      $region45: #{ifblock_forward.15} parent=39 // pred_check
        %p625 = pneg %p624
      $region46: #{ifblock_forward.15} parent=39 // pred_check_branch
        %627 = sbr.rel (%p625) target = $region48
      $region47: #{ifblock_forward.15} parent=39 // pred_region
        %v628 = vld [vmem:[#allocation2] sm:$0xff]
        %v629 = vld [vmem:[#allocation2 + $0x8] sm:$0xff]
        %v630 = vld [vmem:[#allocation2 + $0x10] sm:$0xff]
        %v631 = vld [vmem:[%s2] sm:$0x1]
        %v633 = vlaneseq
        %v634 = vshrl.u32 %v633, 7
        %v635 = vsub.s32 0, %v634
        %v636 = vrot.slane %v631, %v635
        %v638 = vadd.f32 %v628, %v636
        %v639 = vadd.f32 %v629, %v636
        %v640 = vadd.f32 %v630, %v636
        %vm641 = vcmp.ge.f32.partialorder %v638, 0.0
        %vm642 = vcmp.ge.f32.partialorder %v639, 0.0
        %vm643 = vcmp.ge.f32.partialorder %v640, 0.0
        %v644 = vld [vmem:[%s3] sm:$0x1]
        %v646 = vlaneseq
        %v647 = vshrl.u32 %v646, 7
        %v648 = vsub.s32 0, %v647
        %v649 = vrot.slane %v644, %v648
        %v651 = vmul.f32 %v649, %v638
        %v652 = vmul.f32 %v649, %v639
        %v653 = vmul.f32 %v649, %v640
        %v654 = vsel %vm641, %v638, %v651
        %v655 = vsel %vm642, %v639, %v652
        %v656 = vsel %vm643, %v640, %v653
        %v657 = vld [vmem:[%s288] sm:$0xf]
        %v658 = vld [vmem:[%s288 + $0x4] sm:$0xf]
        %v659 = vld [vmem:[%s288 + $0x8] sm:$0xf]
        %v660 = vunpack.c.l.bf16 %v657
        %v661 = vunpack.c.l.bf16 %v658
        %v662 = vunpack.c.l.bf16 %v659
        %v663 = vadd.f32 %v654, %v660
        %v664 = vadd.f32 %v655, %v661
        %v665 = vadd.f32 %v656, %v662
        %v666 = vpack.c.bf16 %v664, %v663
        %v667 = vpack.c.bf16 %v665, %v665
        %v670 = vunpack.c.l.b16 %v666
        %v671 = vunpack.c.h.b16 %v666
        %v672 = vunpack.c.l.b16 %v667
        %v673 = vpack.c.b16 %v670, %v670
        %v674 = vpack.c.b16 %v671, %v671
        %v675 = vpack.c.b16 %v672, %v672
        %vm679 = vcmask 519168
        %680 = vst.msk [vmem:[%s294] sm:$0xf] %vm679, %v673
        %681 = vst.msk [vmem:[%s294 + $0x4] sm:$0xf] %vm679, %v674
        %682 = vst.msk [vmem:[%s294 + $0x8] sm:$0xf] %vm679, %v675
      $region48: #{ifblock_forward.15} parent=39 // pred_fallthru
        _
      %s683 = smul.u32 3, %s20
      %p684 = scmp.lt.s32.totalorder %s683, 5
      %s685 = scalar_select %p684, %s683, 5
      %s686 = smul.addr %s685, 4
      %s687 = scalar_lea.vmem %s5, %s686
      // Predicated region
      $region49: #{ifblock_forward.15} parent=39 // pred_check
        %p688 = pneg %p168
      $region50: #{ifblock_forward.15} parent=39 // pred_check_branch
        %690 = sbr.rel (%p688) target = $region52
      $region51: #{ifblock_forward.15} parent=39 // pred_region
        %s691 = smul.u32 3, %s20
      $region52: #{ifblock_forward.15} parent=39 // pred_fallthru
        _
    $region40: #{ifblock_forward.15} parent=5 // pred_fallthru
      _
    %p692 = scmp.le.s32.totalorder 2, %s11
    // Predicated region
    $region53: #{ifblock_forward.15} parent=5 // pred_check
      %p693 = pneg %p692
    $region54: #{ifblock_forward.15} parent=5 // pred_check_branch
      %695 = sbr.rel (%p693) target = $region56
    $region55: #{ifblock_forward.15} parent=5 // pred_region
      %s696 = ssub.s32 %s11, 2
      // Predicated region
      $region57: #{ifblock_forward.15} parent=55 // pred_check
        %p697 = pneg %p174
      $region58: #{ifblock_forward.15} parent=55 // pred_check_branch
        %699 = sbr.rel (%p697) target = $region60
      $region59: #{ifblock_forward.15} parent=55 // pred_region
        %s700 = smul.u32 3, %s22
        %p701 = scmp.lt.s32.totalorder %s700, 5
        %s702 = scalar_select %p701, %s700, 5
        %s703 = smul.addr %s702, 4
        %s704 = scalar_lea.vmem %s5, %s703
      $region60: #{ifblock_forward.15} parent=55 // pred_fallthru
        _
    $region56: #{ifblock_forward.15} parent=5 // pred_fallthru
      _
  $region6: #{ifblock_forward.15} parent=0 // loop_footer
    %s15 = sadd.s32 1, %s11
  $region7: #{ifblock_forward.15} parent=0 // loop_footer_branch
    %10 = sbr.rel target = $region3
  $region8: #{ifblock_forward.15} parent=0 // loop_exit
    _

// kernel: ifblock_forward.22
$region0: #{ifblock_forward.22}
  #allocation0 [shape = 'u32[]', space=smem, size = 0x4, offset = 0x4, fixed_abs, tag = 'smem constant byte address 0x4 - core index']
  #allocation1 [shape = 'u32[144,128]{1,0:T(1,128)}', space=vmem, size = 0x12000, scoped, tag = 'internal scratch']
  #allocation2 [shape = 'f32[24,256]{1,0:T(8,128)}', space=vmem, size = 0x6000, scoped, tag = 'scratch operand']
  %s0 = inlined_call_operand.vmem [shape: bf16[3,48,64], index: 0, kind: input, shape index: {}]
  %s1 = inlined_call_operand.vmem [shape: bf16[3,192,256], index: 1, kind: input, shape index: {}]
  %s2 = inlined_call_operand.vmem [shape: f32[1,256], index: 2, kind: input, shape index: {}]
  %s3 = inlined_call_operand.vmem [shape: f32[1,256], index: 3, kind: input, shape index: {}]
  %s4 = inlined_call_operand.vmem [shape: bf16[48,256], index: 4, kind: output, shape index: {}]
  %s5 = sld [smem:[#allocation0]]
  $region57: #{ifblock_forward.22} parent=0
    _
  %s7 = ssub.s32 1, %s5
  %s8 = scalar_select 0, %s7, %s5
  loop: start=0, step=1, limit=8
  $region2: #{ifblock_forward.22} parent=0 // loop_pre_header
    _
  $region3: #{ifblock_forward.22} parent=0 // loop_header
    %s10 = sphi 0, %s14
    %p11 = scmp.ge.s32.totalorder %s10, 8
    %s17 = sphi 0, %s29
    %s18 = sphi 0, %s25
    %s19 = sphi 0, %s17
    %s20 = sphi 0, %s18
    %s21 = sphi 0, %s19
    %s22 = sphi 0, %s20
    %s34 = sphi 0, %s36
    %s37 = sphi 0, %s34
    %s38 = sphi 0, %s37
    %s54 = sphi 0, %s38
    %s60 = sphi 0, %s62
    %s63 = sphi 0, %s60
    %s64 = sphi 0, %s63
    %s80 = sphi 0, %s64
    %s84 = sphi 0, %s84
    %s86 = sphi 0, %s84
    %s87 = sphi 0, %s86
    %s101 = sphi 0, %s87
    %s105 = sphi 0, %s105
    %s107 = sphi 0, %s105
    %s108 = sphi 0, %s107
    %s122 = sphi 0, %s108
    %s128 = sphi 0, %s130
    %s131 = sphi 0, %s128
    %s132 = sphi 0, %s131
    %s148 = sphi 0, %s132
  $region4: #{ifblock_forward.22} parent=0 // loop_header_branch
    %13 = sbr.rel (%p11) target = $region8
  $region5: #{ifblock_forward.22} parent=0 // loop_body
    %s15 = ssub.s32 %s10, 1
    %s16 = ssub.s32 %s10, 2
    %s23 = sadd.s32 1, %s18
    %p24 = scmp.ge.s32.totalorder %s23, 3
    %s25 = scalar_select %p24, 0, %s23
    %s26 = sadd.s32 1, %s17
    %s27 = scalar_select %p24, %s26, %s17
    %p28 = scmp.ge.s32.totalorder %s27, 2
    %s29 = scalar_select %p28, 0, %s27
    %s30 = ssub.s32 %s18, %s25
    %s31 = ssub.s32 %s17, %s29
    %s32 = sor.u32 %s30, %s31
    %p33 = scmp.eq.s32.totalorder %s32, 0
    %s35 = sadd.s32 %s34, 1
    %s36 = scalar_select %p33, %s34, %s35
    %p39 = pneg %p33
    %p40 = scmp.eq.s32.totalorder %s10, 5
    %p41 = por %p39, %p40
    %p42 = scmp.ne.s32.totalorder %s34, %s37
    %p43 = scmp.eq.s32.totalorder %s10, 0
    %p44 = por %p42, %p43
    %p45 = scmp.ne.s32.totalorder %s34, %s37
    %p46 = scmp.eq.s32.totalorder %s15, 5
    %p47 = por %p45, %p46
    %p48 = scmp.ne.s32.totalorder %s37, %s38
    %p49 = scmp.eq.s32.totalorder %s15, 0
    %p50 = por %p48, %p49
    %p51 = scmp.ne.s32.totalorder %s37, %s38
    %p52 = scmp.eq.s32.totalorder %s16, 5
    %p53 = por %p51, %p52
    %p55 = scmp.ne.s32.totalorder %s38, %s54
    %p56 = scmp.eq.s32.totalorder %s16, 0
    %p57 = por %p55, %p56
    %s58 = ssub.s32 %s18, %s25
    %p59 = scmp.eq.s32.totalorder %s58, 0
    %s61 = sadd.s32 %s60, 1
    %s62 = scalar_select %p59, %s60, %s61
    %p65 = pneg %p59
    %p66 = scmp.eq.s32.totalorder %s10, 5
    %p67 = por %p65, %p66
    %p68 = scmp.ne.s32.totalorder %s60, %s63
    %p69 = scmp.eq.s32.totalorder %s10, 0
    %p70 = por %p68, %p69
    %p71 = scmp.ne.s32.totalorder %s60, %s63
    %p72 = scmp.eq.s32.totalorder %s15, 5
    %p73 = por %p71, %p72
    %p74 = scmp.ne.s32.totalorder %s63, %s64
    %p75 = scmp.eq.s32.totalorder %s15, 0
    %p76 = por %p74, %p75
    %p77 = scmp.ne.s32.totalorder %s63, %s64
    %p78 = scmp.eq.s32.totalorder %s16, 5
    %p79 = por %p77, %p78
    %p81 = scmp.ne.s32.totalorder %s64, %s80
    %p82 = scmp.eq.s32.totalorder %s16, 0
    %p83 = por %p81, %p82
    %s85 = sadd.s32 %s84, 1
    %p88 = scmp.eq.s32.totalorder %s10, 5
    %p89 = scmp.ne.s32.totalorder %s84, %s86
    %p90 = scmp.eq.s32.totalorder %s10, 0
    %p91 = por %p89, %p90
    %p92 = scmp.ne.s32.totalorder %s84, %s86
    %p93 = scmp.eq.s32.totalorder %s15, 5
    %p94 = por %p92, %p93
    %p95 = scmp.ne.s32.totalorder %s86, %s87
    %p96 = scmp.eq.s32.totalorder %s15, 0
    %p97 = por %p95, %p96
    %p98 = scmp.ne.s32.totalorder %s86, %s87
    %p99 = scmp.eq.s32.totalorder %s16, 5
    %p100 = por %p98, %p99
    %p102 = scmp.ne.s32.totalorder %s87, %s101
    %p103 = scmp.eq.s32.totalorder %s16, 0
    %p104 = por %p102, %p103
    %s106 = sadd.s32 %s105, 1
    %p109 = scmp.eq.s32.totalorder %s10, 5
    %p110 = scmp.ne.s32.totalorder %s105, %s107
    %p111 = scmp.eq.s32.totalorder %s10, 0
    %p112 = por %p110, %p111
    %p113 = scmp.ne.s32.totalorder %s105, %s107
    %p114 = scmp.eq.s32.totalorder %s15, 5
    %p115 = por %p113, %p114
    %p116 = scmp.ne.s32.totalorder %s107, %s108
    %p117 = scmp.eq.s32.totalorder %s15, 0
    %p118 = por %p116, %p117
    %p119 = scmp.ne.s32.totalorder %s107, %s108
    %p120 = scmp.eq.s32.totalorder %s16, 5
    %p121 = por %p119, %p120
    %p123 = scmp.ne.s32.totalorder %s108, %s122
    %p124 = scmp.eq.s32.totalorder %s16, 0
    %p125 = por %p123, %p124
    %s126 = ssub.s32 %s17, %s29
    %p127 = scmp.eq.s32.totalorder %s126, 0
    %s129 = sadd.s32 %s128, 1
    %s130 = scalar_select %p127, %s128, %s129
    %p133 = pneg %p127
    %p134 = scmp.eq.s32.totalorder %s10, 5
    %p135 = por %p133, %p134
    %p136 = scmp.ne.s32.totalorder %s128, %s131
    %p137 = scmp.eq.s32.totalorder %s10, 0
    %p138 = por %p136, %p137
    %p139 = scmp.ne.s32.totalorder %s128, %s131
    %p140 = scmp.eq.s32.totalorder %s15, 5
    %p141 = por %p139, %p140
    %p142 = scmp.ne.s32.totalorder %s131, %s132
    %p143 = scmp.eq.s32.totalorder %s15, 0
    %p144 = por %p142, %p143
    %p145 = scmp.ne.s32.totalorder %s131, %s132
    %p146 = scmp.eq.s32.totalorder %s16, 5
    %p147 = por %p145, %p146
    %p149 = scmp.ne.s32.totalorder %s132, %s148
    %p150 = scmp.eq.s32.totalorder %s16, 0
    %p151 = por %p149, %p150
    %p152 = scmp.le.s32.totalorder 1, %s10
    %p153 = scmp.lt.s32.totalorder %s10, 7
    %p154 = pnand %p152, %p153
    %p155 = pneg %p154
    // Predicated region
    $region9: #{ifblock_forward.22} parent=5 // pred_check
      _
    $region10: #{ifblock_forward.22} parent=5 // pred_check_branch
      %157 = sbr.rel (%p154) target = $region12
    $region11: #{ifblock_forward.22} parent=5 // pred_region
      %s158 = ssub.s32 %s10, 1
      // Predicated region
      $region13: #{ifblock_forward.22} parent=11 // pred_check
        %p159 = pneg %p97
      $region14: #{ifblock_forward.22} parent=11 // pred_check_branch
        %161 = sbr.rel (%p159) target = $region16
      $region15: #{ifblock_forward.22} parent=11 // pred_region
        _
      $region16: #{ifblock_forward.22} parent=11 // pred_fallthru
        _
      // Predicated region
      $region17: #{ifblock_forward.22} parent=11 // pred_check
        %p162 = pneg %p118
      $region18: #{ifblock_forward.22} parent=11 // pred_check_branch
        %164 = sbr.rel (%p162) target = $region20
      $region19: #{ifblock_forward.22} parent=11 // pred_region
        _
      $region20: #{ifblock_forward.22} parent=11 // pred_fallthru
        _
    $region12: #{ifblock_forward.22} parent=5 // pred_fallthru
      _
    %p165 = scmp.lt.s32.totalorder %s10, 6
    // Predicated region
    $region21: #{ifblock_forward.22} parent=5 // pred_check
      %p166 = pneg %p165
    $region22: #{ifblock_forward.22} parent=5 // pred_check_branch
      %168 = sbr.rel (%p166) target = $region24
    $region23: #{ifblock_forward.22} parent=5 // pred_region
      // Predicated region
      $region25: #{ifblock_forward.22} parent=23 // pred_check
        %p169 = pneg %p44
      $region26: #{ifblock_forward.22} parent=23 // pred_check_branch
        %171 = sbr.rel (%p169) target = $region28
      $region27: #{ifblock_forward.22} parent=23 // pred_region
        %s172 = smul.u32 3, %s17
        %p173 = scmp.lt.s32.totalorder %s18, 2
        %s174 = scalar_select %p173, %s18, 2
        %p175 = scmp.lt.s32.totalorder %s172, 5
        %s176 = scalar_select %p175, %s172, 5
        %s177 = smul.addr %s174, 6
        %s178 = sadd.s32 %s176, %s177
        %s179 = smul.addr %s178, 4
        %s180 = scalar_lea.vmem %s0, %s179
        %s181 = smul.u32 3, %s17
      $region28: #{ifblock_forward.22} parent=23 // pred_fallthru
        _
      // Predicated region
      $region29: #{ifblock_forward.22} parent=23 // pred_check
        %p182 = pneg %p70
      $region30: #{ifblock_forward.22} parent=23 // pred_check_branch
        %184 = sbr.rel (%p182) target = $region32
      $region31: #{ifblock_forward.22} parent=23 // pred_region
        %p185 = scmp.lt.s32.totalorder %s18, 2
        %s186 = scalar_select %p185, %s18, 2
        %s187 = smul.addr %s186, 48
        %s188 = smul.addr %s187, 4
        %s189 = scalar_lea.vmem %s1, %s188
      $region32: #{ifblock_forward.22} parent=23 // pred_fallthru
        _
    $region24: #{ifblock_forward.22} parent=5 // pred_fallthru
      _
    %p190 = scmp.le.s32.totalorder 1, %s10
    %p191 = scmp.lt.s32.totalorder %s10, 7
    %p192 = pnand %p190, %p191
    %p193 = pneg %p192
    // Predicated region
    $region33: #{ifblock_forward.22} parent=5 // pred_check
      _
    $region34: #{ifblock_forward.22} parent=5 // pred_check_branch
      %195 = sbr.rel (%p192) target = $region36
    $region35: #{ifblock_forward.22} parent=5 // pred_region
      %s196 = ssub.s32 %s10, 1
      %s197 = smul.u32 3, %s19
      %p198 = scmp.lt.s32.totalorder %s20, 2
      %s199 = scalar_select %p198, %s20, 2
      %p200 = scmp.lt.s32.totalorder %s197, 5
      %s201 = scalar_select %p200, %s197, 5
      %s202 = smul.addr %s199, 6
      %s203 = sadd.s32 %s201, %s202
      %s204 = smul.addr %s203, 4
      %s205 = scalar_lea.vmem %s0, %s204
      %p206 = pneg %p50
      %p207 = pneg %p47
      %p208 = scmp.lt.s32.totalorder %s20, 2
      %s209 = scalar_select %p208, %s20, 2
      %s210 = smul.addr %s209, 48
      %s211 = smul.addr %s210, 4
      %s212 = scalar_lea.vmem %s1, %s211
      %p213 = pneg %p76
      %p214 = pneg %p73
      %p215 = pneg %p97
      %p216 = pneg %p94
      %p217 = pneg %p118
      %p218 = pneg %p115
      %p219 = pneg %p144
      %p220 = pneg %p141
      %s221 = smul.u32 3, %s19
      %p222 = scmp.lt.s32.totalorder %s221, 5
      %s223 = scalar_select %p222, %s221, 5
      %s224 = smul.addr %s223, 2
      %s225 = smul.addr %s224, 4
      %s226 = scalar_lea.vmem %s4, %s225
      %s227 = smul.u32 3, %s19
      %p228 = scmp.lt.s32.totalorder %s20, 2
      %s229 = scalar_select %p228, %s20, 2
      %p230 = scmp.lt.s32.totalorder %s227, 5
      %s231 = scalar_select %p230, %s227, 5
      %s232 = smul.addr %s229, 6
      %s233 = sadd.s32 %s231, %s232
      %s234 = smul.addr %s233, 4
      %s235 = scalar_lea.vmem %s0, %s234
      %s236 = smul.u32 3, %s19
      %p237 = scmp.lt.s32.totalorder %s20, 2
      %s238 = scalar_select %p237, %s20, 2
      %s239 = smul.addr %s238, 48
      %s240 = smul.addr %s239, 4
      %s241 = scalar_lea.vmem %s1, %s240
      %s242 = smul.u32 3, %s19
      %p243 = scmp.lt.s32.totalorder %s242, 5
      %s244 = scalar_select %p243, %s242, 5
      %s245 = smul.addr %s244, 2
      %s246 = smul.addr %s245, 4
      %s247 = scalar_lea.vmem %s4, %s246
      %s248 = smul.u32 3, %s19
      %p250 = scmp.eq.s32.totalorder %s20, 0
      // Predicated region
      $region37: #{ifblock_forward.22} parent=35 // pred_check
        %p251 = pneg %p250
      $region38: #{ifblock_forward.22} parent=35 // pred_check_branch
        %253 = sbr.rel (%p251) target = $region40
      $region39: #{ifblock_forward.22} parent=35 // pred_region
        %254 = vst [vmem:[#allocation2] sm:$0xff] 0.0
        %255 = vst [vmem:[#allocation2 + $0x8] sm:$0xff] 0.0
        %256 = vst [vmem:[#allocation2 + $0x10] sm:$0xff] 0.0
        %257 = vst [vmem:[#allocation2 + $0x18] sm:$0xff] 0.0
        %258 = vst [vmem:[#allocation2 + $0x20] sm:$0xff] 0.0
        %259 = vst [vmem:[#allocation2 + $0x28] sm:$0xff] 0.0
      $region40: #{ifblock_forward.22} parent=35 // pred_fallthru
        _
      %v260 = vld [vmem:[%s235] sm:$0xf]
      %v261 = vld [vmem:[%s235 + $0x4] sm:$0xf]
      %v262 = vld [vmem:[%s235 + $0x8] sm:$0xf]
      %v263 = vld [vmem:[%s241] sm:$0xff]
      %v264 = vld [vmem:[%s241 + $0x8] sm:$0xff]
      %v265 = vld [vmem:[%s241 + $0x10] sm:$0xff]
      %v266 = vld [vmem:[%s241 + $0x18] sm:$0xff]
      %v267 = vld [vmem:[%s241 + $0x20] sm:$0xff]
      %v268 = vld [vmem:[%s241 + $0x28] sm:$0xff]
      %v269 = vld [vmem:[%s241 + $0x30] sm:$0xff]
      %v270 = vld [vmem:[%s241 + $0x38] sm:$0xff]
      %v271 = vld [vmem:[%s241 + $0x40] sm:$0xff]
      %v272 = vld [vmem:[%s241 + $0x48] sm:$0xff]
      %v273 = vld [vmem:[%s241 + $0x50] sm:$0xff]
      %v274 = vld [vmem:[%s241 + $0x58] sm:$0xff]
      %v275 = vld [vmem:[%s241 + $0x60] sm:$0xff]
      %v276 = vld [vmem:[%s241 + $0x68] sm:$0xff]
      %v277 = vld [vmem:[%s241 + $0x70] sm:$0xff]
      %v278 = vld [vmem:[%s241 + $0x78] sm:$0xff]
      %v279 = vld [vmem:[%s241 + $0x80] sm:$0xff]
      %v280 = vld [vmem:[%s241 + $0x88] sm:$0xff]
      %v281 = vld [vmem:[%s241 + $0x90] sm:$0xff]
      %v282 = vld [vmem:[%s241 + $0x98] sm:$0xff]
      %v283 = vld [vmem:[%s241 + $0xa0] sm:$0xff]
      %v284 = vld [vmem:[%s241 + $0xa8] sm:$0xff]
      %v285 = vld [vmem:[%s241 + $0xb0] sm:$0xff]
      %v286 = vld [vmem:[%s241 + $0xb8] sm:$0xff]
      %v288 = vunpack.c.l.b16 %v262
      %v289 = vpack.c.b16 %v288, %v288
      %v291 = vshrl.u32 %v289, 16
      %v293 = vrot.slane %v291, 3
      %v297 = vunpack.c.l.b16 %v260
      %v298 = vunpack.c.l.b16 %v261
      %v299 = vpack.c.b16 %v298, %v297
      %vm300 = vsmask.f32 256
      %v302 = vshrl.u32 %v299, 16
      %v304 = vrot.slane %v302, 7
      %v305 = vshll.u32 %v299, 16
      %v307 = vor.u32 %v304, %v305
      %v308 = vrot.slane %v291, 7
      %v309 = vshll.u32 %v289, 16
      %v311 = vor.u32 %v308, %v309
      %v312 = vsel %vm300, %v304, %v311
      %vm314 = vcmask 1040384
      %vm315 = vmand %vm314, %vm300
      %v316 = vsel %vm315, %v293, %v307
      %vm317 = vsmask.f32 7424
      %v318 = vrot.slane %v305, 1
      %v319 = vor.u32 %v302, %v318
      %v320 = vrot.slane %v309, 1
      %v321 = vsel %vm317, %v319, %v320
      %v322 = vor.u32 %v291, %v320
      %v324 = vpack.c.b16 %v297, %v297
      %v326 = vshll.u32 %v324, 16
      %v328 = vrot.slane %v326, 5
      %vm330 = vcmask 1043456
      %vm331 = vsmask.f32 3328
      %vm332 = vmand %vm330, %vm331
      %v333 = vsel %vm332, %v322, %v328
      %v334 = vld [vmem:[#allocation2] sm:$0xff]
      %v335 = vld [vmem:[#allocation2 + $0x8] sm:$0xff]
      %v336 = vld [vmem:[#allocation2 + $0x10] sm:$0xff]
      %v337 = vld [vmem:[#allocation2 + $0x18] sm:$0xff]
      %v338 = vld [vmem:[#allocation2 + $0x20] sm:$0xff]
      %v339 = vld [vmem:[#allocation2 + $0x28] sm:$0xff]
      %v348 = vunpack.c.l.b16 %v271
      %v349 = vunpack.c.h.b16 %v271
      %v350 = vunpack.c.l.b16 %v272
      %v351 = vunpack.c.h.b16 %v272
      %v352 = vunpack.c.l.b16 %v273
      %v353 = vunpack.c.h.b16 %v273
      %v354 = vunpack.c.l.b16 %v274
      %v355 = vunpack.c.h.b16 %v274
      %v356 = vunpack.c.l.b16 %v275
      %v357 = vunpack.c.h.b16 %v275
      %v358 = vunpack.c.l.b16 %v276
      %v359 = vunpack.c.h.b16 %v276
      %v360 = vunpack.c.l.b16 %v277
      %v361 = vunpack.c.h.b16 %v277
      %v362 = vunpack.c.l.b16 %v278
      %v363 = vunpack.c.h.b16 %v278
      %v364 = vpack.c.b16 %v350, %v348
      %v365 = vpack.c.b16 %v351, %v349
      %v366 = vpack.c.b16 %v354, %v352
      %v367 = vpack.c.b16 %v355, %v353
      %v368 = vpack.c.b16 %v358, %v356
      %v369 = vpack.c.b16 %v359, %v357
      %v370 = vpack.c.b16 %v362, %v360
      %v371 = vpack.c.b16 %v363, %v361
      %vm380 = vcmask 523264
      %v381 = vsel %vm380, %v299, 0
      %v383 = vsel %vm380, %v289, 0
      %385 = vmatprep.subr.bf16.mxu0 0
      %386 = vmatpush1.bf16.msra.mxu0 0
      %387 = vmatprep.subr.bf16.mxu0 0
      %388 = vmatpush1.bf16.msra.mxu0 0
      %389 = vmatprep.subr.bf16.mxu0 0
      %390 = vmatpush1.bf16.msra.mxu0 0
      %391 = vmatprep.subr.bf16.mxu0 0
      %392 = vmatpush1.bf16.msra.mxu0 0
      %393 = vmatprep.subr.bf16.mxu0 %v371
      %394 = vmatpush1.bf16.msra.mxu0 %v370
      %395 = vmatprep.subr.bf16.mxu0 %v369
      %396 = vmatpush1.bf16.msra.mxu0 %v368
      %397 = vmatprep.subr.bf16.mxu0 %v367
      %398 = vmatpush1.bf16.msra.mxu0 %v366
      %399 = vmatprep.subr.bf16.mxu0 %v365
      %400 = vmatpush1.bf16.msra.mxu0 %v364
      %401 = vmatprep.subr.bf16.mxu0 0
      %402 = vmatpush2.bf16.msra.mxu0 0
      %403 = vmatprep.subr.bf16.mxu0 0
      %404 = vmatpush2.bf16.msra.mxu0 0
      %405 = vmatprep.subr.bf16.mxu0 0
      %406 = vmatpush2.bf16.msra.mxu0 0
      %407 = vmatprep.subr.bf16.mxu0 0
      %408 = vmatpush2.bf16.msra.mxu0 0
      %409 = vmatprep.subr.bf16.mxu0 0
      %410 = vmatpush2.bf16.msra.mxu0 0
      %411 = vmatprep.subr.bf16.mxu0 0
      %412 = vmatpush2.bf16.msra.mxu0 0
      %413 = vmatprep.subr.bf16.mxu0 0
      %414 = vmatpush2.bf16.msra.mxu0 0
      %415 = vmatprep.subr.bf16.mxu0 0
      %416 = vmatpush2.bf16.msra.mxu0 0
      %417 = vmatprep.mubr.bf16.mxu0 0
      %418 = vmatmul.mubr.bf16.gmra.mxu0 %v381
      %v419 = vpop.f32.mrf.mxu0
      %v420 = vadd.f32 0.0, %v419
      %v421 = vpop.f32.mrf.mxu0
      %v422 = vadd.f32 0.0, %v421
      %v423 = vpop.f32.mrf.mxu0
      %v424 = vadd.f32 0.0, %v423
      %v425 = vpop.f32.mrf.mxu0
      %v426 = vadd.f32 0.0, %v425
      %427 = vmatprep.mubr.bf16.mxu0 0
      %428 = vmatmul.mubr.bf16.gmra.mxu0 %v383
      %v429 = vpop.f32.mrf.mxu0
      %v430 = vadd.f32 0.0, %v429
      %v431 = vpop.f32.mrf.mxu0
      %v432 = vadd.f32 0.0, %v431
      %v433 = vpop.f32.mrf.mxu0
      %v434 = vpop.f32.mrf.mxu0
      %435 = vdwg.mxu0
      %v444 = vunpack.c.l.b16 %v263
      %v445 = vunpack.c.h.b16 %v263
      %v446 = vunpack.c.l.b16 %v264
      %v447 = vunpack.c.h.b16 %v264
      %v448 = vunpack.c.l.b16 %v265
      %v449 = vunpack.c.h.b16 %v265
      %v450 = vunpack.c.l.b16 %v266
      %v451 = vunpack.c.h.b16 %v266
      %v452 = vunpack.c.l.b16 %v267
      %v453 = vunpack.c.h.b16 %v267
      %v454 = vunpack.c.l.b16 %v268
      %v455 = vunpack.c.h.b16 %v268
      %v456 = vunpack.c.l.b16 %v269
      %v457 = vunpack.c.h.b16 %v269
      %v458 = vunpack.c.l.b16 %v270
      %v459 = vunpack.c.h.b16 %v270
      %v460 = vpack.c.b16 %v446, %v444
      %v461 = vpack.c.b16 %v447, %v445
      %v462 = vpack.c.b16 %v450, %v448
      %v463 = vpack.c.b16 %v451, %v449
      %v464 = vpack.c.b16 %v454, %v452
      %v465 = vpack.c.b16 %v455, %v453
      %v466 = vpack.c.b16 %v458, %v456
      %v467 = vpack.c.b16 %v459, %v457
      %v477 = vsel %vm380, %v316, 0
      %v480 = vsel %vm380, %v312, 0
      %482 = vmatprep.subr.bf16.mxu0 0
      %483 = vmatpush1.bf16.msra.mxu0 0
      %484 = vmatprep.subr.bf16.mxu0 0
      %485 = vmatpush1.bf16.msra.mxu0 0
      %486 = vmatprep.subr.bf16.mxu0 0
      %487 = vmatpush1.bf16.msra.mxu0 0
      %488 = vmatprep.subr.bf16.mxu0 0
      %489 = vmatpush1.bf16.msra.mxu0 0
      %490 = vmatprep.subr.bf16.mxu0 %v467
      %491 = vmatpush1.bf16.msra.mxu0 %v466
      %492 = vmatprep.subr.bf16.mxu0 %v465
      %493 = vmatpush1.bf16.msra.mxu0 %v464
      %494 = vmatprep.subr.bf16.mxu0 %v463
      %495 = vmatpush1.bf16.msra.mxu0 %v462
      %496 = vmatprep.subr.bf16.mxu0 %v461
      %497 = vmatpush1.bf16.msra.mxu0 %v460
      %498 = vmatprep.subr.bf16.mxu0 0
      %499 = vmatpush2.bf16.msra.mxu0 0
      %500 = vmatprep.subr.bf16.mxu0 0
      %501 = vmatpush2.bf16.msra.mxu0 0
      %502 = vmatprep.subr.bf16.mxu0 0
      %503 = vmatpush2.bf16.msra.mxu0 0
      %504 = vmatprep.subr.bf16.mxu0 0
      %505 = vmatpush2.bf16.msra.mxu0 0
      %506 = vmatprep.subr.bf16.mxu0 0
      %507 = vmatpush2.bf16.msra.mxu0 0
      %508 = vmatprep.subr.bf16.mxu0 0
      %509 = vmatpush2.bf16.msra.mxu0 0
      %510 = vmatprep.subr.bf16.mxu0 0
      %511 = vmatpush2.bf16.msra.mxu0 0
      %512 = vmatprep.subr.bf16.mxu0 0
      %513 = vmatpush2.bf16.msra.mxu0 0
      %514 = vmatprep.mubr.bf16.mxu0 0
      %515 = vmatmul.mubr.bf16.gmra.mxu0 %v477
      %v516 = vpop.f32.mrf.mxu0
      %v517 = vadd.f32 %v420, %v516
      %v518 = vpop.f32.mrf.mxu0
      %v519 = vadd.f32 %v422, %v518
      %v520 = vpop.f32.mrf.mxu0
      %v521 = vadd.f32 %v424, %v520
      %v522 = vpop.f32.mrf.mxu0
      %v523 = vadd.f32 %v426, %v522
      %524 = vmatprep.mubr.bf16.mxu0 0
      %525 = vmatmul.mubr.bf16.gmra.mxu0 %v480
      %v526 = vpop.f32.mrf.mxu0
      %v527 = vadd.f32 %v430, %v526
      %v528 = vpop.f32.mrf.mxu0
      %v529 = vadd.f32 %v432, %v528
      %v530 = vpop.f32.mrf.mxu0
      %v531 = vpop.f32.mrf.mxu0
      %532 = vdwg.mxu0
      %v541 = vunpack.c.l.b16 %v279
      %v542 = vunpack.c.h.b16 %v279
      %v543 = vunpack.c.l.b16 %v280
      %v544 = vunpack.c.h.b16 %v280
      %v545 = vunpack.c.l.b16 %v281
      %v546 = vunpack.c.h.b16 %v281
      %v547 = vunpack.c.l.b16 %v282
      %v548 = vunpack.c.h.b16 %v282
      %v549 = vunpack.c.l.b16 %v283
      %v550 = vunpack.c.h.b16 %v283
      %v551 = vunpack.c.l.b16 %v284
      %v552 = vunpack.c.h.b16 %v284
      %v553 = vunpack.c.l.b16 %v285
      %v554 = vunpack.c.h.b16 %v285
      %v555 = vunpack.c.l.b16 %v286
      %v556 = vunpack.c.h.b16 %v286
      %v557 = vpack.c.b16 %v543, %v541
      %v558 = vpack.c.b16 %v544, %v542
      %v559 = vpack.c.b16 %v547, %v545
      %v560 = vpack.c.b16 %v548, %v546
      %v561 = vpack.c.b16 %v551, %v549
      %v562 = vpack.c.b16 %v552, %v550
      %v563 = vpack.c.b16 %v555, %v553
      %v564 = vpack.c.b16 %v556, %v554
      %v574 = vsel %vm380, %v321, 0
      %v577 = vsel %vm380, %v333, 0
      %579 = vmatprep.subr.bf16.mxu0 0
      %580 = vmatpush1.bf16.msra.mxu0 0
      %581 = vmatprep.subr.bf16.mxu0 0
      %582 = vmatpush1.bf16.msra.mxu0 0
      %583 = vmatprep.subr.bf16.mxu0 0
      %584 = vmatpush1.bf16.msra.mxu0 0
      %585 = vmatprep.subr.bf16.mxu0 0
      %586 = vmatpush1.bf16.msra.mxu0 0
      %587 = vmatprep.subr.bf16.mxu0 %v564
      %588 = vmatpush1.bf16.msra.mxu0 %v563
      %589 = vmatprep.subr.bf16.mxu0 %v562
      %590 = vmatpush1.bf16.msra.mxu0 %v561
      %591 = vmatprep.subr.bf16.mxu0 %v560
      %592 = vmatpush1.bf16.msra.mxu0 %v559
      %593 = vmatprep.subr.bf16.mxu0 %v558
      %594 = vmatpush1.bf16.msra.mxu0 %v557
      %595 = vmatprep.subr.bf16.mxu0 0
      %596 = vmatpush2.bf16.msra.mxu0 0
      %597 = vmatprep.subr.bf16.mxu0 0
      %598 = vmatpush2.bf16.msra.mxu0 0
      %599 = vmatprep.subr.bf16.mxu0 0
      %600 = vmatpush2.bf16.msra.mxu0 0
      %601 = vmatprep.subr.bf16.mxu0 0
      %602 = vmatpush2.bf16.msra.mxu0 0
      %603 = vmatprep.subr.bf16.mxu0 0
      %604 = vmatpush2.bf16.msra.mxu0 0
      %605 = vmatprep.subr.bf16.mxu0 0
      %606 = vmatpush2.bf16.msra.mxu0 0
      %607 = vmatprep.subr.bf16.mxu0 0
      %608 = vmatpush2.bf16.msra.mxu0 0
      %609 = vmatprep.subr.bf16.mxu0 0
      %610 = vmatpush2.bf16.msra.mxu0 0
      %611 = vmatprep.mubr.bf16.mxu0 0
      %612 = vmatmul.mubr.bf16.gmra.mxu0 %v574
      %v613 = vpop.f32.mrf.mxu0
      %v614 = vadd.f32 0.0, %v613
      %v615 = vpop.f32.mrf.mxu0
      %v616 = vadd.f32 0.0, %v615
      %v617 = vpop.f32.mrf.mxu0
      %v618 = vadd.f32 0.0, %v617
      %v619 = vpop.f32.mrf.mxu0
      %v620 = vadd.f32 0.0, %v619
      %621 = vmatprep.mubr.bf16.mxu0 0
      %622 = vmatmul.mubr.bf16.gmra.mxu0 %v577
      %v623 = vpop.f32.mrf.mxu0
      %v624 = vadd.f32 0.0, %v623
      %v625 = vpop.f32.mrf.mxu0
      %v626 = vadd.f32 0.0, %v625
      %v627 = vpop.f32.mrf.mxu0
      %v628 = vpop.f32.mrf.mxu0
      %629 = vdwg.mxu0
      %v630 = vadd.f32 %v517, %v614
      %v631 = vadd.f32 %v519, %v616
      %v632 = vadd.f32 %v521, %v618
      %v633 = vadd.f32 %v523, %v620
      %v634 = vadd.f32 %v527, %v624
      %v635 = vadd.f32 %v529, %v626
      %v636 = vadd.f32 %v334, %v630
      %v637 = vadd.f32 %v335, %v631
      %v638 = vadd.f32 %v336, %v632
      %v639 = vadd.f32 %v337, %v633
      %v640 = vadd.f32 %v338, %v634
      %v641 = vadd.f32 %v339, %v635
      %642 = vst [vmem:[#allocation2] sm:$0xff] %v636
      %643 = vst [vmem:[#allocation2 + $0x8] sm:$0xff] %v637
      %644 = vst [vmem:[#allocation2 + $0x10] sm:$0xff] %v638
      %645 = vst [vmem:[#allocation2 + $0x18] sm:$0xff] %v639
      %646 = vst [vmem:[#allocation2 + $0x20] sm:$0xff] %v640
      %647 = vst [vmem:[#allocation2 + $0x28] sm:$0xff] %v641
      %p648 = scmp.eq.s32.totalorder %s20, 2
      // Predicated region
      $region41: #{ifblock_forward.22} parent=35 // pred_check
        %p649 = pneg %p648
      $region42: #{ifblock_forward.22} parent=35 // pred_check_branch
        %651 = sbr.rel (%p649) target = $region44
      $region43: #{ifblock_forward.22} parent=35 // pred_region
        %v652 = vld [vmem:[#allocation2] sm:$0xff]
        %v653 = vld [vmem:[#allocation2 + $0x8] sm:$0xff]
        %v654 = vld [vmem:[#allocation2 + $0x10] sm:$0xff]
        %v655 = vld [vmem:[#allocation2 + $0x18] sm:$0xff]
        %v656 = vld [vmem:[#allocation2 + $0x20] sm:$0xff]
        %v657 = vld [vmem:[#allocation2 + $0x28] sm:$0xff]
        %v658 = vld [vmem:[%s2] sm:$0x3]
        %v660 = vlaneseq
        %v661 = vshrl.u32 %v660, 7
        %v662 = vsub.s32 0, %v661
        %v663 = vrot.slane %v658, %v662
        %v664 = vlaneseq
        %v665 = vshrl.u32 %v664, 7
        %v666 = vsub.s32 1, %v665
        %v667 = vrot.slane %v658, %v666
        %v670 = vadd.f32 %v652, %v663
        %v671 = vadd.f32 %v653, %v667
        %v672 = vadd.f32 %v654, %v663
        %v673 = vadd.f32 %v655, %v667
        %v674 = vadd.f32 %v656, %v663
        %v675 = vadd.f32 %v657, %v667
        %vm676 = vcmp.ge.f32.partialorder %v670, 0.0
        %vm677 = vcmp.ge.f32.partialorder %v671, 0.0
        %vm678 = vcmp.ge.f32.partialorder %v672, 0.0
        %vm679 = vcmp.ge.f32.partialorder %v673, 0.0
        %vm680 = vcmp.ge.f32.partialorder %v674, 0.0
        %vm681 = vcmp.ge.f32.partialorder %v675, 0.0
        %v682 = vld [vmem:[%s3] sm:$0x3]
        %v684 = vlaneseq
        %v685 = vshrl.u32 %v684, 7
        %v686 = vsub.s32 0, %v685
        %v687 = vrot.slane %v682, %v686
        %v688 = vlaneseq
        %v689 = vshrl.u32 %v688, 7
        %v690 = vsub.s32 1, %v689
        %v691 = vrot.slane %v682, %v690
        %v694 = vmul.f32 %v687, %v670
        %v695 = vmul.f32 %v691, %v671
        %v696 = vmul.f32 %v687, %v672
        %v697 = vmul.f32 %v691, %v673
        %v698 = vmul.f32 %v687, %v674
        %v699 = vmul.f32 %v691, %v675
        %v700 = vsel %vm676, %v670, %v694
        %v701 = vsel %vm677, %v671, %v695
        %v702 = vsel %vm678, %v672, %v696
        %v703 = vsel %vm679, %v673, %v697
        %v704 = vsel %vm680, %v674, %v698
        %v705 = vsel %vm681, %v675, %v699
        %v706 = vpack.c.bf16 %v702, %v700
        %v707 = vpack.c.bf16 %v703, %v701
        %v708 = vpack.c.bf16 %v704, %v704
        %v709 = vpack.c.bf16 %v705, %v705
        %v714 = vunpack.c.l.b16 %v706
        %v715 = vunpack.c.l.b16 %v707
        %v716 = vunpack.c.h.b16 %v706
        %v717 = vunpack.c.h.b16 %v707
        %v718 = vunpack.c.l.b16 %v708
        %v719 = vunpack.c.l.b16 %v709
        %v720 = vpack.c.b16 %v715, %v714
        %v721 = vpack.c.b16 %v717, %v716
        %v722 = vpack.c.b16 %v719, %v718
        %726 = vst [vmem:[%s247] sm:$0xff] %v720
        %727 = vst [vmem:[%s247 + $0x8] sm:$0xff] %v721
        %728 = vst [vmem:[%s247 + $0x10] sm:$0xff] %v722
      $region44: #{ifblock_forward.22} parent=35 // pred_fallthru
        _
      %s729 = smul.u32 3, %s19
      %p730 = scmp.lt.s32.totalorder %s729, 5
      %s731 = scalar_select %p730, %s729, 5
      %s732 = smul.addr %s731, 2
      %s733 = smul.addr %s732, 4
      %s734 = scalar_lea.vmem %s4, %s733
      // Predicated region
      $region45: #{ifblock_forward.22} parent=35 // pred_check
        %p735 = pneg %p141
      $region46: #{ifblock_forward.22} parent=35 // pred_check_branch
        %737 = sbr.rel (%p735) target = $region48
      $region47: #{ifblock_forward.22} parent=35 // pred_region
        %s738 = smul.u32 3, %s19
      $region48: #{ifblock_forward.22} parent=35 // pred_fallthru
        _
    $region36: #{ifblock_forward.22} parent=5 // pred_fallthru
      _
    %p739 = scmp.le.s32.totalorder 2, %s10
    // Predicated region
    $region49: #{ifblock_forward.22} parent=5 // pred_check
      %p740 = pneg %p739
    $region50: #{ifblock_forward.22} parent=5 // pred_check_branch
      %742 = sbr.rel (%p740) target = $region52
    $region51: #{ifblock_forward.22} parent=5 // pred_region
      %s743 = ssub.s32 %s10, 2
      // Predicated region
      $region53: #{ifblock_forward.22} parent=51 // pred_check
        %p744 = pneg %p147
      $region54: #{ifblock_forward.22} parent=51 // pred_check_branch
        %746 = sbr.rel (%p744) target = $region56
      $region55: #{ifblock_forward.22} parent=51 // pred_region
        %s747 = smul.u32 3, %s21
        %p748 = scmp.lt.s32.totalorder %s747, 5
        %s749 = scalar_select %p748, %s747, 5
        %s750 = smul.addr %s749, 2
        %s751 = smul.addr %s750, 4
        %s752 = scalar_lea.vmem %s4, %s751
      $region56: #{ifblock_forward.22} parent=51 // pred_fallthru
        _
    $region52: #{ifblock_forward.22} parent=5 // pred_fallthru
      _
  $region6: #{ifblock_forward.22} parent=0 // loop_footer
    %s14 = sadd.s32 1, %s10
  $region7: #{ifblock_forward.22} parent=0 // loop_footer_branch
    %9 = sbr.rel target = $region3
  $region8: #{ifblock_forward.22} parent=0 // loop_exit
    _

// kernel: ifblock_forward.23
$region0: #{ifblock_forward.23}
  #allocation0 [shape = 'u32[]', space=smem, size = 0x4, offset = 0x4, fixed_abs, tag = 'smem constant byte address 0x4 - core index']
  #allocation1 [shape = 'u32[144,128]{1,0:T(1,128)}', space=vmem, size = 0x12000, scoped, tag = 'internal scratch']
  #allocation2 [shape = 'f32[80,20]{1,0:T(8,128)}', space=vmem, size = 0xa000, scoped, tag = 'scratch operand']
  %s0 = inlined_call_operand.vmem [shape: bf16[3,160,64], index: 0, kind: input, shape index: {}]
  %s1 = inlined_call_operand.vmem [shape: bf16[3,192,20], index: 1, kind: input, shape index: {}]
  %s2 = inlined_call_operand.vmem [shape: f32[1,20], index: 2, kind: input, shape index: {}]
  %s3 = inlined_call_operand.vmem [shape: f32[1,20], index: 3, kind: input, shape index: {}]
  %s4 = inlined_call_operand.vmem [shape: bf16[160,20], index: 4, kind: output, shape index: {}]
  %s5 = sld [smem:[#allocation0]]
  $region57: #{ifblock_forward.23} parent=0
    _
  %s7 = ssub.s32 1, %s5
  %s8 = scalar_select 0, %s7, %s5
  loop: start=0, step=1, limit=8
  $region2: #{ifblock_forward.23} parent=0 // loop_pre_header
    _
  $region3: #{ifblock_forward.23} parent=0 // loop_header
    %s10 = sphi 0, %s14
    %p11 = scmp.ge.s32.totalorder %s10, 8
    %s17 = sphi 0, %s29
    %s18 = sphi 0, %s25
    %s19 = sphi 0, %s17
    %s20 = sphi 0, %s18
    %s21 = sphi 0, %s19
    %s22 = sphi 0, %s20
    %s34 = sphi 0, %s36
    %s37 = sphi 0, %s34
    %s38 = sphi 0, %s37
    %s54 = sphi 0, %s38
    %s60 = sphi 0, %s62
    %s63 = sphi 0, %s60
    %s64 = sphi 0, %s63
    %s80 = sphi 0, %s64
    %s84 = sphi 0, %s84
    %s86 = sphi 0, %s84
    %s87 = sphi 0, %s86
    %s101 = sphi 0, %s87
    %s105 = sphi 0, %s105
    %s107 = sphi 0, %s105
    %s108 = sphi 0, %s107
    %s122 = sphi 0, %s108
    %s128 = sphi 0, %s130
    %s131 = sphi 0, %s128
    %s132 = sphi 0, %s131
    %s148 = sphi 0, %s132
  $region4: #{ifblock_forward.23} parent=0 // loop_header_branch
    %13 = sbr.rel (%p11) target = $region8
  $region5: #{ifblock_forward.23} parent=0 // loop_body
    %s15 = ssub.s32 %s10, 1
    %s16 = ssub.s32 %s10, 2
    %s23 = sadd.s32 1, %s18
    %p24 = scmp.ge.s32.totalorder %s23, 3
    %s25 = scalar_select %p24, 0, %s23
    %s26 = sadd.s32 1, %s17
    %s27 = scalar_select %p24, %s26, %s17
    %p28 = scmp.ge.s32.totalorder %s27, 2
    %s29 = scalar_select %p28, 0, %s27
    %s30 = ssub.s32 %s18, %s25
    %s31 = ssub.s32 %s17, %s29
    %s32 = sor.u32 %s30, %s31
    %p33 = scmp.eq.s32.totalorder %s32, 0
    %s35 = sadd.s32 %s34, 1
    %s36 = scalar_select %p33, %s34, %s35
    %p39 = pneg %p33
    %p40 = scmp.eq.s32.totalorder %s10, 5
    %p41 = por %p39, %p40
    %p42 = scmp.ne.s32.totalorder %s34, %s37
    %p43 = scmp.eq.s32.totalorder %s10, 0
    %p44 = por %p42, %p43
    %p45 = scmp.ne.s32.totalorder %s34, %s37
    %p46 = scmp.eq.s32.totalorder %s15, 5
    %p47 = por %p45, %p46
    %p48 = scmp.ne.s32.totalorder %s37, %s38
    %p49 = scmp.eq.s32.totalorder %s15, 0
    %p50 = por %p48, %p49
    %p51 = scmp.ne.s32.totalorder %s37, %s38
    %p52 = scmp.eq.s32.totalorder %s16, 5
    %p53 = por %p51, %p52
    %p55 = scmp.ne.s32.totalorder %s38, %s54
    %p56 = scmp.eq.s32.totalorder %s16, 0
    %p57 = por %p55, %p56
    %s58 = ssub.s32 %s18, %s25
    %p59 = scmp.eq.s32.totalorder %s58, 0
    %s61 = sadd.s32 %s60, 1
    %s62 = scalar_select %p59, %s60, %s61
    %p65 = pneg %p59
    %p66 = scmp.eq.s32.totalorder %s10, 5
    %p67 = por %p65, %p66
    %p68 = scmp.ne.s32.totalorder %s60, %s63
    %p69 = scmp.eq.s32.totalorder %s10, 0
    %p70 = por %p68, %p69
    %p71 = scmp.ne.s32.totalorder %s60, %s63
    %p72 = scmp.eq.s32.totalorder %s15, 5
    %p73 = por %p71, %p72
    %p74 = scmp.ne.s32.totalorder %s63, %s64
    %p75 = scmp.eq.s32.totalorder %s15, 0
    %p76 = por %p74, %p75
    %p77 = scmp.ne.s32.totalorder %s63, %s64
    %p78 = scmp.eq.s32.totalorder %s16, 5
    %p79 = por %p77, %p78
    %p81 = scmp.ne.s32.totalorder %s64, %s80
    %p82 = scmp.eq.s32.totalorder %s16, 0
    %p83 = por %p81, %p82
    %s85 = sadd.s32 %s84, 1
    %p88 = scmp.eq.s32.totalorder %s10, 5
    %p89 = scmp.ne.s32.totalorder %s84, %s86
    %p90 = scmp.eq.s32.totalorder %s10, 0
    %p91 = por %p89, %p90
    %p92 = scmp.ne.s32.totalorder %s84, %s86
    %p93 = scmp.eq.s32.totalorder %s15, 5
    %p94 = por %p92, %p93
    %p95 = scmp.ne.s32.totalorder %s86, %s87
    %p96 = scmp.eq.s32.totalorder %s15, 0
    %p97 = por %p95, %p96
    %p98 = scmp.ne.s32.totalorder %s86, %s87
    %p99 = scmp.eq.s32.totalorder %s16, 5
    %p100 = por %p98, %p99
    %p102 = scmp.ne.s32.totalorder %s87, %s101
    %p103 = scmp.eq.s32.totalorder %s16, 0
    %p104 = por %p102, %p103
    %s106 = sadd.s32 %s105, 1
    %p109 = scmp.eq.s32.totalorder %s10, 5
    %p110 = scmp.ne.s32.totalorder %s105, %s107
    %p111 = scmp.eq.s32.totalorder %s10, 0
    %p112 = por %p110, %p111
    %p113 = scmp.ne.s32.totalorder %s105, %s107
    %p114 = scmp.eq.s32.totalorder %s15, 5
    %p115 = por %p113, %p114
    %p116 = scmp.ne.s32.totalorder %s107, %s108
    %p117 = scmp.eq.s32.totalorder %s15, 0
    %p118 = por %p116, %p117
    %p119 = scmp.ne.s32.totalorder %s107, %s108
    %p120 = scmp.eq.s32.totalorder %s16, 5
    %p121 = por %p119, %p120
    %p123 = scmp.ne.s32.totalorder %s108, %s122
    %p124 = scmp.eq.s32.totalorder %s16, 0
    %p125 = por %p123, %p124
    %s126 = ssub.s32 %s17, %s29
    %p127 = scmp.eq.s32.totalorder %s126, 0
    %s129 = sadd.s32 %s128, 1
    %s130 = scalar_select %p127, %s128, %s129
    %p133 = pneg %p127
    %p134 = scmp.eq.s32.totalorder %s10, 5
    %p135 = por %p133, %p134
    %p136 = scmp.ne.s32.totalorder %s128, %s131
    %p137 = scmp.eq.s32.totalorder %s10, 0
    %p138 = por %p136, %p137
    %p139 = scmp.ne.s32.totalorder %s128, %s131
    %p140 = scmp.eq.s32.totalorder %s15, 5
    %p141 = por %p139, %p140
    %p142 = scmp.ne.s32.totalorder %s131, %s132
    %p143 = scmp.eq.s32.totalorder %s15, 0
    %p144 = por %p142, %p143
    %p145 = scmp.ne.s32.totalorder %s131, %s132
    %p146 = scmp.eq.s32.totalorder %s16, 5
    %p147 = por %p145, %p146
    %p149 = scmp.ne.s32.totalorder %s132, %s148
    %p150 = scmp.eq.s32.totalorder %s16, 0
    %p151 = por %p149, %p150
    %p152 = scmp.le.s32.totalorder 1, %s10
    %p153 = scmp.lt.s32.totalorder %s10, 7
    %p154 = pnand %p152, %p153
    %p155 = pneg %p154
    // Predicated region
    $region9: #{ifblock_forward.23} parent=5 // pred_check
      _
    $region10: #{ifblock_forward.23} parent=5 // pred_check_branch
      %157 = sbr.rel (%p154) target = $region12
    $region11: #{ifblock_forward.23} parent=5 // pred_region
      %s158 = ssub.s32 %s10, 1
      // Predicated region
      $region13: #{ifblock_forward.23} parent=11 // pred_check
        %p159 = pneg %p97
      $region14: #{ifblock_forward.23} parent=11 // pred_check_branch
        %161 = sbr.rel (%p159) target = $region16
      $region15: #{ifblock_forward.23} parent=11 // pred_region
        _
      $region16: #{ifblock_forward.23} parent=11 // pred_fallthru
        _
      // Predicated region
      $region17: #{ifblock_forward.23} parent=11 // pred_check
        %p162 = pneg %p118
      $region18: #{ifblock_forward.23} parent=11 // pred_check_branch
        %164 = sbr.rel (%p162) target = $region20
      $region19: #{ifblock_forward.23} parent=11 // pred_region
        _
      $region20: #{ifblock_forward.23} parent=11 // pred_fallthru
        _
    $region12: #{ifblock_forward.23} parent=5 // pred_fallthru
      _
    %p165 = scmp.lt.s32.totalorder %s10, 6
    // Predicated region
    $region21: #{ifblock_forward.23} parent=5 // pred_check
      %p166 = pneg %p165
    $region22: #{ifblock_forward.23} parent=5 // pred_check_branch
      %168 = sbr.rel (%p166) target = $region24
    $region23: #{ifblock_forward.23} parent=5 // pred_region
      // Predicated region
      $region25: #{ifblock_forward.23} parent=23 // pred_check
        %p169 = pneg %p44
      $region26: #{ifblock_forward.23} parent=23 // pred_check_branch
        %171 = sbr.rel (%p169) target = $region28
      $region27: #{ifblock_forward.23} parent=23 // pred_region
        %s172 = smul.u32 10, %s17
        %p173 = scmp.lt.s32.totalorder %s18, 2
        %s174 = scalar_select %p173, %s18, 2
        %p175 = scmp.lt.s32.totalorder %s172, 19
        %s176 = scalar_select %p175, %s172, 19
        %s177 = smul.addr %s174, 20
        %s178 = sadd.s32 %s176, %s177
        %s179 = smul.addr %s178, 4
        %s180 = scalar_lea.vmem %s0, %s179
        %s181 = smul.u32 10, %s17
      $region28: #{ifblock_forward.23} parent=23 // pred_fallthru
        _
      // Predicated region
      $region29: #{ifblock_forward.23} parent=23 // pred_check
        %p182 = pneg %p70
      $region30: #{ifblock_forward.23} parent=23 // pred_check_branch
        %184 = sbr.rel (%p182) target = $region32
      $region31: #{ifblock_forward.23} parent=23 // pred_region
        %p185 = scmp.lt.s32.totalorder %s18, 2
        %s186 = scalar_select %p185, %s18, 2
        %s187 = smul.addr %s186, 24
        %s188 = smul.addr %s187, 4
        %s189 = scalar_lea.vmem %s1, %s188
      $region32: #{ifblock_forward.23} parent=23 // pred_fallthru
        _
    $region24: #{ifblock_forward.23} parent=5 // pred_fallthru
      _
    %p190 = scmp.le.s32.totalorder 1, %s10
    %p191 = scmp.lt.s32.totalorder %s10, 7
    %p192 = pnand %p190, %p191
    %p193 = pneg %p192
    // Predicated region
    $region33: #{ifblock_forward.23} parent=5 // pred_check
      _
    $region34: #{ifblock_forward.23} parent=5 // pred_check_branch
      %195 = sbr.rel (%p192) target = $region36
    $region35: #{ifblock_forward.23} parent=5 // pred_region
      %s196 = ssub.s32 %s10, 1
      %s197 = smul.u32 10, %s19
      %p198 = scmp.lt.s32.totalorder %s20, 2
      %s199 = scalar_select %p198, %s20, 2
      %p200 = scmp.lt.s32.totalorder %s197, 19
      %s201 = scalar_select %p200, %s197, 19
      %s202 = smul.addr %s199, 20
      %s203 = sadd.s32 %s201, %s202
      %s204 = smul.addr %s203, 4
      %s205 = scalar_lea.vmem %s0, %s204
      %p206 = pneg %p50
      %p207 = pneg %p47
      %p208 = scmp.lt.s32.totalorder %s20, 2
      %s209 = scalar_select %p208, %s20, 2
      %s210 = smul.addr %s209, 24
      %s211 = smul.addr %s210, 4
      %s212 = scalar_lea.vmem %s1, %s211
      %p213 = pneg %p76
      %p214 = pneg %p73
      %p215 = pneg %p97
      %p216 = pneg %p94
      %p217 = pneg %p118
      %p218 = pneg %p115
      %p219 = pneg %p144
      %p220 = pneg %p141
      %s221 = smul.u32 10, %s19
      %p222 = scmp.lt.s32.totalorder %s221, 19
      %s223 = scalar_select %p222, %s221, 19
      %s224 = smul.addr %s223, 4
      %s225 = scalar_lea.vmem %s4, %s224
      %s226 = smul.u32 10, %s19
      %p227 = scmp.lt.s32.totalorder %s20, 2
      %s228 = scalar_select %p227, %s20, 2
      %p229 = scmp.lt.s32.totalorder %s226, 19
      %s230 = scalar_select %p229, %s226, 19
      %s231 = smul.addr %s228, 20
      %s232 = sadd.s32 %s230, %s231
      %s233 = smul.addr %s232, 4
      %s234 = scalar_lea.vmem %s0, %s233
      %s235 = smul.u32 10, %s19
      %p236 = scmp.lt.s32.totalorder %s20, 2
      %s237 = scalar_select %p236, %s20, 2
      %s238 = smul.addr %s237, 24
      %s239 = smul.addr %s238, 4
      %s240 = scalar_lea.vmem %s1, %s239
      %s241 = smul.u32 10, %s19
      %p242 = scmp.lt.s32.totalorder %s241, 19
      %s243 = scalar_select %p242, %s241, 19
      %s244 = smul.addr %s243, 4
      %s245 = scalar_lea.vmem %s4, %s244
      %s246 = smul.u32 10, %s19
      %p248 = scmp.eq.s32.totalorder %s20, 0
      // Predicated region
      $region37: #{ifblock_forward.23} parent=35 // pred_check
        %p249 = pneg %p248
      $region38: #{ifblock_forward.23} parent=35 // pred_check_branch
        %251 = sbr.rel (%p249) target = $region40
      $region39: #{ifblock_forward.23} parent=35 // pred_region
        %vm252 = vcmask 162816
        %253 = vst.msk [vmem:[#allocation2] sm:$0xff] %vm252, 0.0
        %254 = vst.msk [vmem:[#allocation2 + $0x8] sm:$0xff] %vm252, 0.0
        %255 = vst.msk [vmem:[#allocation2 + $0x10] sm:$0xff] %vm252, 0.0
        %256 = vst.msk [vmem:[#allocation2 + $0x18] sm:$0xff] %vm252, 0.0
        %257 = vst.msk [vmem:[#allocation2 + $0x20] sm:$0xff] %vm252, 0.0
        %258 = vst.msk [vmem:[#allocation2 + $0x28] sm:$0xff] %vm252, 0.0
        %259 = vst.msk [vmem:[#allocation2 + $0x30] sm:$0xff] %vm252, 0.0
        %260 = vst.msk [vmem:[#allocation2 + $0x38] sm:$0xff] %vm252, 0.0
        %261 = vst.msk [vmem:[#allocation2 + $0x40] sm:$0xff] %vm252, 0.0
        %262 = vst.msk [vmem:[#allocation2 + $0x48] sm:$0xff] %vm252, 0.0
      $region40: #{ifblock_forward.23} parent=35 // pred_fallthru
        _
      %v263 = vld [vmem:[%s234] sm:$0xf]
      %v264 = vld [vmem:[%s234 + $0x4] sm:$0xf]
      %v265 = vld [vmem:[%s234 + $0x8] sm:$0xf]
      %v266 = vld [vmem:[%s234 + $0xc] sm:$0xf]
      %v267 = vld [vmem:[%s234 + $0x10] sm:$0xf]
      %v268 = vld [vmem:[%s234 + $0x14] sm:$0xf]
      %v269 = vld [vmem:[%s234 + $0x18] sm:$0xf]
      %v270 = vld [vmem:[%s234 + $0x1c] sm:$0xf]
      %v271 = vld [vmem:[%s234 + $0x20] sm:$0xf]
      %v272 = vld [vmem:[%s234 + $0x24] sm:$0xf]
      %v273 = vld [vmem:[%s240] sm:$0xf]
      %v274 = vld [vmem:[%s240 + $0x4] sm:$0xf]
      %v275 = vld [vmem:[%s240 + $0x8] sm:$0xf]
      %v276 = vld [vmem:[%s240 + $0xc] sm:$0xf]
      %v277 = vld [vmem:[%s240 + $0x10] sm:$0xf]
      %v278 = vld [vmem:[%s240 + $0x14] sm:$0xf]
      %v279 = vld [vmem:[%s240 + $0x18] sm:$0xf]
      %v280 = vld [vmem:[%s240 + $0x1c] sm:$0xf]
      %v281 = vld [vmem:[%s240 + $0x20] sm:$0xf]
      %v282 = vld [vmem:[%s240 + $0x24] sm:$0xf]
      %v283 = vld [vmem:[%s240 + $0x28] sm:$0xf]
      %v284 = vld [vmem:[%s240 + $0x2c] sm:$0xf]
      %v285 = vld [vmem:[%s240 + $0x30] sm:$0xf]
      %v286 = vld [vmem:[%s240 + $0x34] sm:$0xf]
      %v287 = vld [vmem:[%s240 + $0x38] sm:$0xf]
      %v288 = vld [vmem:[%s240 + $0x3c] sm:$0xf]
      %v289 = vld [vmem:[%s240 + $0x40] sm:$0xf]
      %v290 = vld [vmem:[%s240 + $0x44] sm:$0xf]
      %v291 = vld [vmem:[%s240 + $0x48] sm:$0xf]
      %v292 = vld [vmem:[%s240 + $0x4c] sm:$0xf]
      %v293 = vld [vmem:[%s240 + $0x50] sm:$0xf]
      %v294 = vld [vmem:[%s240 + $0x54] sm:$0xf]
      %v295 = vld [vmem:[%s240 + $0x58] sm:$0xf]
      %v296 = vld [vmem:[%s240 + $0x5c] sm:$0xf]
      %v298 = vunpack.c.l.b16 %v272
      %v299 = vpack.c.b16 %v298, %v298
      %v301 = vshrl.u32 %v299, 16
      %v303 = vrot.slane %v301, 3
      %v314 = vunpack.c.l.b16 %v263
      %v315 = vunpack.c.l.b16 %v264
      %v316 = vunpack.c.l.b16 %v265
      %v317 = vunpack.c.l.b16 %v266
      %v318 = vunpack.c.l.b16 %v267
      %v319 = vunpack.c.l.b16 %v268
      %v320 = vunpack.c.l.b16 %v269
      %v321 = vunpack.c.l.b16 %v270
      %v322 = vunpack.c.l.b16 %v271
      %v323 = vpack.c.b16 %v315, %v314
      %v324 = vpack.c.b16 %v317, %v316
      %v325 = vpack.c.b16 %v319, %v318
      %v326 = vpack.c.b16 %v321, %v320
      %v327 = vpack.c.b16 %v298, %v322
      %vm328 = vsmask.f32 256
      %v330 = vshrl.u32 %v323, 16
      %v332 = vrot.slane %v330, 7
      %v333 = vshll.u32 %v323, 16
      %v335 = vor.u32 %v332, %v333
      %v337 = vshrl.u32 %v324, 16
      %v339 = vrot.slane %v337, 7
      %v340 = vshll.u32 %v324, 16
      %v342 = vor.u32 %v339, %v340
      %v343 = vsel %vm328, %v332, %v342
      %v345 = vshrl.u32 %v325, 16
      %v347 = vrot.slane %v345, 7
      %v348 = vshll.u32 %v325, 16
      %v350 = vor.u32 %v347, %v348
      %v351 = vsel %vm328, %v339, %v350
      %v353 = vshrl.u32 %v326, 16
      %v355 = vrot.slane %v353, 7
      %v356 = vshll.u32 %v326, 16
      %v358 = vor.u32 %v355, %v356
      %v359 = vsel %vm328, %v347, %v358
      %v361 = vshrl.u32 %v327, 16
      %v363 = vrot.slane %v361, 7
      %v364 = vshll.u32 %v327, 16
      %v366 = vor.u32 %v363, %v364
      %v367 = vsel %vm328, %v355, %v366
      %vm369 = vcmask 1040384
      %vm370 = vmand %vm369, %vm328
      %v371 = vsel %vm370, %v303, %v335
      %vm372 = vsmask.f32 7424
      %v373 = vrot.slane %v333, 1
      %v374 = vor.u32 %v330, %v373
      %v375 = vrot.slane %v340, 1
      %v376 = vsel %vm372, %v374, %v375
      %v377 = vor.u32 %v337, %v375
      %v378 = vrot.slane %v348, 1
      %v379 = vsel %vm372, %v377, %v378
      %v380 = vor.u32 %v345, %v378
      %v381 = vrot.slane %v356, 1
      %v382 = vsel %vm372, %v380, %v381
      %v383 = vor.u32 %v353, %v381
      %v384 = vrot.slane %v364, 1
      %v385 = vsel %vm372, %v383, %v384
      %v386 = vor.u32 %v361, %v384
      %v388 = vpack.c.b16 %v314, %v314
      %v390 = vshll.u32 %v388, 16
      %v392 = vrot.slane %v390, 1
      %vm394 = vcmask 1047552
      %vm395 = vmand %vm394, %vm372
      %v396 = vsel %vm395, %v386, %v392
      %v397 = vld [vmem:[#allocation2] sm:$0xff]
      %v398 = vld [vmem:[#allocation2 + $0x8] sm:$0xff]
      %v399 = vld [vmem:[#allocation2 + $0x10] sm:$0xff]
      %v400 = vld [vmem:[#allocation2 + $0x18] sm:$0xff]
      %v401 = vld [vmem:[#allocation2 + $0x20] sm:$0xff]
      %v402 = vld [vmem:[#allocation2 + $0x28] sm:$0xff]
      %v403 = vld [vmem:[#allocation2 + $0x30] sm:$0xff]
      %v404 = vld [vmem:[#allocation2 + $0x38] sm:$0xff]
      %v405 = vld [vmem:[#allocation2 + $0x40] sm:$0xff]
      %v406 = vld [vmem:[#allocation2 + $0x48] sm:$0xff]
      %v415 = vunpack.c.l.b16 %v281
      %v416 = vunpack.c.l.b16 %v282
      %v417 = vunpack.c.l.b16 %v283
      %v418 = vunpack.c.l.b16 %v284
      %v419 = vunpack.c.l.b16 %v285
      %v420 = vunpack.c.l.b16 %v286
      %v421 = vunpack.c.l.b16 %v287
      %v422 = vunpack.c.l.b16 %v288
      %v423 = vpack.c.b16 %v416, %v415
      %v424 = vpack.c.b16 %v418, %v417
      %v425 = vpack.c.b16 %v420, %v419
      %v426 = vpack.c.b16 %v422, %v421
      %vm431 = vcmask 523264
      %v432 = vsel %vm431, %v323, 0
      %v434 = vsel %vm431, %v324, 0
      %v436 = vsel %vm431, %v325, 0
      %v438 = vsel %vm431, %v326, 0
      %v440 = vsel %vm431, %v327, 0
      %442 = vmatprep.subr.bf16.mxu0 0
      %443 = vmatpush1.bf16.msra.mxu0 0
      %444 = vmatprep.subr.bf16.mxu0 0
      %445 = vmatpush1.bf16.msra.mxu0 0
      %446 = vmatprep.subr.bf16.mxu0 0
      %447 = vmatpush1.bf16.msra.mxu0 0
      %448 = vmatprep.subr.bf16.mxu0 0
      %449 = vmatpush1.bf16.msra.mxu0 0
      %450 = vmatprep.subr.bf16.mxu0 0
      %451 = vmatpush1.bf16.msra.mxu0 %v426
      %452 = vmatprep.subr.bf16.mxu0 0
      %453 = vmatpush1.bf16.msra.mxu0 %v425
      %454 = vmatprep.subr.bf16.mxu0 0
      %455 = vmatpush1.bf16.msra.mxu0 %v424
      %456 = vmatprep.subr.bf16.mxu0 0
      %457 = vmatpush1.bf16.msra.mxu0 %v423
      %458 = vmatprep.subr.bf16.mxu0 0
      %459 = vmatpush2.bf16.msra.mxu0 0
      %460 = vmatprep.subr.bf16.mxu0 0
      %461 = vmatpush2.bf16.msra.mxu0 0
      %462 = vmatprep.subr.bf16.mxu0 0
      %463 = vmatpush2.bf16.msra.mxu0 0
      %464 = vmatprep.subr.bf16.mxu0 0
      %465 = vmatpush2.bf16.msra.mxu0 0
      %466 = vmatprep.subr.bf16.mxu0 0
      %467 = vmatpush2.bf16.msra.mxu0 0
      %468 = vmatprep.subr.bf16.mxu0 0
      %469 = vmatpush2.bf16.msra.mxu0 0
      %470 = vmatprep.subr.bf16.mxu0 0
      %471 = vmatpush2.bf16.msra.mxu0 0
      %472 = vmatprep.subr.bf16.mxu0 0
      %473 = vmatpush2.bf16.msra.mxu0 0
      %474 = vmatprep.mubr.bf16.mxu0 0
      %475 = vmatmul.mubr.bf16.gmra.mxu0 %v432
      %v476 = vpop.f32.mrf.mxu0
      %v477 = vadd.f32 0.0, %v476
      %v478 = vpop.f32.mrf.mxu0
      %v479 = vpop.f32.mrf.mxu0
      %v480 = vadd.f32 0.0, %v479
      %v481 = vpop.f32.mrf.mxu0
      %482 = vmatprep.mubr.bf16.mxu0 0
      %483 = vmatmul.mubr.bf16.gmra.mxu0 %v434
      %v484 = vpop.f32.mrf.mxu0
      %v485 = vadd.f32 0.0, %v484
      %v486 = vpop.f32.mrf.mxu0
      %v487 = vpop.f32.mrf.mxu0
      %v488 = vadd.f32 0.0, %v487
      %v489 = vpop.f32.mrf.mxu0
      %490 = vmatprep.mubr.bf16.mxu0 0
      %491 = vmatmul.mubr.bf16.gmra.mxu0 %v436
      %v492 = vpop.f32.mrf.mxu0
      %v493 = vadd.f32 0.0, %v492
      %v494 = vpop.f32.mrf.mxu0
      %v495 = vpop.f32.mrf.mxu0
      %v496 = vadd.f32 0.0, %v495
      %v497 = vpop.f32.mrf.mxu0
      %498 = vmatprep.mubr.bf16.mxu0 0
      %499 = vmatmul.mubr.bf16.gmra.mxu0 %v438
      %v500 = vpop.f32.mrf.mxu0
      %v501 = vadd.f32 0.0, %v500
      %v502 = vpop.f32.mrf.mxu0
      %v503 = vpop.f32.mrf.mxu0
      %v504 = vadd.f32 0.0, %v503
      %v505 = vpop.f32.mrf.mxu0
      %506 = vmatprep.mubr.bf16.mxu0 0
      %507 = vmatmul.mubr.bf16.gmra.mxu0 %v440
      %v508 = vpop.f32.mrf.mxu0
      %v509 = vadd.f32 0.0, %v508
      %v510 = vpop.f32.mrf.mxu0
      %v511 = vpop.f32.mrf.mxu0
      %v512 = vadd.f32 0.0, %v511
      %v513 = vpop.f32.mrf.mxu0
      %514 = vdwg.mxu0
      %v523 = vunpack.c.l.b16 %v273
      %v524 = vunpack.c.l.b16 %v274
      %v525 = vunpack.c.l.b16 %v275
      %v526 = vunpack.c.l.b16 %v276
      %v527 = vunpack.c.l.b16 %v277
      %v528 = vunpack.c.l.b16 %v278
      %v529 = vunpack.c.l.b16 %v279
      %v530 = vunpack.c.l.b16 %v280
      %v531 = vpack.c.b16 %v524, %v523
      %v532 = vpack.c.b16 %v526, %v525
      %v533 = vpack.c.b16 %v528, %v527
      %v534 = vpack.c.b16 %v530, %v529
      %v540 = vsel %vm431, %v371, 0
      %v543 = vsel %vm431, %v343, 0
      %v546 = vsel %vm431, %v351, 0
      %v549 = vsel %vm431, %v359, 0
      %v552 = vsel %vm431, %v367, 0
      %554 = vmatprep.subr.bf16.mxu0 0
      %555 = vmatpush1.bf16.msra.mxu0 0
      %556 = vmatprep.subr.bf16.mxu0 0
      %557 = vmatpush1.bf16.msra.mxu0 0
      %558 = vmatprep.subr.bf16.mxu0 0
      %559 = vmatpush1.bf16.msra.mxu0 0
      %560 = vmatprep.subr.bf16.mxu0 0
      %561 = vmatpush1.bf16.msra.mxu0 0
      %562 = vmatprep.subr.bf16.mxu0 0
      %563 = vmatpush1.bf16.msra.mxu0 %v534
      %564 = vmatprep.subr.bf16.mxu0 0
      %565 = vmatpush1.bf16.msra.mxu0 %v533
      %566 = vmatprep.subr.bf16.mxu0 0
      %567 = vmatpush1.bf16.msra.mxu0 %v532
      %568 = vmatprep.subr.bf16.mxu0 0
      %569 = vmatpush1.bf16.msra.mxu0 %v531
      %570 = vmatprep.subr.bf16.mxu0 0
      %571 = vmatpush2.bf16.msra.mxu0 0
      %572 = vmatprep.subr.bf16.mxu0 0
      %573 = vmatpush2.bf16.msra.mxu0 0
      %574 = vmatprep.subr.bf16.mxu0 0
      %575 = vmatpush2.bf16.msra.mxu0 0
      %576 = vmatprep.subr.bf16.mxu0 0
      %577 = vmatpush2.bf16.msra.mxu0 0
      %578 = vmatprep.subr.bf16.mxu0 0
      %579 = vmatpush2.bf16.msra.mxu0 0
      %580 = vmatprep.subr.bf16.mxu0 0
      %581 = vmatpush2.bf16.msra.mxu0 0
      %582 = vmatprep.subr.bf16.mxu0 0
      %583 = vmatpush2.bf16.msra.mxu0 0
      %584 = vmatprep.subr.bf16.mxu0 0
      %585 = vmatpush2.bf16.msra.mxu0 0
      %586 = vmatprep.mubr.bf16.mxu0 0
      %587 = vmatmul.mubr.bf16.gmra.mxu0 %v540
      %v588 = vpop.f32.mrf.mxu0
      %v589 = vadd.f32 %v477, %v588
      %v590 = vpop.f32.mrf.mxu0
      %v591 = vpop.f32.mrf.mxu0
      %v592 = vadd.f32 %v480, %v591
      %v593 = vpop.f32.mrf.mxu0
      %594 = vmatprep.mubr.bf16.mxu0 0
      %595 = vmatmul.mubr.bf16.gmra.mxu0 %v543
      %v596 = vpop.f32.mrf.mxu0
      %v597 = vadd.f32 %v485, %v596
      %v598 = vpop.f32.mrf.mxu0
      %v599 = vpop.f32.mrf.mxu0
      %v600 = vadd.f32 %v488, %v599
      %v601 = vpop.f32.mrf.mxu0
      %602 = vmatprep.mubr.bf16.mxu0 0
      %603 = vmatmul.mubr.bf16.gmra.mxu0 %v546
      %v604 = vpop.f32.mrf.mxu0
      %v605 = vadd.f32 %v493, %v604
      %v606 = vpop.f32.mrf.mxu0
      %v607 = vpop.f32.mrf.mxu0
      %v608 = vadd.f32 %v496, %v607
      %v609 = vpop.f32.mrf.mxu0
      %610 = vmatprep.mubr.bf16.mxu0 0
      %611 = vmatmul.mubr.bf16.gmra.mxu0 %v549
      %v612 = vpop.f32.mrf.mxu0
      %v613 = vadd.f32 %v501, %v612
      %v614 = vpop.f32.mrf.mxu0
      %v615 = vpop.f32.mrf.mxu0
      %v616 = vadd.f32 %v504, %v615
      %v617 = vpop.f32.mrf.mxu0
      %618 = vmatprep.mubr.bf16.mxu0 0
      %619 = vmatmul.mubr.bf16.gmra.mxu0 %v552
      %v620 = vpop.f32.mrf.mxu0
      %v621 = vadd.f32 %v509, %v620
      %v622 = vpop.f32.mrf.mxu0
      %v623 = vpop.f32.mrf.mxu0
      %v624 = vadd.f32 %v512, %v623
      %v625 = vpop.f32.mrf.mxu0
      %626 = vdwg.mxu0
      %v635 = vunpack.c.l.b16 %v289
      %v636 = vunpack.c.l.b16 %v290
      %v637 = vunpack.c.l.b16 %v291
      %v638 = vunpack.c.l.b16 %v292
      %v639 = vunpack.c.l.b16 %v293
      %v640 = vunpack.c.l.b16 %v294
      %v641 = vunpack.c.l.b16 %v295
      %v642 = vunpack.c.l.b16 %v296
      %v643 = vpack.c.b16 %v636, %v635
      %v644 = vpack.c.b16 %v638, %v637
      %v645 = vpack.c.b16 %v640, %v639
      %v646 = vpack.c.b16 %v642, %v641
      %v652 = vsel %vm431, %v376, 0
      %v655 = vsel %vm431, %v379, 0
      %v658 = vsel %vm431, %v382, 0
      %v661 = vsel %vm431, %v385, 0
      %v664 = vsel %vm431, %v396, 0
      %666 = vmatprep.subr.bf16.mxu0 0
      %667 = vmatpush1.bf16.msra.mxu0 0
      %668 = vmatprep.subr.bf16.mxu0 0
      %669 = vmatpush1.bf16.msra.mxu0 0
      %670 = vmatprep.subr.bf16.mxu0 0
      %671 = vmatpush1.bf16.msra.mxu0 0
      %672 = vmatprep.subr.bf16.mxu0 0
      %673 = vmatpush1.bf16.msra.mxu0 0
      %674 = vmatprep.subr.bf16.mxu0 0
      %675 = vmatpush1.bf16.msra.mxu0 %v646
      %676 = vmatprep.subr.bf16.mxu0 0
      %677 = vmatpush1.bf16.msra.mxu0 %v645
      %678 = vmatprep.subr.bf16.mxu0 0
      %679 = vmatpush1.bf16.msra.mxu0 %v644
      %680 = vmatprep.subr.bf16.mxu0 0
      %681 = vmatpush1.bf16.msra.mxu0 %v643
      %682 = vmatprep.subr.bf16.mxu0 0
      %683 = vmatpush2.bf16.msra.mxu0 0
      %684 = vmatprep.subr.bf16.mxu0 0
      %685 = vmatpush2.bf16.msra.mxu0 0
      %686 = vmatprep.subr.bf16.mxu0 0
      %687 = vmatpush2.bf16.msra.mxu0 0
      %688 = vmatprep.subr.bf16.mxu0 0
      %689 = vmatpush2.bf16.msra.mxu0 0
      %690 = vmatprep.subr.bf16.mxu0 0
      %691 = vmatpush2.bf16.msra.mxu0 0
      %692 = vmatprep.subr.bf16.mxu0 0
      %693 = vmatpush2.bf16.msra.mxu0 0
      %694 = vmatprep.subr.bf16.mxu0 0
      %695 = vmatpush2.bf16.msra.mxu0 0
      %696 = vmatprep.subr.bf16.mxu0 0
      %697 = vmatpush2.bf16.msra.mxu0 0
      %698 = vmatprep.mubr.bf16.mxu0 0
      %699 = vmatmul.mubr.bf16.gmra.mxu0 %v652
      %v700 = vpop.f32.mrf.mxu0
      %v701 = vadd.f32 0.0, %v700
      %v702 = vpop.f32.mrf.mxu0
      %v703 = vpop.f32.mrf.mxu0
      %v704 = vadd.f32 0.0, %v703
      %v705 = vpop.f32.mrf.mxu0
      %706 = vmatprep.mubr.bf16.mxu0 0
      %707 = vmatmul.mubr.bf16.gmra.mxu0 %v655
      %v708 = vpop.f32.mrf.mxu0
      %v709 = vadd.f32 0.0, %v708
      %v710 = vpop.f32.mrf.mxu0
      %v711 = vpop.f32.mrf.mxu0
      %v712 = vadd.f32 0.0, %v711
      %v713 = vpop.f32.mrf.mxu0
      %714 = vmatprep.mubr.bf16.mxu0 0
      %715 = vmatmul.mubr.bf16.gmra.mxu0 %v658
      %v716 = vpop.f32.mrf.mxu0
      %v717 = vadd.f32 0.0, %v716
      %v718 = vpop.f32.mrf.mxu0
      %v719 = vpop.f32.mrf.mxu0
      %v720 = vadd.f32 0.0, %v719
      %v721 = vpop.f32.mrf.mxu0
      %722 = vmatprep.mubr.bf16.mxu0 0
      %723 = vmatmul.mubr.bf16.gmra.mxu0 %v661
      %v724 = vpop.f32.mrf.mxu0
      %v725 = vadd.f32 0.0, %v724
      %v726 = vpop.f32.mrf.mxu0
      %v727 = vpop.f32.mrf.mxu0
      %v728 = vadd.f32 0.0, %v727
      %v729 = vpop.f32.mrf.mxu0
      %730 = vmatprep.mubr.bf16.mxu0 0
      %731 = vmatmul.mubr.bf16.gmra.mxu0 %v664
      %v732 = vpop.f32.mrf.mxu0
      %v733 = vadd.f32 0.0, %v732
      %v734 = vpop.f32.mrf.mxu0
      %v735 = vpop.f32.mrf.mxu0
      %v736 = vadd.f32 0.0, %v735
      %v737 = vpop.f32.mrf.mxu0
      %738 = vdwg.mxu0
      %v739 = vadd.f32 %v589, %v701
      %v740 = vadd.f32 %v592, %v704
      %v741 = vadd.f32 %v597, %v709
      %v742 = vadd.f32 %v600, %v712
      %v743 = vadd.f32 %v605, %v717
      %v744 = vadd.f32 %v608, %v720
      %v745 = vadd.f32 %v613, %v725
      %v746 = vadd.f32 %v616, %v728
      %v747 = vadd.f32 %v621, %v733
      %v748 = vadd.f32 %v624, %v736
      %v749 = vadd.f32 %v397, %v739
      %v750 = vadd.f32 %v398, %v740
      %v751 = vadd.f32 %v399, %v741
      %v752 = vadd.f32 %v400, %v742
      %v753 = vadd.f32 %v401, %v743
      %v754 = vadd.f32 %v402, %v744
      %v755 = vadd.f32 %v403, %v745
      %v756 = vadd.f32 %v404, %v746
      %v757 = vadd.f32 %v405, %v747
      %v758 = vadd.f32 %v406, %v748
      %vm759 = vcmask 162816
      %760 = vst.msk [vmem:[#allocation2] sm:$0xff] %vm759, %v749
      %761 = vst.msk [vmem:[#allocation2 + $0x8] sm:$0xff] %vm759, %v750
      %762 = vst.msk [vmem:[#allocation2 + $0x10] sm:$0xff] %vm759, %v751
      %763 = vst.msk [vmem:[#allocation2 + $0x18] sm:$0xff] %vm759, %v752
      %764 = vst.msk [vmem:[#allocation2 + $0x20] sm:$0xff] %vm759, %v753
      %765 = vst.msk [vmem:[#allocation2 + $0x28] sm:$0xff] %vm759, %v754
      %766 = vst.msk [vmem:[#allocation2 + $0x30] sm:$0xff] %vm759, %v755
      %767 = vst.msk [vmem:[#allocation2 + $0x38] sm:$0xff] %vm759, %v756
      %768 = vst.msk [vmem:[#allocation2 + $0x40] sm:$0xff] %vm759, %v757
      %769 = vst.msk [vmem:[#allocation2 + $0x48] sm:$0xff] %vm759, %v758
      %p770 = scmp.eq.s32.totalorder %s20, 2
      // Predicated region
      $region41: #{ifblock_forward.23} parent=35 // pred_check
        %p771 = pneg %p770
      $region42: #{ifblock_forward.23} parent=35 // pred_check_branch
        %773 = sbr.rel (%p771) target = $region44
      $region43: #{ifblock_forward.23} parent=35 // pred_region
        %v774 = vld [vmem:[#allocation2] sm:$0xff]
        %v775 = vld [vmem:[#allocation2 + $0x8] sm:$0xff]
        %v776 = vld [vmem:[#allocation2 + $0x10] sm:$0xff]
        %v777 = vld [vmem:[#allocation2 + $0x18] sm:$0xff]
        %v778 = vld [vmem:[#allocation2 + $0x20] sm:$0xff]
        %v779 = vld [vmem:[#allocation2 + $0x28] sm:$0xff]
        %v780 = vld [vmem:[#allocation2 + $0x30] sm:$0xff]
        %v781 = vld [vmem:[#allocation2 + $0x38] sm:$0xff]
        %v782 = vld [vmem:[#allocation2 + $0x40] sm:$0xff]
        %v783 = vld [vmem:[#allocation2 + $0x48] sm:$0xff]
        %v784 = vld [vmem:[%s2] sm:$0x1]
        %v786 = vlaneseq
        %v787 = vshrl.u32 %v786, 7
        %v788 = vsub.s32 0, %v787
        %v789 = vrot.slane %v784, %v788
        %v791 = vadd.f32 %v774, %v789
        %v792 = vadd.f32 %v775, %v789
        %v793 = vadd.f32 %v776, %v789
        %v794 = vadd.f32 %v777, %v789
        %v795 = vadd.f32 %v778, %v789
        %v796 = vadd.f32 %v779, %v789
        %v797 = vadd.f32 %v780, %v789
        %v798 = vadd.f32 %v781, %v789
        %v799 = vadd.f32 %v782, %v789
        %v800 = vadd.f32 %v783, %v789
        %vm801 = vcmp.ge.f32.partialorder %v791, 0.0
        %vm802 = vcmp.ge.f32.partialorder %v792, 0.0
        %vm803 = vcmp.ge.f32.partialorder %v793, 0.0
        %vm804 = vcmp.ge.f32.partialorder %v794, 0.0
        %vm805 = vcmp.ge.f32.partialorder %v795, 0.0
        %vm806 = vcmp.ge.f32.partialorder %v796, 0.0
        %vm807 = vcmp.ge.f32.partialorder %v797, 0.0
        %vm808 = vcmp.ge.f32.partialorder %v798, 0.0
        %vm809 = vcmp.ge.f32.partialorder %v799, 0.0
        %vm810 = vcmp.ge.f32.partialorder %v800, 0.0
        %v811 = vld [vmem:[%s3] sm:$0x1]
        %v813 = vlaneseq
        %v814 = vshrl.u32 %v813, 7
        %v815 = vsub.s32 0, %v814
        %v816 = vrot.slane %v811, %v815
        %v818 = vmul.f32 %v816, %v791
        %v819 = vmul.f32 %v816, %v792
        %v820 = vmul.f32 %v816, %v793
        %v821 = vmul.f32 %v816, %v794
        %v822 = vmul.f32 %v816, %v795
        %v823 = vmul.f32 %v816, %v796
        %v824 = vmul.f32 %v816, %v797
        %v825 = vmul.f32 %v816, %v798
        %v826 = vmul.f32 %v816, %v799
        %v827 = vmul.f32 %v816, %v800
        %v828 = vsel %vm801, %v791, %v818
        %v829 = vsel %vm802, %v792, %v819
        %v830 = vsel %vm803, %v793, %v820
        %v831 = vsel %vm804, %v794, %v821
        %v832 = vsel %vm805, %v795, %v822
        %v833 = vsel %vm806, %v796, %v823
        %v834 = vsel %vm807, %v797, %v824
        %v835 = vsel %vm808, %v798, %v825
        %v836 = vsel %vm809, %v799, %v826
        %v837 = vsel %vm810, %v800, %v827
        %v838 = vpack.c.bf16 %v829, %v828
        %v839 = vpack.c.bf16 %v831, %v830
        %v840 = vpack.c.bf16 %v833, %v832
        %v841 = vpack.c.bf16 %v835, %v834
        %v842 = vpack.c.bf16 %v837, %v836
        %v848 = vunpack.c.l.b16 %v838
        %v849 = vunpack.c.h.b16 %v838
        %v850 = vunpack.c.l.b16 %v839
        %v851 = vunpack.c.h.b16 %v839
        %v852 = vunpack.c.l.b16 %v840
        %v853 = vunpack.c.h.b16 %v840
        %v854 = vunpack.c.l.b16 %v841
        %v855 = vunpack.c.h.b16 %v841
        %v856 = vunpack.c.l.b16 %v842
        %v857 = vunpack.c.h.b16 %v842
        %v858 = vpack.c.b16 %v848, %v848
        %v859 = vpack.c.b16 %v849, %v849
        %v860 = vpack.c.b16 %v850, %v850
        %v861 = vpack.c.b16 %v851, %v851
        %v862 = vpack.c.b16 %v852, %v852
        %v863 = vpack.c.b16 %v853, %v853
        %v864 = vpack.c.b16 %v854, %v854
        %v865 = vpack.c.b16 %v855, %v855
        %v866 = vpack.c.b16 %v856, %v856
        %v867 = vpack.c.b16 %v857, %v857
        %vm878 = vcmask 158720
        %879 = vst.msk [vmem:[%s245] sm:$0xf] %vm878, %v858
        %880 = vst.msk [vmem:[%s245 + $0x4] sm:$0xf] %vm878, %v859
        %881 = vst.msk [vmem:[%s245 + $0x8] sm:$0xf] %vm878, %v860
        %882 = vst.msk [vmem:[%s245 + $0xc] sm:$0xf] %vm878, %v861
        %883 = vst.msk [vmem:[%s245 + $0x10] sm:$0xf] %vm878, %v862
        %884 = vst.msk [vmem:[%s245 + $0x14] sm:$0xf] %vm878, %v863
        %885 = vst.msk [vmem:[%s245 + $0x18] sm:$0xf] %vm878, %v864
        %886 = vst.msk [vmem:[%s245 + $0x1c] sm:$0xf] %vm878, %v865
        %887 = vst.msk [vmem:[%s245 + $0x20] sm:$0xf] %vm878, %v866
        %888 = vst.msk [vmem:[%s245 + $0x24] sm:$0xf] %vm878, %v867
      $region44: #{ifblock_forward.23} parent=35 // pred_fallthru
        _
      %s889 = smul.u32 10, %s19
      %p890 = scmp.lt.s32.totalorder %s889, 19
      %s891 = scalar_select %p890, %s889, 19
      %s892 = smul.addr %s891, 4
      %s893 = scalar_lea.vmem %s4, %s892
      // Predicated region
      $region45: #{ifblock_forward.23} parent=35 // pred_check
        %p894 = pneg %p141
      $region46: #{ifblock_forward.23} parent=35 // pred_check_branch
        %896 = sbr.rel (%p894) target = $region48
      $region47: #{ifblock_forward.23} parent=35 // pred_region
        %s897 = smul.u32 10, %s19
      $region48: #{ifblock_forward.23} parent=35 // pred_fallthru
        _
    $region36: #{ifblock_forward.23} parent=5 // pred_fallthru
      _
    %p898 = scmp.le.s32.totalorder 2, %s10
    // Predicated region
    $region49: #{ifblock_forward.23} parent=5 // pred_check
      %p899 = pneg %p898
    $region50: #{ifblock_forward.23} parent=5 // pred_check_branch
      %901 = sbr.rel (%p899) target = $region52
    $region51: #{ifblock_forward.23} parent=5 // pred_region
      %s902 = ssub.s32 %s10, 2
      // Predicated region
      $region53: #{ifblock_forward.23} parent=51 // pred_check
        %p903 = pneg %p147
      $region54: #{ifblock_forward.23} parent=51 // pred_check_branch
        %905 = sbr.rel (%p903) target = $region56
      $region55: #{ifblock_forward.23} parent=51 // pred_region
        %s906 = smul.u32 10, %s21
        %p907 = scmp.lt.s32.totalorder %s906, 19
        %s908 = scalar_select %p907, %s906, 19
        %s909 = smul.addr %s908, 4
        %s910 = scalar_lea.vmem %s4, %s909
      $region56: #{ifblock_forward.23} parent=51 // pred_fallthru
        _
    $region52: #{ifblock_forward.23} parent=5 // pred_fallthru
      _
  $region6: #{ifblock_forward.23} parent=0 // loop_footer
    %s14 = sadd.s32 1, %s10
  $region7: #{ifblock_forward.23} parent=0 // loop_footer_branch
    %9 = sbr.rel target = $region3
  $region8: #{ifblock_forward.23} parent=0 // loop_exit
    _

</llo_original>
